<compile_context>
chip_gen: v7x
topology: tpu7x:2x2x1
jax: 0.10.0
libtpu: 0.0.40
codegen_flags: <defaults>
</compile_context>

<pallas_src>
import functools
import math

import jax
import jax.numpy as jnp
from jax.experimental import pallas as pl
from jax.experimental.pallas import tpu as pltpu

EPS = 1e-5
_OFF = 8  # sublane-aligned row offset of the main tile inside the row-padded slab


@functools.lru_cache(maxsize=1)
def _vmem_config():
    """(vmem_limit_bytes, per-call tile budget), generation-aware."""
    try:
        cap = pltpu.get_tpu_info().vmem_capacity_bytes
    except Exception:
        cap = 64 * 1024 * 1024  # conservative fallback (v7x-sized)
    if cap >= 100 * 1024 * 1024:                      # v5e / v6e: 128 MiB physical VMEM
        return 96 * 1024 * 1024, 48 * 1024 * 1024
    return 48 * 1024 * 1024, 24 * 1024 * 1024         # v7x: 64 MiB physical VMEM


# ----------------------------- kernels -------------------------------------


def _stats_kernel(x_ref, o_ref):
    """Per-N partial per-lane sum / sum-of-squares, accumulated over the H-tile axis."""
    @pl.when(pl.program_id(1) == 0)
    def _init():
        o_ref[...] = jnp.zeros_like(o_ref)

    x = x_ref[...].astype(jnp.float32)                      # (TH, WC)
    o_ref[0:1, :] += jnp.sum(x, axis=0, keepdims=True)
    o_ref[1:2, :] += jnp.sum(x * x, axis=0, keepdims=True)


def _fused_body(x_tile_ref, x_any_ref, scale_ref, shift_ref, w_ref, bias_ref,
                res_ref, o_ref, stats_ref, xpad, halo, sem, *, TH, WC, K, pad):
    """Fused BN(apply)+ReLU+zero-pad+conv(+residual)(+next-BN stats) for one (n, H-tile) block."""
    n = pl.program_id(0)
    ht = pl.program_id(1)
    n_ht = pl.num_programs(1)

    scale = scale_ref[...]                                   # (1, WC) f32
    shift = shift_ref[...]

    def norm_relu(v):
        return jnp.maximum(v.astype(jnp.float32) * scale + shift,
                           0.0).astype(xpad.dtype)

    lo = _OFF - pad                                          # first conv-visible slab row

    if pad > 0:
        def top_copy():
            return pltpu.make_async_copy(
                x_any_ref.at[n, pl.ds(ht * TH - pad, pad)],
                halo.at[pl.ds(0, pad)], sem.at[0])

        def bot_copy():
            return pltpu.make_async_copy(
                x_any_ref.at[n, pl.ds((ht + 1) * TH, pad)],
                halo.at[pl.ds(pad, pad)], sem.at[1])

        # Start the (tiny) halo-row DMAs first so they overlap the main normalize below.
        @pl.when(ht > 0)
        def _():
            top_copy().start()

        @pl.when(ht < n_ht - 1)
        def _():
            bot_copy().start()

    # Main rows: sublane-aligned store at row offset _OFF (multiple of 8).
    xpad[_OFF:_OFF + TH, :] = norm_relu(x_tile_ref[...])

    if pad > 0:
        @pl.when(ht == 0)
        def _():
            xpad[lo:_OFF, :] = jnp.zeros((pad, WC), xpad.dtype)

        @pl.when(ht > 0)
        def _():
            top_copy().wait()
            xpad[lo:_OFF, :] = norm_relu(halo[0:pad, :])

        @pl.when(ht == n_ht - 1)
        def _():
            xpad[_OFF + TH:_OFF + TH + pad, :] = jnp.zeros((pad, WC), xpad.dtype)

        @pl.when(ht < n_ht - 1)
        def _():
            bot_copy().wait()
            xpad[_OFF + TH:_OFF + TH + pad, :] = norm_relu(halo[pad:2 * pad, :])

    # Conv = K row-shifted MXU matmuls over the folded W*Cp contraction axis, accumulated
    # in registers (value chain) -- no VMEM accumulator read-modify-write, single store.
    out = jnp.dot(xpad[lo:lo + TH, :], w_ref[0], preferred_element_type=jnp.float32)
    for kh in range(1, K):
        out = out + jnp.dot(xpad[lo + kh:lo + kh + TH, :], w_ref[kh],
                            preferred_element_type=jnp.float32)
    out = out + bias_ref[...]
    if res_ref is not None:
        out = out + res_ref[...].astype(jnp.float32)

    z = out.astype(o_ref.dtype)
    o_ref[...] = z

    if stats_ref is not None:
        # Fused next-BN batch stats of the activation exactly as it will be read back.
        zf = z.astype(jnp.float32)

        @pl.when(ht == 0)
        def _():
            stats_ref[...] = jnp.zeros_like(stats_ref)

        stats_ref[0:1, :] += jnp.sum(zf, axis=0, keepdims=True)
        stats_ref[1:2, :] += jnp.sum(zf * zf, axis=0, keepdims=True)


def _fused_stats_kernel(x_tile_ref, x_any_ref, scale_ref, shift_ref, w_ref,
                        bias_ref, o_ref, stats_ref, xpad, halo, sem,
                        *, TH, WC, K, pad):
    _fused_body(x_tile_ref, x_any_ref, scale_ref, shift_ref, w_ref, bias_ref,
                None, o_ref, stats_ref, xpad, halo, sem, TH=TH, WC=WC, K=K, pad=pad)


def _fused_res_kernel(x_tile_ref, x_any_ref, scale_ref, shift_ref, w_ref,
                      bias_ref, res_ref, o_ref, xpad, halo, sem,
                      *, TH, WC, K, pad):
    _fused_body(x_tile_ref, x_any_ref, scale_ref, shift_ref, w_ref, bias_ref,
                res_ref, o_ref, None, xpad, halo, sem, TH=TH, WC=WC, K=K, pad=pad)


# ----------------------------- wrappers ------------------------------------


def _padded_channels(C, W):
    """Smallest Cp >= C with W*Cp a multiple of 128 (lane-dense stores / MXU fill)."""
    step = 128 // math.gcd(W, 128)
    Cp = -(-C // step) * step
    return C if Cp > 4 * C else Cp   # skip padding when the overhead would be silly


def _pick_tile_h(H, WC, pad, K, act_bytes, mm_bytes, budget, row_align):
    """Largest H-tile (multiple of row_align, or full H) that fits the per-call budget."""
    cands = sorted({h for h in range(row_align, H + 1, row_align) if H % h == 0} | {H})
    fixed = 2 * K * WC * WC * mm_bytes + 8 * WC * 4          # weights (2-buffered) + vectors
    best = None
    for th in cands:
        if th < pad:
            continue
        per_step = (2 * th * WC * act_bytes                  # input tile, double-buffered
                    + 2 * th * WC * act_bytes                # output tile, double-buffered
                    + 2 * th * WC * 4                        # residual tile (worst case f32)
                    + (_OFF + th + 8) * WC * mm_bytes        # row-padded normalized slab
                    + 8 * WC * 4)                            # stats / halo (tiny)
        if fixed + per_step <= budget:
            best = th
    if best is None:
        # TODO(synk): nothing fits the budget (very large W*C) -- needs width tiling.
        best = min(h for h in cands if h >= pad)
    return best


def _pick_stats_tile(H, WC, budget):
    """The stats pass only holds one input tile + (2,WC); give it a big H tile."""
    cands = sorted({h for h in range(8, H + 1, 8) if H % h == 0} | {H})
    best = cands[0]
    for th in cands:
        if 3 * th * WC * 4 <= budget // 2:
            best = th
    return best


def _fold_conv_weights(w_hwio, W, pad, Cp):
    """Fold width taps of an HWIO conv weight into K block-Toeplitz (W*Cp, W*Cp) matrices."""
    K, _, C, _ = w_hwio.shape
    wp = jnp.zeros((K, K, Cp, Cp), jnp.float32).at[:, :, :C, :C].set(
        w_hwio.astype(jnp.float32))
    mats = []
    for kh in range(K):
        m = jnp.zeros((W * Cp, W * Cp), jnp.float32)
        for kw in range(K):
            shift = jnp.eye(W, W, k=pad - kw, dtype=jnp.float32)
            m = m + jnp.kron(shift, wp[kh, kw])
        mats.append(m)
    return jnp.stack(mats, axis=0)                           # (K, W*Cp, W*Cp)


def _bn_scale_shift(stats, gamma, beta, W, C, Cp, count):
    """Fold BN batch stats + affine params into per-lane scale/shift of shape (1, W*Cp)."""
    s = stats[0].reshape(W, Cp).sum(axis=0)
    ss = stats[1].reshape(W, Cp).sum(axis=0)
    mean = s / count
    # TODO(synk): E[x^2]-E[x]^2 can cancel for large, far-from-zero-mean activations; use a
    #             shifted/two-pass variance if that regime matters.
    var = ss / count - mean * mean                           # biased (PyTorch BN training)
    inv = jax.lax.rsqrt(var + EPS)
    gamma_p = jnp.zeros((Cp,), jnp.float32).at[:C].set(gamma.reshape(C).astype(jnp.float32))
    beta_p = jnp.zeros((Cp,), jnp.float32).at[:C].set(beta.reshape(C).astype(jnp.float32))
    scale_c = gamma_p * inv                                  # padded channels -> scale 0
    shift_c = beta_p - mean * scale_c                        # padded channels -> shift 0
    scale = jnp.tile(scale_c, W).reshape(1, W * Cp)
    shift = jnp.tile(shift_c, W).reshape(1, W * Cp)
    return scale, shift


def _channel_stats(x, tile_h, vmem_limit):
    """BN1 batch stats: per-N partials (n parallel, h arbitrary), reduced in the wrapper."""
    N, H, WC = x.shape
    part = pl.pallas_call(
        _stats_kernel,
        out_shape=jax.ShapeDtypeStruct((N, 2, WC), jnp.float32),
        grid=(N, H // tile_h),
        in_specs=[pl.BlockSpec((None, tile_h, WC), lambda n, h: (n, h, 0))],
        out_specs=pl.BlockSpec((None, 2, WC), lambda n, h: (n, 0, 0)),
        compiler_params=pltpu.CompilerParams(
            dimension_semantics=("parallel", "arbitrary"),
            vmem_limit_bytes=vmem_limit),
    )(x)
    return part.sum(axis=0)                                   # (2, WC)


def _fused_bn_relu_conv(x, scale, shift, wfold, bias, tile_h, pad, matmul_dtype,
                        out_dtype, vmem_limit, residual=None, emit_stats=False):
    N, H, WC = x.shape
    K = wfold.shape[0]
    tile_spec = pl.BlockSpec((None, tile_h, WC), lambda n, h: (n, h, 0))
    vec_spec = pl.BlockSpec((1, WC), lambda n, h: (0, 0))

    in_specs = [
        tile_spec,                                            # x tile (auto-pipelined)
        pl.BlockSpec(memory_space=pl.ANY),                    # x left in HBM, for halo DMA
        vec_spec, vec_spec,                                   # BN scale / shift
        pl.BlockSpec((K, WC, WC), lambda n, h: (0, 0, 0)),    # folded conv weights
        vec_spec,                                             # conv bias (lane layout)
    ]
    args = [x, x, scale, shift, wfold, bias]

    if residual is not None:
        in_specs.append(tile_spec)
        args.append(residual)
        kernel = functools.partial(_fused_res_kernel, TH=tile_h, WC=WC, K=K, pad=pad)
        out_shape = jax.ShapeDtypeStruct((N, H, WC), out_dtype)
        out_specs = tile_spec
        dims = ("parallel", "parallel")
    else:
        assert emit_stats
        kernel = functools.partial(_fused_stats_kernel, TH=tile_h, WC=WC, K=K, pad=pad)
        out_shape = (jax.ShapeDtypeStruct((N, H, WC), out_dtype),
                     jax.ShapeDtypeStruct((N, 2, WC), jnp.float32))
        out_specs = (tile_spec,
                     pl.BlockSpec((None, 2, WC), lambda n, h: (n, 0, 0)))
        dims = ("parallel", "arbitrary")      # stats accumulate across the H-tile axis

    return pl.pallas_call(
        kernel,
        out_shape=out_shape,
        grid=(N, H // tile_h),
        in_specs=in_specs,
        out_specs=out_specs,
        scratch_shapes=[
            pltpu.VMEM((_OFF + tile_h + 8, WC), matmul_dtype),  # row-padded normalized slab
            pltpu.VMEM((max(2 * pad, 1), WC), x.dtype),         # halo-row DMA landing buffer
            pltpu.SemaphoreType.DMA((2,)),
        ],
        compiler_params=pltpu.CompilerParams(
            dimension_semantics=dims, vmem_limit_bytes=vmem_limit),
    )(*args)


def resblock_forward_folded(params, x_f, *, W, C, Cp, padding, tile_h=None,
                            matmul_dtype=jnp.bfloat16):
    """Core forward on channel-padded, width-folded (N, H, W*Cp) activations."""
    N, H, WC = x_f.shape
    assert WC == W * Cp
    K = params["w1"].shape[0]
    vmem_limit, budget = _vmem_config()

    mm_bytes = jnp.dtype(matmul_dtype).itemsize
    z_dtype = matmul_dtype if mm_bytes < 4 else x_f.dtype     # bf16 inter-block activation
    act_bytes = max(jnp.dtype(x_f.dtype).itemsize, jnp.dtype(z_dtype).itemsize)
    min_bytes = min(jnp.dtype(x_f.dtype).itemsize, jnp.dtype(z_dtype).itemsize)
    row_align = 8 * (4 // min_bytes)                          # 8 for f32, 16 for bf16 tiles

    if tile_h is None:
        tile_h = _pick_tile_h(H, WC, padding, K, act_bytes, mm_bytes, budget, row_align)
    assert H % tile_h == 0 and (tile_h % row_align == 0 or tile_h == H)
    assert tile_h >= padding and padding <= _OFF

    stats_tile = _pick_stats_tile(H, WC, budget)

    wf1 = _fold_conv_weights(params["w1"], W, padding, Cp).astype(matmul_dtype)
    wf2 = _fold_conv_weights(params["w2"], W, padding, Cp).astype(matmul_dtype)

    def fold_bias(b):
        bp = jnp.zeros((Cp,), jnp.float32).at[:C].set(b.reshape(C).astype(jnp.float32))
        return jnp.tile(bp, W).reshape(1, WC)

    b1, b2 = fold_bias(params["b1"]), fold_bias(params["b2"])
    count = N * H * W

    # half-block 1: BN1 stats -> fused BN1+ReLU+pad+conv1 (+ fused BN2 batch stats of z)
    st1 = _channel_stats(x_f, stats_tile, vmem_limit)
    sc1, sh1 = _bn_scale_shift(st1, params["g1"], params["be1"], W, C, Cp, count)
    z, st2_part = _fused_bn_relu_conv(x_f, sc1, sh1, wf1, b1, tile_h, padding,
                                      matmul_dtype, z_dtype, vmem_limit,
                                      emit_stats=True)
    st2 = st2_part.sum(axis=0)

    # half-block 2: fused BN2+ReLU+pad+conv2 + residual(x)
    sc2, sh2 = _bn_scale_shift(st2, params["g2"], params["be2"], W, C, Cp, count)
    return _fused_bn_relu_conv(z, sc2, sh2, wf2, b2, tile_h, padding,
                               matmul_dtype, x_f.dtype, vmem_limit, residual=x_f)


def resblock_forward(params, x_nchw, *, padding, tile_h=None,
                     matmul_dtype=jnp.bfloat16):
    """NCHW compatibility wrapper. NOTE: the transposes below are full HBM passes; production
    callers should keep activations channels-last / folded and call resblock_forward_folded."""
    N, C, H, W = x_nchw.shape
    Cp = _padded_channels(C, W)
    x = jnp.transpose(x_nchw, (0, 2, 3, 1))                   # NHWC
    if Cp != C:
        x = jnp.pad(x, ((0, 0), (0, 0), (0, 0), (0, Cp - C)))
    x_f = x.reshape(N, H, W * Cp)

    out_f = resblock_forward_folded(params, x_f, W=W, C=C, Cp=Cp, padding=padding,
                                    tile_h=tile_h, matmul_dtype=matmul_dtype)

    out = out_f.reshape(N, H, W, Cp)[..., :C]
    return jnp.transpose(out, (0, 3, 1, 2))                   # back to NCHW


class ResBlock2dPallas:
    """JAX/Pallas re-implementation of modules/util.py::ResBlock2d (training-mode BN)."""

    def __init__(self, in_features, kernel_size, padding, key,
                 tile_h=None, matmul_dtype=jnp.bfloat16):
        assert 2 * padding == kernel_size - 1, "block must preserve spatial resolution"
        C, K = in_features, kernel_size
        self.in_features = C
        k1, k2, k3, k4 = jax.random.split(key, 4)
        fan_in = C * K * K
        bound = 1.0 / (fan_in ** 0.5)
        # Conv weights stored HWIO: (K, K, C_in, C_out); PyTorch-style uniform init.
        self.params = dict(
            w1=jax.random.uniform(k1, (K, K, C, C), jnp.float32, -bound, bound),
            b1=jax.random.uniform(k2, (1, C), jnp.float32, -bound, bound),
            w2=jax.random.uniform(k3, (K, K, C, C), jnp.float32, -bound, bound),
            b2=jax.random.uniform(k4, (1, C), jnp.float32, -bound, bound),
            g1=jnp.ones((1, C), jnp.float32), be1=jnp.zeros((1, C), jnp.float32),
            g2=jnp.ones((1, C), jnp.float32), be2=jnp.zeros((1, C), jnp.float32),
        )
        self._fwd = jax.jit(functools.partial(
            resblock_forward, padding=padding, tile_h=tile_h,
            matmul_dtype=matmul_dtype))

    def __call__(self, x_nchw):
        assert x_nchw.shape[1] == self.in_features
        return self._fwd(self.params, x_nchw)


# ----------------------------- reference (pure JAX) -------------------------


def _reference_forward(params, x_nchw, padding):
    x = jnp.transpose(x_nchw, (0, 2, 3, 1))                   # NHWC

    def bn_relu(v, g, b):
        mean = v.mean(axis=(0, 1, 2))
        var = v.var(axis=(0, 1, 2))                           # biased, training mode
        return jax.nn.relu((v - mean) * jax.lax.rsqrt(var + EPS) * g.reshape(-1)
                           + b.reshape(-1))

    def conv(v, w, b):
        y = jax.lax.conv_general_dilated(
            v, w, window_strides=(1, 1),
            padding=[(padding, padding), (padding, padding)],
            dimension_numbers=("NHWC", "HWIO", "NHWC"))
        return y + b.reshape(-1)

    h = conv(bn_relu(x, params["g1"], params["be1"]), params["w1"], params["b1"])
    h = conv(bn_relu(h, params["g2"], params["be2"]), params["w2"], params["b2"])
    return jnp.transpose(h + x, (0, 3, 1, 2))


if __name__ == "__main__":
    key = jax.random.PRNGKey(0)
    kx, kp = jax.random.split(key)
    x = jax.random.normal(kx, (2, 4, 16, 16), dtype=jnp.float32)   # NCHW, like PyTorch

    # Exact-math path (f32 MXU operands); tile_h=8 < H exercises the halo-DMA H-tiling path.
    block_f32 = ResBlock2dPallas(in_features=4, kernel_size=3, padding=1, key=kp,
                                 tile_h=8, matmul_dtype=jnp.float32)
    out_f32 = jax.block_until_ready(block_f32(x))
    assert out_f32.shape == x.shape and out_f32.dtype == x.dtype
    ref = _reference_forward(block_f32.params, x, padding=1)
    err_f32 = float(jnp.max(jnp.abs(out_f32 - ref)))
    assert err_f32 < 2e-3, f"f32 max abs error vs reference: {err_f32}"

    # Default perf path: bf16 MXU operands + bf16 inter-block activation (f32 accumulation);
    # auto-picked tile_h. Looser tolerance accounts for bf16 operand rounding.
    block_bf16 = ResBlock2dPallas(in_features=4, kernel_size=3, padding=1, key=kp)
    out_bf16 = jax.block_until_ready(block_bf16(x))
    assert out_bf16.shape == x.shape and out_bf16.dtype == x.dtype
    err_bf16 = float(jnp.max(jnp.abs(out_bf16 - ref)))
    assert err_bf16 < 1.5e-1, f"bf16 max abs error vs reference: {err_bf16}"

    print("KERNEL_OK")
</pallas_src>

<mosaic_0001>
module attributes {stable_mosaic.version = 11 : i64} {
  func.func @_stats_kernel(%arg0: i32, %arg1: i32, %arg2: memref<1x16x128xf32, #tpu.memory_space<vmem>>, %arg3: memref<1x2x128xf32, #tpu.memory_space<vmem>>) attributes {dimension_semantics = [#tpu.dimension_semantics<parallel>, #tpu.dimension_semantics<arbitrary>], iteration_bounds = array<i64: 2, 1>, scalar_prefetch = 0 : i64, scratch_operands = 0 : i64, tpu.core_type = #tpu.core_type<tc>, window_params = [{transform_indices = @transform_0, window_bounds = array<i64: 1, 16, 128>}, {transform_indices = @transform_1, window_bounds = array<i64: 1, 2, 128>}]} {
    %c0_i32 = arith.constant 0 : i32
    %0 = arith.cmpi eq, %arg1, %c0_i32 : i32
    %1 = arith.extui %0 : i1 to i32
    %c0_i32_0 = arith.constant 0 : i32
    %2 = arith.cmpi ne, %1, %c0_i32_0 : i32
    scf.if %2 {
      %cst_15 = arith.constant 0.000000e+00 : f32
      %22 = vector.broadcast %cst_15 : f32 to vector<2x128xf32>
      %c0_16 = arith.constant 0 : index
      %c0_17 = arith.constant 0 : index
      %c0_18 = arith.constant 0 : index
      %23 = vector.load %arg3[%c0_16, %c0_17, %c0_18] : memref<1x2x128xf32, #tpu.memory_space<vmem>>, vector<1x2x128xf32>
      %24 = vector.shape_cast %23 : vector<1x2x128xf32> to vector<2x128xf32>
      %25 = vector.shape_cast %22 : vector<2x128xf32> to vector<1x2x128xf32>
      tpu.vector_store %arg3[%c0_16, %c0_17, %c0_18], %25 {strides = array<i32>} : memref<1x2x128xf32, #tpu.memory_space<vmem>>, vector<1x2x128xf32>,
    } else {
    }
    %c0 = arith.constant 0 : index
    %c0_1 = arith.constant 0 : index
    %c0_2 = arith.constant 0 : index
    %3 = vector.load %arg2[%c0, %c0_1, %c0_2] : memref<1x16x128xf32, #tpu.memory_space<vmem>>, vector<1x16x128xf32>
    %4 = vector.shape_cast %3 : vector<1x16x128xf32> to vector<16x128xf32>
    %c0_3 = arith.constant 0 : index
    %c0_4 = arith.constant 0 : index
    %c0_5 = arith.constant 0 : index
    %5 = vector.load %arg3[%c0_3, %c0_4, %c0_5] : memref<1x2x128xf32, #tpu.memory_space<vmem>>, vector<1x1x128xf32>
    %6 = vector.shape_cast %5 : vector<1x1x128xf32> to vector<1x128xf32>
    %cst = arith.constant dense<0.000000e+00> : vector<128xf32>
    %7 = vector.multi_reduction <add>, %4, %cst [0] : vector<16x128xf32> to vector<128xf32>
    %8 = vector.shape_cast %7 : vector<128xf32> to vector<1x128xf32>
    %9 = arith.addf %6, %8 : vector<1x128xf32>
    %c0_6 = arith.constant 0 : index
    %c0_7 = arith.constant 0 : index
    %c0_8 = arith.constant 0 : index
    %10 = vector.load %arg3[%c0_6, %c0_7, %c0_8] : memref<1x2x128xf32, #tpu.memory_space<vmem>>, vector<1x1x128xf32>
    %11 = vector.shape_cast %10 : vector<1x1x128xf32> to vector<1x128xf32>
    %12 = vector.shape_cast %9 : vector<1x128xf32> to vector<1x1x128xf32>
    tpu.vector_store %arg3[%c0_6, %c0_7, %c0_8], %12 {strides = array<i32>} : memref<1x2x128xf32, #tpu.memory_space<vmem>>, vector<1x1x128xf32>,
    %c0_9 = arith.constant 0 : index
    %c1 = arith.constant 1 : index
    %c0_10 = arith.constant 0 : index
    %13 = vector.load %arg3[%c0_9, %c1, %c0_10] : memref<1x2x128xf32, #tpu.memory_space<vmem>>, vector<1x1x128xf32>
    %14 = vector.shape_cast %13 : vector<1x1x128xf32> to vector<1x128xf32>
    %15 = arith.mulf %4, %4 : vector<16x128xf32>
    %cst_11 = arith.constant dense<0.000000e+00> : vector<128xf32>
    %16 = vector.multi_reduction <add>, %15, %cst_11 [0] : vector<16x128xf32> to vector<128xf32>
    %17 = vector.shape_cast %16 : vector<128xf32> to vector<1x128xf32>
    %18 = arith.addf %14, %17 : vector<1x128xf32>
    %c0_12 = arith.constant 0 : index
    %c1_13 = arith.constant 1 : index
    %c0_14 = arith.constant 0 : index
    %19 = vector.load %arg3[%c0_12, %c1_13, %c0_14] : memref<1x2x128xf32, #tpu.memory_space<vmem>>, vector<1x1x128xf32>
    %20 = vector.shape_cast %19 : vector<1x1x128xf32> to vector<1x128xf32>
    %21 = vector.shape_cast %18 : vector<1x128xf32> to vector<1x1x128xf32>
    tpu.vector_store %arg3[%c0_12, %c1_13, %c0_14], %21 {strides = array<i32>} : memref<1x2x128xf32, #tpu.memory_space<vmem>>, vector<1x1x128xf32>,
    return
  }
  func.func @transform_0(%arg0: i32, %arg1: i32) -> (i32, i32, i32) {
    %c0_i32 = arith.constant 0 : i32
    %c0_i32_0 = arith.constant 0 : i32
    return %arg0, %arg1, %c0_i32 : i32, i32, i32
  }
  func.func @transform_1(%arg0: i32, %arg1: i32) -> (i32, i32, i32) {
    %c0_i32 = arith.constant 0 : i32
    %c0_i32_0 = arith.constant 0 : i32
    %c0_i32_1 = arith.constant 0 : i32
    return %arg0, %c0_i32, %c0_i32_0 : i32, i32, i32
  }
}

module attributes {stable_mosaic.version = 11 : i64} {
  func.func @_fused_stats_kernel(%arg0: i32, %arg1: i32, %arg2: memref<1x8x128xf32, #tpu.memory_space<vmem>>, %arg3: memref<2x16x128xf32, #tpu.memory_space<any>>, %arg4: memref<1x128xf32, #tpu.memory_space<vmem>>, %arg5: memref<1x128xf32, #tpu.memory_space<vmem>>, %arg6: memref<3x128x128xf32, #tpu.memory_space<vmem>>, %arg7: memref<1x128xf32, #tpu.memory_space<vmem>>, %arg8: memref<1x8x128xf32, #tpu.memory_space<vmem>>, %arg9: memref<1x2x128xf32, #tpu.memory_space<vmem>>, %arg10: memref<24x128xf32, #tpu.memory_space<vmem>>, %arg11: memref<2x128xf32, #tpu.memory_space<vmem>>, %arg12: memref<2x!tpu.dma_semaphore, #tpu.memory_space<semaphore_mem>>) attributes {dimension_semantics = [#tpu.dimension_semantics<parallel>, #tpu.dimension_semantics<arbitrary>], iteration_bounds = array<i64: 2, 2>, scalar_prefetch = 0 : i64, scratch_operands = 3 : i64, tpu.core_type = #tpu.core_type<tc>, window_params = [{transform_indices = @transform_0, window_bounds = array<i64: 1, 8, 128>}, {}, {pipeline_mode = #tpu.pipeline_mode<synchronous>, transform_indices = @transform_2, window_bounds = array<i64: 1, 128>}, {pipeline_mode = #tpu.pipeline_mode<synchronous>, transform_indices = @transform_3, window_bounds = array<i64: 1, 128>}, {pipeline_mode = #tpu.pipeline_mode<synchronous>, transform_indices = @transform_4, window_bounds = array<i64: 3, 128, 128>}, {pipeline_mode = #tpu.pipeline_mode<synchronous>, transform_indices = @transform_5, window_bounds = array<i64: 1, 128>}, {transform_indices = @transform_6, window_bounds = array<i64: 1, 8, 128>}, {transform_indices = @transform_7, window_bounds = array<i64: 1, 2, 128>}]} {
    %c0 = arith.constant 0 : index
    %c0_0 = arith.constant 0 : index
    %0 = vector.load %arg4[%c0, %c0_0] : memref<1x128xf32, #tpu.memory_space<vmem>>, vector<1x128xf32>
    %c0_1 = arith.constant 0 : index
    %c0_2 = arith.constant 0 : index
    %1 = vector.load %arg5[%c0_1, %c0_2] : memref<1x128xf32, #tpu.memory_space<vmem>>, vector<1x128xf32>
    %c0_i32 = arith.constant 0 : i32
    %2 = arith.cmpi sgt, %arg1, %c0_i32 : i32
    %3 = arith.extui %2 : i1 to i32
    %c0_i32_3 = arith.constant 0 : i32
    %4 = arith.cmpi ne, %3, %c0_i32_3 : i32
    scf.if %4 {
      %c8_i32 = arith.constant 8 : i32
      %69 = arith.muli %arg1, %c8_i32 : i32
      %c1_i32_52 = arith.constant 1 : i32
      %70 = arith.subi %69, %c1_i32_52 : i32
      %c0_i32_53 = arith.constant 0 : i32
      %c0_i32_54 = arith.constant 0 : i32
      %71 = tpu.memref_slice %arg3[%arg0, %70, %c0_i32_54] : memref<2x16x128xf32, #tpu.memory_space<any>> -> memref<1x1x128xf32, #tpu.memory_space<any>>
      %72 = tpu.memref_squeeze %71 : memref<1x1x128xf32, #tpu.memory_space<any>> -> memref<1x128xf32, #tpu.memory_space<any>>
      %c0_i32_55 = arith.constant 0 : i32
      %c0_i32_56 = arith.constant 0 : i32
      %73 = tpu.memref_slice %arg11[%c0_i32_55, %c0_i32_56] : memref<2x128xf32, #tpu.memory_space<vmem>> -> memref<1x128xf32, #tpu.memory_space<vmem>>
      %74 = tpu.memref_slice %arg12[%c0_i32_53] : memref<2x!tpu.dma_semaphore, #tpu.memory_space<semaphore_mem>> -> memref<1x!tpu.dma_semaphore, #tpu.memory_space<semaphore_mem>>
      %75 = tpu.memref_squeeze %74 : memref<1x!tpu.dma_semaphore, #tpu.memory_space<semaphore_mem>> -> memref<!tpu.dma_semaphore, #tpu.memory_space<semaphore_mem>>
      tpu.enqueue_dma source(%72 : memref<1x128xf32, #tpu.memory_space<any>>) target(%73 : memref<1x128xf32, #tpu.memory_space<vmem>>) target_semaphore(%75 : memref<!tpu.dma_semaphore, #tpu.memory_space<semaphore_mem>>)
    } else {
    }
    %c1_i32 = arith.constant 1 : i32
    %5 = arith.cmpi slt, %arg1, %c1_i32 : i32
    %6 = arith.extui %5 : i1 to i32
    %c0_i32_4 = arith.constant 0 : i32
    %7 = arith.cmpi ne, %6, %c0_i32_4 : i32
    scf.if %7 {
      %c1_i32_52 = arith.constant 1 : i32
      %69 = arith.addi %arg1, %c1_i32_52 : i32
      %c8_i32 = arith.constant 8 : i32
      %70 = arith.muli %69, %c8_i32 : i32
      %c1_i32_53 = arith.constant 1 : i32
      %c0_i32_54 = arith.constant 0 : i32
      %71 = tpu.memref_slice %arg3[%arg0, %70, %c0_i32_54] : memref<2x16x128xf32, #tpu.memory_space<any>> -> memref<1x1x128xf32, #tpu.memory_space<any>>
      %72 = tpu.memref_squeeze %71 : memref<1x1x128xf32, #tpu.memory_space<any>> -> memref<1x128xf32, #tpu.memory_space<any>>
      %c1_i32_55 = arith.constant 1 : i32
      %c0_i32_56 = arith.constant 0 : i32
      %73 = tpu.memref_slice %arg11[%c1_i32_55, %c0_i32_56] : memref<2x128xf32, #tpu.memory_space<vmem>> -> memref<1x128xf32, #tpu.memory_space<vmem>>
      %74 = tpu.memref_slice %arg12[%c1_i32_53] : memref<2x!tpu.dma_semaphore, #tpu.memory_space<semaphore_mem>> -> memref<1x!tpu.dma_semaphore, #tpu.memory_space<semaphore_mem>>
      %75 = tpu.memref_squeeze %74 : memref<1x!tpu.dma_semaphore, #tpu.memory_space<semaphore_mem>> -> memref<!tpu.dma_semaphore, #tpu.memory_space<semaphore_mem>>
      tpu.enqueue_dma source(%72 : memref<1x128xf32, #tpu.memory_space<any>>) target(%73 : memref<1x128xf32, #tpu.memory_space<vmem>>) target_semaphore(%75 : memref<!tpu.dma_semaphore, #tpu.memory_space<semaphore_mem>>)
    } else {
    }
    %c0_5 = arith.constant 0 : index
    %c0_6 = arith.constant 0 : index
    %c0_7 = arith.constant 0 : index
    %8 = vector.load %arg2[%c0_5, %c0_6, %c0_7] : memref<1x8x128xf32, #tpu.memory_space<vmem>>, vector<1x8x128xf32>
    %9 = vector.shape_cast %8 : vector<1x8x128xf32> to vector<8x128xf32>
    %10 = vector.broadcast %0 : vector<1x128xf32> to vector<8x128xf32>
    %11 = arith.mulf %9, %10 : vector<8x128xf32>
    %12 = vector.broadcast %1 : vector<1x128xf32> to vector<8x128xf32>
    %13 = arith.addf %11, %12 : vector<8x128xf32>
    %cst = arith.constant 0.000000e+00 : f32
    %14 = vector.broadcast %cst : f32 to vector<8x128xf32>
    %15 = arith.maximumf %13, %14 : vector<8x128xf32>
    %c8 = arith.constant 8 : index
    %c0_8 = arith.constant 0 : index
    %16 = vector.load %arg10[%c8, %c0_8] : memref<24x128xf32, #tpu.memory_space<vmem>>, vector<8x128xf32>
    tpu.vector_store %arg10[%c8, %c0_8], %15 {strides = array<i32>} : memref<24x128xf32, #tpu.memory_space<vmem>>, vector<8x128xf32>,
    %c0_i32_9 = arith.constant 0 : i32
    %17 = arith.cmpi eq, %arg1, %c0_i32_9 : i32
    %18 = arith.extui %17 : i1 to i32
    %c0_i32_10 = arith.constant 0 : i32
    %19 = arith.cmpi ne, %18, %c0_i32_10 : i32
    scf.if %19 {
      %cst_52 = arith.constant 0.000000e+00 : f32
      %69 = vector.broadcast %cst_52 : f32 to vector<1x128xf32>
      %c7_53 = arith.constant 7 : index
      %c0_54 = arith.constant 0 : index
      %70 = vector.load %arg10[%c7_53, %c0_54] : memref<24x128xf32, #tpu.memory_space<vmem>>, vector<1x128xf32>
      tpu.vector_store %arg10[%c7_53, %c0_54], %69 {strides = array<i32>} : memref<24x128xf32, #tpu.memory_space<vmem>>, vector<1x128xf32>,
    } else {
    }
    %c0_i32_11 = arith.constant 0 : i32
    %20 = arith.cmpi sgt, %arg1, %c0_i32_11 : i32
    %21 = arith.extui %20 : i1 to i32
    %c0_i32_12 = arith.constant 0 : i32
    %22 = arith.cmpi ne, %21, %c0_i32_12 : i32
    scf.if %22 {
      %c8_i32 = arith.constant 8 : i32
      %69 = arith.muli %arg1, %c8_i32 : i32
      %c1_i32_52 = arith.constant 1 : i32
      %70 = arith.subi %69, %c1_i32_52 : i32
      %c0_i32_53 = arith.constant 0 : i32
      %c0_i32_54 = arith.constant 0 : i32
      %71 = tpu.memref_slice %arg3[%arg0, %70, %c0_i32_54] : memref<2x16x128xf32, #tpu.memory_space<any>> -> memref<1x1x128xf32, #tpu.memory_space<any>>
      %72 = tpu.memref_squeeze %71 : memref<1x1x128xf32, #tpu.memory_space<any>> -> memref<1x128xf32, #tpu.memory_space<any>>
      %c0_i32_55 = arith.constant 0 : i32
      %c0_i32_56 = arith.constant 0 : i32
      %73 = tpu.memref_slice %arg11[%c0_i32_55, %c0_i32_56] : memref<2x128xf32, #tpu.memory_space<vmem>> -> memref<1x128xf32, #tpu.memory_space<vmem>>
      %74 = tpu.memref_slice %arg12[%c0_i32_53] : memref<2x!tpu.dma_semaphore, #tpu.memory_space<semaphore_mem>> -> memref<1x!tpu.dma_semaphore, #tpu.memory_space<semaphore_mem>>
      %75 = tpu.memref_squeeze %74 : memref<1x!tpu.dma_semaphore, #tpu.memory_space<semaphore_mem>> -> memref<!tpu.dma_semaphore, #tpu.memory_space<semaphore_mem>>
      tpu.wait_dma2 semaphore(%75 : memref<!tpu.dma_semaphore, #tpu.memory_space<semaphore_mem>>) src(%72 : memref<1x128xf32, #tpu.memory_space<any>>) dst(%73 : memref<1x128xf32, #tpu.memory_space<vmem>>)
      %c0_57 = arith.constant 0 : index
      %c0_58 = arith.constant 0 : index
      %76 = vector.load %arg11[%c0_57, %c0_58] : memref<2x128xf32, #tpu.memory_space<vmem>>, vector<1x128xf32>
      %77 = arith.mulf %76, %0 : vector<1x128xf32>
      %78 = arith.addf %77, %1 : vector<1x128xf32>
      %cst_59 = arith.constant 0.000000e+00 : f32
      %79 = vector.broadcast %cst_59 : f32 to vector<1x128xf32>
      %80 = arith.maximumf %78, %79 : vector<1x128xf32>
      %c7_60 = arith.constant 7 : index
      %c0_61 = arith.constant 0 : index
      %81 = vector.load %arg10[%c7_60, %c0_61] : memref<24x128xf32, #tpu.memory_space<vmem>>, vector<1x128xf32>
      tpu.vector_store %arg10[%c7_60, %c0_61], %80 {strides = array<i32>} : memref<24x128xf32, #tpu.memory_space<vmem>>, vector<1x128xf32>,
    } else {
    }
    %c1_i32_13 = arith.constant 1 : i32
    %23 = arith.cmpi eq, %arg1, %c1_i32_13 : i32
    %24 = arith.extui %23 : i1 to i32
    %c0_i32_14 = arith.constant 0 : i32
    %25 = arith.cmpi ne, %24, %c0_i32_14 : i32
    scf.if %25 {
      %cst_52 = arith.constant 0.000000e+00 : f32
      %69 = vector.broadcast %cst_52 : f32 to vector<1x128xf32>
      %c16 = arith.constant 16 : index
      %c0_53 = arith.constant 0 : index
      %70 = vector.load %arg10[%c16, %c0_53] : memref<24x128xf32, #tpu.memory_space<vmem>>, vector<1x128xf32>
      tpu.vector_store %arg10[%c16, %c0_53], %69 {strides = array<i32>} : memref<24x128xf32, #tpu.memory_space<vmem>>, vector<1x128xf32>,
    } else {
    }
    %c1_i32_15 = arith.constant 1 : i32
    %26 = arith.cmpi slt, %arg1, %c1_i32_15 : i32
    %27 = arith.extui %26 : i1 to i32
    %c0_i32_16 = arith.constant 0 : i32
    %28 = arith.cmpi ne, %27, %c0_i32_16 : i32
    scf.if %28 {
      %c1_i32_52 = arith.constant 1 : i32
      %69 = arith.addi %arg1, %c1_i32_52 : i32
      %c8_i32 = arith.constant 8 : i32
      %70 = arith.muli %69, %c8_i32 : i32
      %c1_i32_53 = arith.constant 1 : i32
      %c0_i32_54 = arith.constant 0 : i32
      %71 = tpu.memref_slice %arg3[%arg0, %70, %c0_i32_54] : memref<2x16x128xf32, #tpu.memory_space<any>> -> memref<1x1x128xf32, #tpu.memory_space<any>>
      %72 = tpu.memref_squeeze %71 : memref<1x1x128xf32, #tpu.memory_space<any>> -> memref<1x128xf32, #tpu.memory_space<any>>
      %c1_i32_55 = arith.constant 1 : i32
      %c0_i32_56 = arith.constant 0 : i32
      %73 = tpu.memref_slice %arg11[%c1_i32_55, %c0_i32_56] : memref<2x128xf32, #tpu.memory_space<vmem>> -> memref<1x128xf32, #tpu.memory_space<vmem>>
      %74 = tpu.memref_slice %arg12[%c1_i32_53] : memref<2x!tpu.dma_semaphore, #tpu.memory_space<semaphore_mem>> -> memref<1x!tpu.dma_semaphore, #tpu.memory_space<semaphore_mem>>
      %75 = tpu.memref_squeeze %74 : memref<1x!tpu.dma_semaphore, #tpu.memory_space<semaphore_mem>> -> memref<!tpu.dma_semaphore, #tpu.memory_space<semaphore_mem>>
      tpu.wait_dma2 semaphore(%75 : memref<!tpu.dma_semaphore, #tpu.memory_space<semaphore_mem>>) src(%72 : memref<1x128xf32, #tpu.memory_space<any>>) dst(%73 : memref<1x128xf32, #tpu.memory_space<vmem>>)
      %c1_57 = arith.constant 1 : index
      %c0_58 = arith.constant 0 : index
      %76 = vector.load %arg11[%c1_57, %c0_58] : memref<2x128xf32, #tpu.memory_space<vmem>>, vector<1x128xf32>
      %77 = arith.mulf %76, %0 : vector<1x128xf32>
      %78 = arith.addf %77, %1 : vector<1x128xf32>
      %cst_59 = arith.constant 0.000000e+00 : f32
      %79 = vector.broadcast %cst_59 : f32 to vector<1x128xf32>
      %80 = arith.maximumf %78, %79 : vector<1x128xf32>
      %c16 = arith.constant 16 : index
      %c0_60 = arith.constant 0 : index
      %81 = vector.load %arg10[%c16, %c0_60] : memref<24x128xf32, #tpu.memory_space<vmem>>, vector<1x128xf32>
      tpu.vector_store %arg10[%c16, %c0_60], %80 {strides = array<i32>} : memref<24x128xf32, #tpu.memory_space<vmem>>, vector<1x128xf32>,
    } else {
    }
    %c7 = arith.constant 7 : index
    %c0_17 = arith.constant 0 : index
    %29 = vector.load %arg10[%c7, %c0_17] : memref<24x128xf32, #tpu.memory_space<vmem>>, vector<8x128xf32>
    %c0_18 = arith.constant 0 : index
    %c0_19 = arith.constant 0 : index
    %c0_20 = arith.constant 0 : index
    %30 = vector.load %arg6[%c0_18, %c0_19, %c0_20] : memref<3x128x128xf32, #tpu.memory_space<vmem>>, vector<1x128x128xf32>
    %31 = vector.shape_cast %30 : vector<1x128x128xf32> to vector<128x128xf32>
    %cst_21 = arith.constant dense<0.000000e+00> : vector<8x128xf32>
    %32 = tpu.matmul %29, %31, %cst_21 {dimension_numbers = #tpu.dot_dimension_numbers<[1], [0], [0], [1], [0, 0, 1, 1], [], []>} : vector<8x128xf32>, vector<128x128xf32>, vector<8x128xf32> -> vector<8x128xf32>
    %c8_22 = arith.constant 8 : index
    %c0_23 = arith.constant 0 : index
    %33 = vector.load %arg10[%c8_22, %c0_23] : memref<24x128xf32, #tpu.memory_space<vmem>>, vector<8x128xf32>
    %c1 = arith.constant 1 : index
    %c0_24 = arith.constant 0 : index
    %c0_25 = arith.constant 0 : index
    %34 = vector.load %arg6[%c1, %c0_24, %c0_25] : memref<3x128x128xf32, #tpu.memory_space<vmem>>, vector<1x128x128xf32>
    %35 = vector.shape_cast %34 : vector<1x128x128xf32> to vector<128x128xf32>
    %cst_26 = arith.constant dense<0.000000e+00> : vector<8x128xf32>
    %36 = tpu.matmul %33, %35, %cst_26 {dimension_numbers = #tpu.dot_dimension_numbers<[1], [0], [0], [1], [0, 0, 1, 1], [], []>} : vector<8x128xf32>, vector<128x128xf32>, vector<8x128xf32> -> vector<8x128xf32>
    %37 = arith.addf %32, %36 : vector<8x128xf32>
    %c9 = arith.constant 9 : index
    %c0_27 = arith.constant 0 : index
    %38 = vector.load %arg10[%c9, %c0_27] : memref<24x128xf32, #tpu.memory_space<vmem>>, vector<8x128xf32>
    %c2 = arith.constant 2 : index
    %c0_28 = arith.constant 0 : index
    %c0_29 = arith.constant 0 : index
    %39 = vector.load %arg6[%c2, %c0_28, %c0_29] : memref<3x128x128xf32, #tpu.memory_space<vmem>>, vector<1x128x128xf32>
    %40 = vector.shape_cast %39 : vector<1x128x128xf32> to vector<128x128xf32>
    %cst_30 = arith.constant dense<0.000000e+00> : vector<8x128xf32>
    %41 = tpu.matmul %38, %40, %cst_30 {dimension_numbers = #tpu.dot_dimension_numbers<[1], [0], [0], [1], [0, 0, 1, 1], [], []>} : vector<8x128xf32>, vector<128x128xf32>, vector<8x128xf32> -> vector<8x128xf32>
    %42 = arith.addf %37, %41 : vector<8x128xf32>
    %c0_31 = arith.constant 0 : index
    %c0_32 = arith.constant 0 : index
    %43 = vector.load %arg7[%c0_31, %c0_32] : memref<1x128xf32, #tpu.memory_space<vmem>>, vector<1x128xf32>
    %44 = vector.broadcast %43 : vector<1x128xf32> to vector<8x128xf32>
    %45 = arith.addf %42, %44 : vector<8x128xf32>
    %c0_33 = arith.constant 0 : index
    %c0_34 = arith.constant 0 : index
    %c0_35 = arith.constant 0 : index
    %46 = vector.load %arg8[%c0_33, %c0_34, %c0_35] : memref<1x8x128xf32, #tpu.memory_space<vmem>>, vector<1x8x128xf32>
    %47 = vector.shape_cast %46 : vector<1x8x128xf32> to vector<8x128xf32>
    %48 = vector.shape_cast %45 : vector<8x128xf32> to vector<1x8x128xf32>
    tpu.vector_store %arg8[%c0_33, %c0_34, %c0_35], %48 {strides = array<i32>} : memref<1x8x128xf32, #tpu.memory_space<vmem>>, vector<1x8x128xf32>,
    %c0_i32_36 = arith.constant 0 : i32
    %49 = arith.cmpi eq, %arg1, %c0_i32_36 : i32
    %50 = arith.extui %49 : i1 to i32
    %c0_i32_37 = arith.constant 0 : i32
    %51 = arith.cmpi ne, %50, %c0_i32_37 : i32
    scf.if %51 {
      %cst_52 = arith.constant 0.000000e+00 : f32
      %69 = vector.broadcast %cst_52 : f32 to vector<2x128xf32>
      %c0_53 = arith.constant 0 : index
      %c0_54 = arith.constant 0 : index
      %c0_55 = arith.constant 0 : index
      %70 = vector.load %arg9[%c0_53, %c0_54, %c0_55] : memref<1x2x128xf32, #tpu.memory_space<vmem>>, vector<1x2x128xf32>
      %71 = vector.shape_cast %70 : vector<1x2x128xf32> to vector<2x128xf32>
      %72 = vector.shape_cast %69 : vector<2x128xf32> to vector<1x2x128xf32>
      tpu.vector_store %arg9[%c0_53, %c0_54, %c0_55], %72 {strides = array<i32>} : memref<1x2x128xf32, #tpu.memory_space<vmem>>, vector<1x2x128xf32>,
    } else {
    }
    %c0_38 = arith.constant 0 : index
    %c0_39 = arith.constant 0 : index
    %c0_40 = arith.constant 0 : index
    %52 = vector.load %arg9[%c0_38, %c0_39, %c0_40] : memref<1x2x128xf32, #tpu.memory_space<vmem>>, vector<1x1x128xf32>
    %53 = vector.shape_cast %52 : vector<1x1x128xf32> to vector<1x128xf32>
    %cst_41 = arith.constant dense<0.000000e+00> : vector<128xf32>
    %54 = vector.multi_reduction <add>, %45, %cst_41 [0] : vector<8x128xf32> to vector<128xf32>
    %55 = vector.shape_cast %54 : vector<128xf32> to vector<1x128xf32>
    %56 = arith.addf %53, %55 : vector<1x128xf32>
    %c0_42 = arith.constant 0 : index
    %c0_43 = arith.constant 0 : index
    %c0_44 = arith.constant 0 : index
    %57 = vector.load %arg9[%c0_42, %c0_43, %c0_44] : memref<1x2x128xf32, #tpu.memory_space<vmem>>, vector<1x1x128xf32>
    %58 = vector.shape_cast %57 : vector<1x1x128xf32> to vector<1x128xf32>
    %59 = vector.shape_cast %56 : vector<1x128xf32> to vector<1x1x128xf32>
    tpu.vector_store %arg9[%c0_42, %c0_43, %c0_44], %59 {strides = array<i32>} : memref<1x2x128xf32, #tpu.memory_space<vmem>>, vector<1x1x128xf32>,
    %c0_45 = arith.constant 0 : index
    %c1_46 = arith.constant 1 : index
    %c0_47 = arith.constant 0 : index
    %60 = vector.load %arg9[%c0_45, %c1_46, %c0_47] : memref<1x2x128xf32, #tpu.memory_space<vmem>>, vector<1x1x128xf32>
    %61 = vector.shape_cast %60 : vector<1x1x128xf32> to vector<1x128xf32>
    %62 = arith.mulf %45, %45 : vector<8x128xf32>
    %cst_48 = arith.constant dense<0.000000e+00> : vector<128xf32>
    %63 = vector.multi_reduction <add>, %62, %cst_48 [0] : vector<8x128xf32> to vector<128xf32>
    %64 = vector.shape_cast %63 : vector<128xf32> to vector<1x128xf32>
    %65 = arith.addf %61, %64 : vector<1x128xf32>
    %c0_49 = arith.constant 0 : index
    %c1_50 = arith.constant 1 : index
    %c0_51 = arith.constant 0 : index
    %66 = vector.load %arg9[%c0_49, %c1_50, %c0_51] : memref<1x2x128xf32, #tpu.memory_space<vmem>>, vector<1x1x128xf32>
    %67 = vector.shape_cast %66 : vector<1x1x128xf32> to vector<1x128xf32>
    %68 = vector.shape_cast %65 : vector<1x128xf32> to vector<1x1x128xf32>
    tpu.vector_store %arg9[%c0_49, %c1_50, %c0_51], %68 {strides = array<i32>} : memref<1x2x128xf32, #tpu.memory_space<vmem>>, vector<1x1x128xf32>,
    return
  }
  func.func @transform_0(%arg0: i32, %arg1: i32) -> (i32, i32, i32) {
    %c0_i32 = arith.constant 0 : i32
    %c0_i32_0 = arith.constant 0 : i32
    return %arg0, %arg1, %c0_i32 : i32, i32, i32
  }
  func.func @transform_2(%arg0: i32, %arg1: i32) -> (i32, i32) {
    %c0_i32 = arith.constant 0 : i32
    %c0_i32_0 = arith.constant 0 : i32
    %c0_i32_1 = arith.constant 0 : i32
    return %c0_i32, %c0_i32_0 : i32, i32
  }
  func.func @transform_3(%arg0: i32, %arg1: i32) -> (i32, i32) {
    %c0_i32 = arith.constant 0 : i32
    %c0_i32_0 = arith.constant 0 : i32
    %c0_i32_1 = arith.constant 0 : i32
    return %c0_i32, %c0_i32_0 : i32, i32
  }
  func.func @transform_4(%arg0: i32, %arg1: i32) -> (i32, i32, i32) {
    %c0_i32 = arith.constant 0 : i32
    %c0_i32_0 = arith.constant 0 : i32
    %c0_i32_1 = arith.constant 0 : i32
    %c0_i32_2 = arith.constant 0 : i32
    return %c0_i32, %c0_i32_0, %c0_i32_1 : i32, i32, i32
  }
  func.func @transform_5(%arg0: i32, %arg1: i32) -> (i32, i32) {
    %c0_i32 = arith.constant 0 : i32
    %c0_i32_0 = arith.constant 0 : i32
    %c0_i32_1 = arith.constant 0 : i32
    return %c0_i32, %c0_i32_0 : i32, i32
  }
  func.func @transform_6(%arg0: i32, %arg1: i32) -> (i32, i32, i32) {
    %c0_i32 = arith.constant 0 : i32
    %c0_i32_0 = arith.constant 0 : i32
    return %arg0, %arg1, %c0_i32 : i32, i32, i32
  }
  func.func @transform_7(%arg0: i32, %arg1: i32) -> (i32, i32, i32) {
    %c0_i32 = arith.constant 0 : i32
    %c0_i32_0 = arith.constant 0 : i32
    %c0_i32_1 = arith.constant 0 : i32
    return %arg0, %c0_i32, %c0_i32_0 : i32, i32, i32
  }
}

module attributes {stable_mosaic.version = 11 : i64} {
  func.func @_fused_res_kernel(%arg0: i32, %arg1: i32, %arg2: memref<1x8x128xf32, #tpu.memory_space<vmem>>, %arg3: memref<2x16x128xf32, #tpu.memory_space<any>>, %arg4: memref<1x128xf32, #tpu.memory_space<vmem>>, %arg5: memref<1x128xf32, #tpu.memory_space<vmem>>, %arg6: memref<3x128x128xf32, #tpu.memory_space<vmem>>, %arg7: memref<1x128xf32, #tpu.memory_space<vmem>>, %arg8: memref<1x8x128xf32, #tpu.memory_space<vmem>>, %arg9: memref<1x8x128xf32, #tpu.memory_space<vmem>>, %arg10: memref<24x128xf32, #tpu.memory_space<vmem>>, %arg11: memref<2x128xf32, #tpu.memory_space<vmem>>, %arg12: memref<2x!tpu.dma_semaphore, #tpu.memory_space<semaphore_mem>>) attributes {dimension_semantics = [#tpu.dimension_semantics<parallel>, #tpu.dimension_semantics<parallel>], iteration_bounds = array<i64: 2, 2>, scalar_prefetch = 0 : i64, scratch_operands = 3 : i64, tpu.core_type = #tpu.core_type<tc>, window_params = [{transform_indices = @transform_0, window_bounds = array<i64: 1, 8, 128>}, {}, {pipeline_mode = #tpu.pipeline_mode<synchronous>, transform_indices = @transform_2, window_bounds = array<i64: 1, 128>}, {pipeline_mode = #tpu.pipeline_mode<synchronous>, transform_indices = @transform_3, window_bounds = array<i64: 1, 128>}, {pipeline_mode = #tpu.pipeline_mode<synchronous>, transform_indices = @transform_4, window_bounds = array<i64: 3, 128, 128>}, {pipeline_mode = #tpu.pipeline_mode<synchronous>, transform_indices = @transform_5, window_bounds = array<i64: 1, 128>}, {transform_indices = @transform_6, window_bounds = array<i64: 1, 8, 128>}, {transform_indices = @transform_7, window_bounds = array<i64: 1, 8, 128>}]} {
    %c0 = arith.constant 0 : index
    %c0_0 = arith.constant 0 : index
    %0 = vector.load %arg4[%c0, %c0_0] : memref<1x128xf32, #tpu.memory_space<vmem>>, vector<1x128xf32>
    %c0_1 = arith.constant 0 : index
    %c0_2 = arith.constant 0 : index
    %1 = vector.load %arg5[%c0_1, %c0_2] : memref<1x128xf32, #tpu.memory_space<vmem>>, vector<1x128xf32>
    %c0_i32 = arith.constant 0 : i32
    %2 = arith.cmpi sgt, %arg1, %c0_i32 : i32
    %3 = arith.extui %2 : i1 to i32
    %c0_i32_3 = arith.constant 0 : i32
    %4 = arith.cmpi ne, %3, %c0_i32_3 : i32
    scf.if %4 {
      %c8_i32 = arith.constant 8 : i32
      %52 = arith.muli %arg1, %c8_i32 : i32
      %c1_i32_39 = arith.constant 1 : i32
      %53 = arith.subi %52, %c1_i32_39 : i32
      %c0_i32_40 = arith.constant 0 : i32
      %c0_i32_41 = arith.constant 0 : i32
      %54 = tpu.memref_slice %arg3[%arg0, %53, %c0_i32_41] : memref<2x16x128xf32, #tpu.memory_space<any>> -> memref<1x1x128xf32, #tpu.memory_space<any>>
      %55 = tpu.memref_squeeze %54 : memref<1x1x128xf32, #tpu.memory_space<any>> -> memref<1x128xf32, #tpu.memory_space<any>>
      %c0_i32_42 = arith.constant 0 : i32
      %c0_i32_43 = arith.constant 0 : i32
      %56 = tpu.memref_slice %arg11[%c0_i32_42, %c0_i32_43] : memref<2x128xf32, #tpu.memory_space<vmem>> -> memref<1x128xf32, #tpu.memory_space<vmem>>
      %57 = tpu.memref_slice %arg12[%c0_i32_40] : memref<2x!tpu.dma_semaphore, #tpu.memory_space<semaphore_mem>> -> memref<1x!tpu.dma_semaphore, #tpu.memory_space<semaphore_mem>>
      %58 = tpu.memref_squeeze %57 : memref<1x!tpu.dma_semaphore, #tpu.memory_space<semaphore_mem>> -> memref<!tpu.dma_semaphore, #tpu.memory_space<semaphore_mem>>
      tpu.enqueue_dma source(%55 : memref<1x128xf32, #tpu.memory_space<any>>) target(%56 : memref<1x128xf32, #tpu.memory_space<vmem>>) target_semaphore(%58 : memref<!tpu.dma_semaphore, #tpu.memory_space<semaphore_mem>>)
    } else {
    }
    %c1_i32 = arith.constant 1 : i32
    %5 = arith.cmpi slt, %arg1, %c1_i32 : i32
    %6 = arith.extui %5 : i1 to i32
    %c0_i32_4 = arith.constant 0 : i32
    %7 = arith.cmpi ne, %6, %c0_i32_4 : i32
    scf.if %7 {
      %c1_i32_39 = arith.constant 1 : i32
      %52 = arith.addi %arg1, %c1_i32_39 : i32
      %c8_i32 = arith.constant 8 : i32
      %53 = arith.muli %52, %c8_i32 : i32
      %c1_i32_40 = arith.constant 1 : i32
      %c0_i32_41 = arith.constant 0 : i32
      %54 = tpu.memref_slice %arg3[%arg0, %53, %c0_i32_41] : memref<2x16x128xf32, #tpu.memory_space<any>> -> memref<1x1x128xf32, #tpu.memory_space<any>>
      %55 = tpu.memref_squeeze %54 : memref<1x1x128xf32, #tpu.memory_space<any>> -> memref<1x128xf32, #tpu.memory_space<any>>
      %c1_i32_42 = arith.constant 1 : i32
      %c0_i32_43 = arith.constant 0 : i32
      %56 = tpu.memref_slice %arg11[%c1_i32_42, %c0_i32_43] : memref<2x128xf32, #tpu.memory_space<vmem>> -> memref<1x128xf32, #tpu.memory_space<vmem>>
      %57 = tpu.memref_slice %arg12[%c1_i32_40] : memref<2x!tpu.dma_semaphore, #tpu.memory_space<semaphore_mem>> -> memref<1x!tpu.dma_semaphore, #tpu.memory_space<semaphore_mem>>
      %58 = tpu.memref_squeeze %57 : memref<1x!tpu.dma_semaphore, #tpu.memory_space<semaphore_mem>> -> memref<!tpu.dma_semaphore, #tpu.memory_space<semaphore_mem>>
      tpu.enqueue_dma source(%55 : memref<1x128xf32, #tpu.memory_space<any>>) target(%56 : memref<1x128xf32, #tpu.memory_space<vmem>>) target_semaphore(%58 : memref<!tpu.dma_semaphore, #tpu.memory_space<semaphore_mem>>)
    } else {
    }
    %c0_5 = arith.constant 0 : index
    %c0_6 = arith.constant 0 : index
    %c0_7 = arith.constant 0 : index
    %8 = vector.load %arg2[%c0_5, %c0_6, %c0_7] : memref<1x8x128xf32, #tpu.memory_space<vmem>>, vector<1x8x128xf32>
    %9 = vector.shape_cast %8 : vector<1x8x128xf32> to vector<8x128xf32>
    %10 = vector.broadcast %0 : vector<1x128xf32> to vector<8x128xf32>
    %11 = arith.mulf %9, %10 : vector<8x128xf32>
    %12 = vector.broadcast %1 : vector<1x128xf32> to vector<8x128xf32>
    %13 = arith.addf %11, %12 : vector<8x128xf32>
    %cst = arith.constant 0.000000e+00 : f32
    %14 = vector.broadcast %cst : f32 to vector<8x128xf32>
    %15 = arith.maximumf %13, %14 : vector<8x128xf32>
    %c8 = arith.constant 8 : index
    %c0_8 = arith.constant 0 : index
    %16 = vector.load %arg10[%c8, %c0_8] : memref<24x128xf32, #tpu.memory_space<vmem>>, vector<8x128xf32>
    tpu.vector_store %arg10[%c8, %c0_8], %15 {strides = array<i32>} : memref<24x128xf32, #tpu.memory_space<vmem>>, vector<8x128xf32>,
    %c0_i32_9 = arith.constant 0 : i32
    %17 = arith.cmpi eq, %arg1, %c0_i32_9 : i32
    %18 = arith.extui %17 : i1 to i32
    %c0_i32_10 = arith.constant 0 : i32
    %19 = arith.cmpi ne, %18, %c0_i32_10 : i32
    scf.if %19 {
      %cst_39 = arith.constant 0.000000e+00 : f32
      %52 = vector.broadcast %cst_39 : f32 to vector<1x128xf32>
      %c7_40 = arith.constant 7 : index
      %c0_41 = arith.constant 0 : index
      %53 = vector.load %arg10[%c7_40, %c0_41] : memref<24x128xf32, #tpu.memory_space<vmem>>, vector<1x128xf32>
      tpu.vector_store %arg10[%c7_40, %c0_41], %52 {strides = array<i32>} : memref<24x128xf32, #tpu.memory_space<vmem>>, vector<1x128xf32>,
    } else {
    }
    %c0_i32_11 = arith.constant 0 : i32
    %20 = arith.cmpi sgt, %arg1, %c0_i32_11 : i32
    %21 = arith.extui %20 : i1 to i32
    %c0_i32_12 = arith.constant 0 : i32
    %22 = arith.cmpi ne, %21, %c0_i32_12 : i32
    scf.if %22 {
      %c8_i32 = arith.constant 8 : i32
      %52 = arith.muli %arg1, %c8_i32 : i32
      %c1_i32_39 = arith.constant 1 : i32
      %53 = arith.subi %52, %c1_i32_39 : i32
      %c0_i32_40 = arith.constant 0 : i32
      %c0_i32_41 = arith.constant 0 : i32
      %54 = tpu.memref_slice %arg3[%arg0, %53, %c0_i32_41] : memref<2x16x128xf32, #tpu.memory_space<any>> -> memref<1x1x128xf32, #tpu.memory_space<any>>
      %55 = tpu.memref_squeeze %54 : memref<1x1x128xf32, #tpu.memory_space<any>> -> memref<1x128xf32, #tpu.memory_space<any>>
      %c0_i32_42 = arith.constant 0 : i32
      %c0_i32_43 = arith.constant 0 : i32
      %56 = tpu.memref_slice %arg11[%c0_i32_42, %c0_i32_43] : memref<2x128xf32, #tpu.memory_space<vmem>> -> memref<1x128xf32, #tpu.memory_space<vmem>>
      %57 = tpu.memref_slice %arg12[%c0_i32_40] : memref<2x!tpu.dma_semaphore, #tpu.memory_space<semaphore_mem>> -> memref<1x!tpu.dma_semaphore, #tpu.memory_space<semaphore_mem>>
      %58 = tpu.memref_squeeze %57 : memref<1x!tpu.dma_semaphore, #tpu.memory_space<semaphore_mem>> -> memref<!tpu.dma_semaphore, #tpu.memory_space<semaphore_mem>>
      tpu.wait_dma2 semaphore(%58 : memref<!tpu.dma_semaphore, #tpu.memory_space<semaphore_mem>>) src(%55 : memref<1x128xf32, #tpu.memory_space<any>>) dst(%56 : memref<1x128xf32, #tpu.memory_space<vmem>>)
      %c0_44 = arith.constant 0 : index
      %c0_45 = arith.constant 0 : index
      %59 = vector.load %arg11[%c0_44, %c0_45] : memref<2x128xf32, #tpu.memory_space<vmem>>, vector<1x128xf32>
      %60 = arith.mulf %59, %0 : vector<1x128xf32>
      %61 = arith.addf %60, %1 : vector<1x128xf32>
      %cst_46 = arith.constant 0.000000e+00 : f32
      %62 = vector.broadcast %cst_46 : f32 to vector<1x128xf32>
      %63 = arith.maximumf %61, %62 : vector<1x128xf32>
      %c7_47 = arith.constant 7 : index
      %c0_48 = arith.constant 0 : index
      %64 = vector.load %arg10[%c7_47, %c0_48] : memref<24x128xf32, #tpu.memory_space<vmem>>, vector<1x128xf32>
      tpu.vector_store %arg10[%c7_47, %c0_48], %63 {strides = array<i32>} : memref<24x128xf32, #tpu.memory_space<vmem>>, vector<1x128xf32>,
    } else {
    }
    %c1_i32_13 = arith.constant 1 : i32
    %23 = arith.cmpi eq, %arg1, %c1_i32_13 : i32
    %24 = arith.extui %23 : i1 to i32
    %c0_i32_14 = arith.constant 0 : i32
    %25 = arith.cmpi ne, %24, %c0_i32_14 : i32
    scf.if %25 {
      %cst_39 = arith.constant 0.000000e+00 : f32
      %52 = vector.broadcast %cst_39 : f32 to vector<1x128xf32>
      %c16 = arith.constant 16 : index
      %c0_40 = arith.constant 0 : index
      %53 = vector.load %arg10[%c16, %c0_40] : memref<24x128xf32, #tpu.memory_space<vmem>>, vector<1x128xf32>
      tpu.vector_store %arg10[%c16, %c0_40], %52 {strides = array<i32>} : memref<24x128xf32, #tpu.memory_space<vmem>>, vector<1x128xf32>,
    } else {
    }
    %c1_i32_15 = arith.constant 1 : i32
    %26 = arith.cmpi slt, %arg1, %c1_i32_15 : i32
    %27 = arith.extui %26 : i1 to i32
    %c0_i32_16 = arith.constant 0 : i32
    %28 = arith.cmpi ne, %27, %c0_i32_16 : i32
    scf.if %28 {
      %c1_i32_39 = arith.constant 1 : i32
      %52 = arith.addi %arg1, %c1_i32_39 : i32
      %c8_i32 = arith.constant 8 : i32
      %53 = arith.muli %52, %c8_i32 : i32
      %c1_i32_40 = arith.constant 1 : i32
      %c0_i32_41 = arith.constant 0 : i32
      %54 = tpu.memref_slice %arg3[%arg0, %53, %c0_i32_41] : memref<2x16x128xf32, #tpu.memory_space<any>> -> memref<1x1x128xf32, #tpu.memory_space<any>>
      %55 = tpu.memref_squeeze %54 : memref<1x1x128xf32, #tpu.memory_space<any>> -> memref<1x128xf32, #tpu.memory_space<any>>
      %c1_i32_42 = arith.constant 1 : i32
      %c0_i32_43 = arith.constant 0 : i32
      %56 = tpu.memref_slice %arg11[%c1_i32_42, %c0_i32_43] : memref<2x128xf32, #tpu.memory_space<vmem>> -> memref<1x128xf32, #tpu.memory_space<vmem>>
      %57 = tpu.memref_slice %arg12[%c1_i32_40] : memref<2x!tpu.dma_semaphore, #tpu.memory_space<semaphore_mem>> -> memref<1x!tpu.dma_semaphore, #tpu.memory_space<semaphore_mem>>
      %58 = tpu.memref_squeeze %57 : memref<1x!tpu.dma_semaphore, #tpu.memory_space<semaphore_mem>> -> memref<!tpu.dma_semaphore, #tpu.memory_space<semaphore_mem>>
      tpu.wait_dma2 semaphore(%58 : memref<!tpu.dma_semaphore, #tpu.memory_space<semaphore_mem>>) src(%55 : memref<1x128xf32, #tpu.memory_space<any>>) dst(%56 : memref<1x128xf32, #tpu.memory_space<vmem>>)
      %c1_44 = arith.constant 1 : index
      %c0_45 = arith.constant 0 : index
      %59 = vector.load %arg11[%c1_44, %c0_45] : memref<2x128xf32, #tpu.memory_space<vmem>>, vector<1x128xf32>
      %60 = arith.mulf %59, %0 : vector<1x128xf32>
      %61 = arith.addf %60, %1 : vector<1x128xf32>
      %cst_46 = arith.constant 0.000000e+00 : f32
      %62 = vector.broadcast %cst_46 : f32 to vector<1x128xf32>
      %63 = arith.maximumf %61, %62 : vector<1x128xf32>
      %c16 = arith.constant 16 : index
      %c0_47 = arith.constant 0 : index
      %64 = vector.load %arg10[%c16, %c0_47] : memref<24x128xf32, #tpu.memory_space<vmem>>, vector<1x128xf32>
      tpu.vector_store %arg10[%c16, %c0_47], %63 {strides = array<i32>} : memref<24x128xf32, #tpu.memory_space<vmem>>, vector<1x128xf32>,
    } else {
    }
    %c7 = arith.constant 7 : index
    %c0_17 = arith.constant 0 : index
    %29 = vector.load %arg10[%c7, %c0_17] : memref<24x128xf32, #tpu.memory_space<vmem>>, vector<8x128xf32>
    %c0_18 = arith.constant 0 : index
    %c0_19 = arith.constant 0 : index
    %c0_20 = arith.constant 0 : index
    %30 = vector.load %arg6[%c0_18, %c0_19, %c0_20] : memref<3x128x128xf32, #tpu.memory_space<vmem>>, vector<1x128x128xf32>
    %31 = vector.shape_cast %30 : vector<1x128x128xf32> to vector<128x128xf32>
    %cst_21 = arith.constant dense<0.000000e+00> : vector<8x128xf32>
    %32 = tpu.matmul %29, %31, %cst_21 {dimension_numbers = #tpu.dot_dimension_numbers<[1], [0], [0], [1], [0, 0, 1, 1], [], []>} : vector<8x128xf32>, vector<128x128xf32>, vector<8x128xf32> -> vector<8x128xf32>
    %c8_22 = arith.constant 8 : index
    %c0_23 = arith.constant 0 : index
    %33 = vector.load %arg10[%c8_22, %c0_23] : memref<24x128xf32, #tpu.memory_space<vmem>>, vector<8x128xf32>
    %c1 = arith.constant 1 : index
    %c0_24 = arith.constant 0 : index
    %c0_25 = arith.constant 0 : index
    %34 = vector.load %arg6[%c1, %c0_24, %c0_25] : memref<3x128x128xf32, #tpu.memory_space<vmem>>, vector<1x128x128xf32>
    %35 = vector.shape_cast %34 : vector<1x128x128xf32> to vector<128x128xf32>
    %cst_26 = arith.constant dense<0.000000e+00> : vector<8x128xf32>
    %36 = tpu.matmul %33, %35, %cst_26 {dimension_numbers = #tpu.dot_dimension_numbers<[1], [0], [0], [1], [0, 0, 1, 1], [], []>} : vector<8x128xf32>, vector<128x128xf32>, vector<8x128xf32> -> vector<8x128xf32>
    %37 = arith.addf %32, %36 : vector<8x128xf32>
    %c9 = arith.constant 9 : index
    %c0_27 = arith.constant 0 : index
    %38 = vector.load %arg10[%c9, %c0_27] : memref<24x128xf32, #tpu.memory_space<vmem>>, vector<8x128xf32>
    %c2 = arith.constant 2 : index
    %c0_28 = arith.constant 0 : index
    %c0_29 = arith.constant 0 : index
    %39 = vector.load %arg6[%c2, %c0_28, %c0_29] : memref<3x128x128xf32, #tpu.memory_space<vmem>>, vector<1x128x128xf32>
    %40 = vector.shape_cast %39 : vector<1x128x128xf32> to vector<128x128xf32>
    %cst_30 = arith.constant dense<0.000000e+00> : vector<8x128xf32>
    %41 = tpu.matmul %38, %40, %cst_30 {dimension_numbers = #tpu.dot_dimension_numbers<[1], [0], [0], [1], [0, 0, 1, 1], [], []>} : vector<8x128xf32>, vector<128x128xf32>, vector<8x128xf32> -> vector<8x128xf32>
    %42 = arith.addf %37, %41 : vector<8x128xf32>
    %c0_31 = arith.constant 0 : index
    %c0_32 = arith.constant 0 : index
    %43 = vector.load %arg7[%c0_31, %c0_32] : memref<1x128xf32, #tpu.memory_space<vmem>>, vector<1x128xf32>
    %44 = vector.broadcast %43 : vector<1x128xf32> to vector<8x128xf32>
    %45 = arith.addf %42, %44 : vector<8x128xf32>
    %c0_33 = arith.constant 0 : index
    %c0_34 = arith.constant 0 : index
    %c0_35 = arith.constant 0 : index
    %46 = vector.load %arg8[%c0_33, %c0_34, %c0_35] : memref<1x8x128xf32, #tpu.memory_space<vmem>>, vector<1x8x128xf32>
    %47 = vector.shape_cast %46 : vector<1x8x128xf32> to vector<8x128xf32>
    %48 = arith.addf %45, %47 : vector<8x128xf32>
    %c0_36 = arith.constant 0 : index
    %c0_37 = arith.constant 0 : index
    %c0_38 = arith.constant 0 : index
    %49 = vector.load %arg9[%c0_36, %c0_37, %c0_38] : memref<1x8x128xf32, #tpu.memory_space<vmem>>, vector<1x8x128xf32>
    %50 = vector.shape_cast %49 : vector<1x8x128xf32> to vector<8x128xf32>
    %51 = vector.shape_cast %48 : vector<8x128xf32> to vector<1x8x128xf32>
    tpu.vector_store %arg9[%c0_36, %c0_37, %c0_38], %51 {strides = array<i32>} : memref<1x8x128xf32, #tpu.memory_space<vmem>>, vector<1x8x128xf32>,
    return
  }
  func.func @transform_0(%arg0: i32, %arg1: i32) -> (i32, i32, i32) {
    %c0_i32 = arith.constant 0 : i32
    %c0_i32_0 = arith.constant 0 : i32
    return %arg0, %arg1, %c0_i32 : i32, i32, i32
  }
  func.func @transform_2(%arg0: i32, %arg1: i32) -> (i32, i32) {
    %c0_i32 = arith.constant 0 : i32
    %c0_i32_0 = arith.constant 0 : i32
    %c0_i32_1 = arith.constant 0 : i32
    return %c0_i32, %c0_i32_0 : i32, i32
  }
  func.func @transform_3(%arg0: i32, %arg1: i32) -> (i32, i32) {
    %c0_i32 = arith.constant 0 : i32
    %c0_i32_0 = arith.constant 0 : i32
    %c0_i32_1 = arith.constant 0 : i32
    return %c0_i32, %c0_i32_0 : i32, i32
  }
  func.func @transform_4(%arg0: i32, %arg1: i32) -> (i32, i32, i32) {
    %c0_i32 = arith.constant 0 : i32
    %c0_i32_0 = arith.constant 0 : i32
    %c0_i32_1 = arith.constant 0 : i32
    %c0_i32_2 = arith.constant 0 : i32
    return %c0_i32, %c0_i32_0, %c0_i32_1 : i32, i32, i32
  }
  func.func @transform_5(%arg0: i32, %arg1: i32) -> (i32, i32) {
    %c0_i32 = arith.constant 0 : i32
    %c0_i32_0 = arith.constant 0 : i32
    %c0_i32_1 = arith.constant 0 : i32
    return %c0_i32, %c0_i32_0 : i32, i32
  }
  func.func @transform_6(%arg0: i32, %arg1: i32) -> (i32, i32, i32) {
    %c0_i32 = arith.constant 0 : i32
    %c0_i32_0 = arith.constant 0 : i32
    return %arg0, %arg1, %c0_i32 : i32, i32, i32
  }
  func.func @transform_7(%arg0: i32, %arg1: i32) -> (i32, i32, i32) {
    %c0_i32 = arith.constant 0 : i32
    %c0_i32_0 = arith.constant 0 : i32
    return %arg0, %arg1, %c0_i32 : i32, i32, i32
  }
}

</mosaic_0001>

<llo_original>
// kernel: resblock_forward.3
$region0: #{resblock_forward.3}
  #allocation0 [shape = 'u32[]', space=smem, size = 0x4, offset = 0x4, fixed_abs, tag = 'smem constant byte address 0x4 - core index']
  #allocation1 [shape = 'u32[144,128]{1,0:T(1,128)}', space=vmem, size = 0x12000, scoped, tag = 'internal scratch']
  %s0 = inlined_call_operand.vmem [shape: f32[2,16,128], index: 0, kind: input, shape index: {}]
  %s1 = inlined_call_operand.vmem [shape: f32[2,2,128], index: 1, kind: output, shape index: {}]
  %s2 = sld [smem:[#allocation0]]
  $region41: #{resblock_forward.3} parent=0
    _
  %s4 = ssub.s32 1, %s2
  %s5 = scalar_select 0, %s4, %s2
  loop: start=0, step=1, limit=4
  $region2: #{resblock_forward.3} parent=0 // loop_pre_header
    _
  $region3: #{resblock_forward.3} parent=0 // loop_header
    %s7 = sphi 0, %s11
    %p8 = scmp.ge.s32.totalorder %s7, 4
    %s14 = sphi 0, %s26
    %s15 = sphi 0, %s22
    %s16 = sphi 0, %s14
    %s17 = sphi 0, %s15
    %s18 = sphi 0, %s16
    %s19 = sphi 0, %s17
    %s31 = sphi 0, %s33
    %s34 = sphi 0, %s31
    %s35 = sphi 0, %s34
    %s51 = sphi 0, %s35
    %s57 = sphi 0, %s59
    %s60 = sphi 0, %s57
    %s61 = sphi 0, %s60
    %s77 = sphi 0, %s61
  $region4: #{resblock_forward.3} parent=0 // loop_header_branch
    %10 = sbr.rel (%p8) target = $region8
  $region5: #{resblock_forward.3} parent=0 // loop_body
    %s12 = ssub.s32 %s7, 1
    %s13 = ssub.s32 %s7, 2
    %s20 = sadd.s32 1, %s15
    %p21 = scmp.ge.s32.totalorder %s20, 1
    %s22 = scalar_select %p21, 0, %s20
    %s23 = sadd.s32 1, %s14
    %s24 = scalar_select %p21, %s23, %s14
    %p25 = scmp.ge.s32.totalorder %s24, 2
    %s26 = scalar_select %p25, 0, %s24
    %s27 = ssub.s32 %s14, %s26
    %s28 = ssub.s32 %s15, %s22
    %s29 = sor.u32 %s27, %s28
    %p30 = scmp.eq.s32.totalorder %s29, 0
    %s32 = sadd.s32 %s31, 1
    %s33 = scalar_select %p30, %s31, %s32
    %p36 = pneg %p30
    %p37 = scmp.eq.s32.totalorder %s7, 1
    %p38 = por %p36, %p37
    %p39 = scmp.ne.s32.totalorder %s31, %s34
    %p40 = scmp.eq.s32.totalorder %s7, 0
    %p41 = por %p39, %p40
    %p42 = scmp.ne.s32.totalorder %s31, %s34
    %p43 = scmp.eq.s32.totalorder %s12, 1
    %p44 = por %p42, %p43
    %p45 = scmp.ne.s32.totalorder %s34, %s35
    %p46 = scmp.eq.s32.totalorder %s12, 0
    %p47 = por %p45, %p46
    %p48 = scmp.ne.s32.totalorder %s34, %s35
    %p49 = scmp.eq.s32.totalorder %s13, 1
    %p50 = por %p48, %p49
    %p52 = scmp.ne.s32.totalorder %s35, %s51
    %p53 = scmp.eq.s32.totalorder %s13, 0
    %p54 = por %p52, %p53
    %s55 = ssub.s32 %s14, %s26
    %p56 = scmp.eq.s32.totalorder %s55, 0
    %s58 = sadd.s32 %s57, 1
    %s59 = scalar_select %p56, %s57, %s58
    %p62 = pneg %p56
    %p63 = scmp.eq.s32.totalorder %s7, 1
    %p64 = por %p62, %p63
    %p65 = scmp.ne.s32.totalorder %s57, %s60
    %p66 = scmp.eq.s32.totalorder %s7, 0
    %p67 = por %p65, %p66
    %p68 = scmp.ne.s32.totalorder %s57, %s60
    %p69 = scmp.eq.s32.totalorder %s12, 1
    %p70 = por %p68, %p69
    %p71 = scmp.ne.s32.totalorder %s60, %s61
    %p72 = scmp.eq.s32.totalorder %s12, 0
    %p73 = por %p71, %p72
    %p74 = scmp.ne.s32.totalorder %s60, %s61
    %p75 = scmp.eq.s32.totalorder %s13, 1
    %p76 = por %p74, %p75
    %p78 = scmp.ne.s32.totalorder %s61, %s77
    %p79 = scmp.eq.s32.totalorder %s13, 0
    %p80 = por %p78, %p79
    %p81 = scmp.le.s32.totalorder 1, %s7
    %p82 = scmp.lt.s32.totalorder %s7, 3
    %p83 = pnand %p81, %p82
    %p84 = pneg %p83
    // Predicated region
    $region9: #{resblock_forward.3} parent=5 // pred_check
      _
    $region10: #{resblock_forward.3} parent=5 // pred_check_branch
      %86 = sbr.rel (%p83) target = $region12
    $region11: #{resblock_forward.3} parent=5 // pred_region
      %s87 = ssub.s32 %s7, 1
    $region12: #{resblock_forward.3} parent=5 // pred_fallthru
      _
    %p88 = scmp.lt.s32.totalorder %s7, 2
    // Predicated region
    $region13: #{resblock_forward.3} parent=5 // pred_check
      %p89 = pneg %p88
    $region14: #{resblock_forward.3} parent=5 // pred_check_branch
      %91 = sbr.rel (%p89) target = $region16
    $region15: #{resblock_forward.3} parent=5 // pred_region
      // Predicated region
      $region17: #{resblock_forward.3} parent=15 // pred_check
        %p92 = pneg %p41
      $region18: #{resblock_forward.3} parent=15 // pred_check_branch
        %94 = sbr.rel (%p92) target = $region20
      $region19: #{resblock_forward.3} parent=15 // pred_region
        %s95 = smul.u32 2, %s15
        %p96 = scmp.lt.s32.totalorder %s14, 1
        %s97 = scalar_select %p96, %s14, 1
        %p98 = scmp.lt.s32.totalorder %s95, 1
        %s99 = scalar_select %p98, %s95, 1
        %s100 = smul.addr %s97, 2
        %s101 = sadd.s32 %s99, %s100
        %s102 = smul.addr %s101, 8
        %s103 = scalar_lea.vmem %s0, %s102
        %s104 = smul.u32 2, %s15
      $region20: #{resblock_forward.3} parent=15 // pred_fallthru
        _
    $region16: #{resblock_forward.3} parent=5 // pred_fallthru
      _
    %p105 = scmp.le.s32.totalorder 1, %s7
    %p106 = scmp.lt.s32.totalorder %s7, 3
    %p107 = pnand %p105, %p106
    %p108 = pneg %p107
    // Predicated region
    $region21: #{resblock_forward.3} parent=5 // pred_check
      _
    $region22: #{resblock_forward.3} parent=5 // pred_check_branch
      %110 = sbr.rel (%p107) target = $region24
    $region23: #{resblock_forward.3} parent=5 // pred_region
      %s111 = ssub.s32 %s7, 1
      %s112 = smul.u32 2, %s17
      %p113 = scmp.lt.s32.totalorder %s16, 1
      %s114 = scalar_select %p113, %s16, 1
      %p115 = scmp.lt.s32.totalorder %s112, 1
      %s116 = scalar_select %p115, %s112, 1
      %s117 = smul.addr %s114, 2
      %s118 = sadd.s32 %s116, %s117
      %s119 = smul.addr %s118, 8
      %s120 = scalar_lea.vmem %s0, %s119
      %p121 = pneg %p47
      %p122 = pneg %p44
      %p123 = pneg %p73
      %p124 = pneg %p70
      %p125 = scmp.lt.s32.totalorder %s16, 1
      %s126 = scalar_select %p125, %s16, 1
      %s127 = smul.addr %s126, 2
      %s128 = scalar_lea.vmem %s1, %s127
      %s129 = smul.u32 2, %s17
      %p130 = scmp.lt.s32.totalorder %s16, 1
      %s131 = scalar_select %p130, %s16, 1
      %p132 = scmp.lt.s32.totalorder %s129, 1
      %s133 = scalar_select %p132, %s129, 1
      %s134 = smul.addr %s131, 2
      %s135 = sadd.s32 %s133, %s134
      %s136 = smul.addr %s135, 8
      %s137 = scalar_lea.vmem %s0, %s136
      %s138 = smul.u32 2, %s17
      %p139 = scmp.lt.s32.totalorder %s16, 1
      %s140 = scalar_select %p139, %s16, 1
      %s141 = smul.addr %s140, 2
      %s142 = scalar_lea.vmem %s1, %s141
      %p143 = scmp.eq.s32.totalorder %s17, 0
      // Predicated region
      $region25: #{resblock_forward.3} parent=23 // pred_check
        %p144 = pneg %p143
      $region26: #{resblock_forward.3} parent=23 // pred_check_branch
        %146 = sbr.rel (%p144) target = $region28
      $region27: #{resblock_forward.3} parent=23 // pred_region
        %147 = vst [vmem:[%s142] sm:$0x3] 0.0
      $region28: #{resblock_forward.3} parent=23 // pred_fallthru
        _
      %v148 = vld [vmem:[%s137] sm:$0xff]
      %v149 = vld [vmem:[%s137 + $0x8] sm:$0xff]
      %v150 = vld [vmem:[%s142] sm:$0x1]
      %v151 = vadd.f32 %v148, %v149
      %v152 = vrot.slane %v151, 4
      %v153 = vadd.f32 %v151, %v152
      %v154 = vrot.slane %v153, 2
      %v155 = vadd.f32 %v153, %v154
      %v156 = vrot.slane %v155, 1
      %v157 = vadd.f32 %v155, %v156
      %v158 = vadd.f32 %v150, %v157
      %159 = vst [vmem:[%s142] sm:$0x1] %v158
      %v160 = vld [vmem:[%s142 + $0x1] sm:$0x1]
      %v161 = vmul.f32 %v148, %v148
      %v162 = vmul.f32 %v149, %v149
      %v163 = vadd.f32 %v161, %v162
      %v164 = vrot.slane %v163, 4
      %v165 = vadd.f32 %v163, %v164
      %v166 = vrot.slane %v165, 2
      %v167 = vadd.f32 %v165, %v166
      %v168 = vrot.slane %v167, 1
      %v169 = vadd.f32 %v167, %v168
      %v170 = vadd.f32 %v160, %v169
      %171 = vst [vmem:[%s142 + $0x1] sm:$0x1] %v170
      %p172 = scmp.lt.s32.totalorder %s16, 1
      %s173 = scalar_select %p172, %s16, 1
      %s174 = smul.addr %s173, 2
      %s175 = scalar_lea.vmem %s1, %s174
      // Predicated region
      $region29: #{resblock_forward.3} parent=23 // pred_check
        %p176 = pneg %p70
      $region30: #{resblock_forward.3} parent=23 // pred_check_branch
        %178 = sbr.rel (%p176) target = $region32
      $region31: #{resblock_forward.3} parent=23 // pred_region
        _
      $region32: #{resblock_forward.3} parent=23 // pred_fallthru
        _
    $region24: #{resblock_forward.3} parent=5 // pred_fallthru
      _
    %p179 = scmp.le.s32.totalorder 2, %s7
    // Predicated region
    $region33: #{resblock_forward.3} parent=5 // pred_check
      %p180 = pneg %p179
    $region34: #{resblock_forward.3} parent=5 // pred_check_branch
      %182 = sbr.rel (%p180) target = $region36
    $region35: #{resblock_forward.3} parent=5 // pred_region
      %s183 = ssub.s32 %s7, 2
      // Predicated region
      $region37: #{resblock_forward.3} parent=35 // pred_check
        %p184 = pneg %p76
      $region38: #{resblock_forward.3} parent=35 // pred_check_branch
        %186 = sbr.rel (%p184) target = $region40
      $region39: #{resblock_forward.3} parent=35 // pred_region
        %p187 = scmp.lt.s32.totalorder %s18, 1
        %s188 = scalar_select %p187, %s18, 1
        %s189 = smul.addr %s188, 2
        %s190 = scalar_lea.vmem %s1, %s189
      $region40: #{resblock_forward.3} parent=35 // pred_fallthru
        _
    $region36: #{resblock_forward.3} parent=5 // pred_fallthru
      _
  $region6: #{resblock_forward.3} parent=0 // loop_footer
    %s11 = sadd.s32 1, %s7
  $region7: #{resblock_forward.3} parent=0 // loop_footer_branch
    %6 = sbr.rel target = $region3
  $region8: #{resblock_forward.3} parent=0 // loop_exit
    _

// kernel: squeeze.40
$region0: #{squeeze.40}
  %s0 = inlined_call_operand.vmem [shape: f32[128], index: 0, kind: input, shape index: {}]
  %s1 = inlined_call_operand.vmem [shape: f32[16,8], index: 1, kind: output, shape index: {}]
  $region1: #{squeeze.40} parent=0
    #allocation0 [shape = 'u8[4096]{0}', space=vmem, size = 0x1000, scoped, tag = 'scoped mem for input reshape']
    %s3 = sshllo.u32 0, 1
    %v4 = vld [vmem:[%s0] sm:%s3]
    %5 = vst [vmem:[#allocation0] sm:%s3] %v4
    %v6 = vld [vmem:[#allocation0] sm:$0x1]
    %vm7 = vcmask 64512
    %8 = vst.msk [vmem:[%s1] sm:$0x1] %vm7, %v6
    %v9 = vld [vmem:[#allocation0] sm:$0x1]
    %10 = vrot.lane.b32.xlu0 %v9, 120
    %v11 = vpop.permute.xlu0 %10
    %vm12 = vcmask 64512
    %s13 = scalar_lea.vmem %s1, 1
    %14 = vst.msk [vmem:[%s13] sm:$0x1] %vm12, %v11
    %v15 = vld [vmem:[#allocation0] sm:$0x1]
    %16 = vrot.lane.b32.xlu0 %v15, 112
    %v17 = vpop.permute.xlu0 %16
    %vm18 = vcmask 64512
    %s19 = scalar_lea.vmem %s1, 2
    %20 = vst.msk [vmem:[%s19] sm:$0x1] %vm18, %v17
    %v21 = vld [vmem:[#allocation0] sm:$0x1]
    %22 = vrot.lane.b32.xlu0 %v21, 104
    %v23 = vpop.permute.xlu0 %22
    %vm24 = vcmask 64512
    %s25 = scalar_lea.vmem %s1, 3
    %26 = vst.msk [vmem:[%s25] sm:$0x1] %vm24, %v23
    %v27 = vld [vmem:[#allocation0] sm:$0x1]
    %28 = vrot.lane.b32.xlu0 %v27, 96
    %v29 = vpop.permute.xlu0 %28
    %vm30 = vcmask 64512
    %s31 = scalar_lea.vmem %s1, 4
    %32 = vst.msk [vmem:[%s31] sm:$0x1] %vm30, %v29
    %v33 = vld [vmem:[#allocation0] sm:$0x1]
    %34 = vrot.lane.b32.xlu0 %v33, 88
    %v35 = vpop.permute.xlu0 %34
    %vm36 = vcmask 64512
    %s37 = scalar_lea.vmem %s1, 5
    %38 = vst.msk [vmem:[%s37] sm:$0x1] %vm36, %v35
    %v39 = vld [vmem:[#allocation0] sm:$0x1]
    %40 = vrot.lane.b32.xlu0 %v39, 80
    %v41 = vpop.permute.xlu0 %40
    %vm42 = vcmask 64512
    %s43 = scalar_lea.vmem %s1, 6
    %44 = vst.msk [vmem:[%s43] sm:$0x1] %vm42, %v41
    %v45 = vld [vmem:[#allocation0] sm:$0x1]
    %46 = vrot.lane.b32.xlu0 %v45, 72
    %v47 = vpop.permute.xlu0 %46
    %vm48 = vcmask 64512
    %s49 = scalar_lea.vmem %s1, 7
    %50 = vst.msk [vmem:[%s49] sm:$0x1] %vm48, %v47
    %v51 = vld [vmem:[#allocation0] sm:$0x1]
    %52 = vrot.lane.b32.xlu0 %v51, 64
    %v53 = vpop.permute.xlu0 %52
    %vm54 = vcmask 64512
    %s55 = scalar_lea.vmem %s1, 8
    %56 = vst.msk [vmem:[%s55] sm:$0x1] %vm54, %v53
    %v57 = vld [vmem:[#allocation0] sm:$0x1]
    %58 = vrot.lane.b32.xlu0 %v57, 56
    %v59 = vpop.permute.xlu0 %58
    %vm60 = vcmask 64512
    %s61 = scalar_lea.vmem %s1, 9
    %62 = vst.msk [vmem:[%s61] sm:$0x1] %vm60, %v59
    %v63 = vld [vmem:[#allocation0] sm:$0x1]
    %64 = vrot.lane.b32.xlu0 %v63, 48
    %v65 = vpop.permute.xlu0 %64
    %vm66 = vcmask 64512
    %s67 = scalar_lea.vmem %s1, 10
    %68 = vst.msk [vmem:[%s67] sm:$0x1] %vm66, %v65
    %v69 = vld [vmem:[#allocation0] sm:$0x1]
    %70 = vrot.lane.b32.xlu0 %v69, 40
    %v71 = vpop.permute.xlu0 %70
    %vm72 = vcmask 64512
    %s73 = scalar_lea.vmem %s1, 11
    %74 = vst.msk [vmem:[%s73] sm:$0x1] %vm72, %v71
    %v75 = vld [vmem:[#allocation0] sm:$0x1]
    %76 = vrot.lane.b32.xlu0 %v75, 32
    %v77 = vpop.permute.xlu0 %76
    %vm78 = vcmask 64512
    %s79 = scalar_lea.vmem %s1, 12
    %80 = vst.msk [vmem:[%s79] sm:$0x1] %vm78, %v77
    %v81 = vld [vmem:[#allocation0] sm:$0x1]
    %82 = vrot.lane.b32.xlu0 %v81, 24
    %v83 = vpop.permute.xlu0 %82
    %vm84 = vcmask 64512
    %s85 = scalar_lea.vmem %s1, 13
    %86 = vst.msk [vmem:[%s85] sm:$0x1] %vm84, %v83
    %v87 = vld [vmem:[#allocation0] sm:$0x1]
    %88 = vrot.lane.b32.xlu0 %v87, 16
    %v89 = vpop.permute.xlu0 %88
    %vm90 = vcmask 64512
    %s91 = scalar_lea.vmem %s1, 14
    %92 = vst.msk [vmem:[%s91] sm:$0x1] %vm90, %v89
    %v93 = vld [vmem:[#allocation0] sm:$0x1]
    %94 = vrot.lane.b32.xlu0 %v93, 8
    %v95 = vpop.permute.xlu0 %94
    %vm96 = vcmask 64512
    %s97 = scalar_lea.vmem %s1, 15
    %98 = vst.msk [vmem:[%s97] sm:$0x1] %vm96, %v95

// kernel: tile.43
$region0: #{tile.43}
  #allocation0 [shape = 's32[1]{0}', space=sflag, size = 0x4, scoped, tag = 'scoped memory for tile.43']
  %s0 = inlined_call_operand.vmem [shape: f32[8], index: 0, kind: input, shape index: {}]
  %s1 = inlined_call_operand.vmem [shape: f32[16,8], index: 1, kind: output, shape index: {}]
  // Predicated region
  $region2: #{tile.43} parent=0 // pred_check
    _
  $region3: #{tile.43} parent=0 // pred_check_branch
    %3 = sbr.rel (0) target = $region5
  $region4: #{tile.43} parent=0 // pred_region
    _
  $region5: #{tile.43} parent=0 // pred_fallthru
    _
  %v4 = vld [vmem:[%s0] ss:$0 sm:$0xff]
  %5 = vst [vmem:[%s1] sm:$0xff] %v4
  %s6 = scalar_lea.vmem %s1, 8
  %7 = vst [vmem:[%s6] sm:$0xff] %v4

// kernel: tile.44
$region0: #{tile.44}
  %s0 = inlined_call_operand.vmem [shape: f32[16,8], index: 0, kind: input, shape index: {}]
  %s1 = inlined_call_operand.vmem [shape: f32[1,128], index: 1, kind: output, shape index: {}]
  $region1: #{tile.44} parent=0
    #allocation0 [shape = 'u8[4096]{0}', space=vmem, size = 0x1000, scoped, tag = 'scoped mem for output reshape']
    %v2 = vld [vmem:[%s0] sm:$0x1]
    %vm3 = vcmask 64512
    %4 = vst.msk [vmem:[#allocation0] sm:$0x1] %vm3, %v2
    %s5 = scalar_lea.vmem %s0, 15
    %v6 = vld [vmem:[%s5] sm:$0x1]
    %7 = vrot.lane.b32.xlu0 %v6, 120
    %v8 = vpop.permute.xlu0 %7
    %vm9 = vcmask 1048512
    %10 = vst.msk [vmem:[#allocation0] sm:$0x1] %vm9, %v8
    %s11 = scalar_lea.vmem %s0, 14
    %v12 = vld [vmem:[%s11] sm:$0x1]
    %13 = vrot.lane.b32.xlu0 %v12, 112
    %v14 = vpop.permute.xlu0 %13
    %vm15 = vcmask 982912
    %16 = vst.msk [vmem:[#allocation0] sm:$0x1] %vm15, %v14
    %s17 = scalar_lea.vmem %s0, 13
    %v18 = vld [vmem:[%s17] sm:$0x1]
    %19 = vrot.lane.b32.xlu0 %v18, 104
    %v20 = vpop.permute.xlu0 %19
    %vm21 = vcmask 917312
    %22 = vst.msk [vmem:[#allocation0] sm:$0x1] %vm21, %v20
    %s23 = scalar_lea.vmem %s0, 12
    %v24 = vld [vmem:[%s23] sm:$0x1]
    %25 = vrot.lane.b32.xlu0 %v24, 96
    %v26 = vpop.permute.xlu0 %25
    %vm27 = vcmask 851712
    %28 = vst.msk [vmem:[#allocation0] sm:$0x1] %vm27, %v26
    %s29 = scalar_lea.vmem %s0, 11
    %v30 = vld [vmem:[%s29] sm:$0x1]
    %31 = vrot.lane.b32.xlu0 %v30, 88
    %v32 = vpop.permute.xlu0 %31
    %vm33 = vcmask 786112
    %34 = vst.msk [vmem:[#allocation0] sm:$0x1] %vm33, %v32
    %s35 = scalar_lea.vmem %s0, 10
    %v36 = vld [vmem:[%s35] sm:$0x1]
    %37 = vrot.lane.b32.xlu0 %v36, 80
    %v38 = vpop.permute.xlu0 %37
    %vm39 = vcmask 720512
    %40 = vst.msk [vmem:[#allocation0] sm:$0x1] %vm39, %v38
    %s41 = scalar_lea.vmem %s0, 9
    %v42 = vld [vmem:[%s41] sm:$0x1]
    %43 = vrot.lane.b32.xlu0 %v42, 72
    %v44 = vpop.permute.xlu0 %43
    %vm45 = vcmask 654912
    %46 = vst.msk [vmem:[#allocation0] sm:$0x1] %vm45, %v44
    %s47 = scalar_lea.vmem %s0, 8
    %v48 = vld [vmem:[%s47] sm:$0x1]
    %49 = vrot.lane.b32.xlu0 %v48, 64
    %v50 = vpop.permute.xlu0 %49
    %vm51 = vcmask 589312
    %52 = vst.msk [vmem:[#allocation0] sm:$0x1] %vm51, %v50
    %s53 = scalar_lea.vmem %s0, 7
    %v54 = vld [vmem:[%s53] sm:$0x1]
    %55 = vrot.lane.b32.xlu0 %v54, 56
    %v56 = vpop.permute.xlu0 %55
    %vm57 = vcmask 523712
    %58 = vst.msk [vmem:[#allocation0] sm:$0x1] %vm57, %v56
    %s59 = scalar_lea.vmem %s0, 6
    %v60 = vld [vmem:[%s59] sm:$0x1]
    %61 = vrot.lane.b32.xlu0 %v60, 48
    %v62 = vpop.permute.xlu0 %61
    %vm63 = vcmask 458112
    %64 = vst.msk [vmem:[#allocation0] sm:$0x1] %vm63, %v62
    %s65 = scalar_lea.vmem %s0, 5
    %v66 = vld [vmem:[%s65] sm:$0x1]
    %67 = vrot.lane.b32.xlu0 %v66, 40
    %v68 = vpop.permute.xlu0 %67
    %vm69 = vcmask 392512
    %70 = vst.msk [vmem:[#allocation0] sm:$0x1] %vm69, %v68
    %s71 = scalar_lea.vmem %s0, 4
    %v72 = vld [vmem:[%s71] sm:$0x1]
    %73 = vrot.lane.b32.xlu0 %v72, 32
    %v74 = vpop.permute.xlu0 %73
    %vm75 = vcmask 326912
    %76 = vst.msk [vmem:[#allocation0] sm:$0x1] %vm75, %v74
    %s77 = scalar_lea.vmem %s0, 3
    %v78 = vld [vmem:[%s77] sm:$0x1]
    %79 = vrot.lane.b32.xlu0 %v78, 24
    %v80 = vpop.permute.xlu0 %79
    %vm81 = vcmask 261312
    %82 = vst.msk [vmem:[#allocation0] sm:$0x1] %vm81, %v80
    %s83 = scalar_lea.vmem %s0, 2
    %v84 = vld [vmem:[%s83] sm:$0x1]
    %85 = vrot.lane.b32.xlu0 %v84, 16
    %v86 = vpop.permute.xlu0 %85
    %vm87 = vcmask 195712
    %88 = vst.msk [vmem:[#allocation0] sm:$0x1] %vm87, %v86
    %s89 = scalar_lea.vmem %s0, 1
    %v90 = vld [vmem:[%s89] sm:$0x1]
    %91 = vrot.lane.b32.xlu0 %v90, 8
    %v92 = vpop.permute.xlu0 %91
    %vm93 = vcmask 130112
    %94 = vst.msk [vmem:[#allocation0] sm:$0x1] %vm93, %v92
    %s96 = sshllo.u32 0, 1
    %v98 = vld [vmem:[#allocation0] sm:%s96]
    %s99 = sshllo.u32 0, 1
    %100 = vst [vmem:[%s1] sm:%s99] %v98

// kernel: resblock_forward.4
$region0: #{resblock_forward.4}
  #allocation0 [shape = 'u32[]', space=smem, size = 0x4, offset = 0x4, fixed_abs, tag = 'smem constant byte address 0x4 - core index']
  #allocation1 [shape = 'u32[144,128]{1,0:T(1,128)}', space=vmem, size = 0x12000, scoped, tag = 'internal scratch']
  #allocation2 [shape = 'f32[24,128]{1,0:T(8,128)}', space=vmem, size = 0x3000, scoped, tag = 'scratch operand']
  #allocation3 [shape = 'f32[2,128]{1,0:T(2,128)}', space=vmem, size = 0x400, scoped, tag = 'scratch operand']
  #allocation4 [shape = 's32[2]{0}', space=sflag, size = 0x8, scoped, tag = 'scratch operand']
  #allocation5 [shape = 's32[]', space=sflag, size = 0x4, offset = 0, fixed_abs, tag = 'sflag constant byte address 0x0 - dummy sync flag']
  #allocation6 [shape = 's32[]', space=sflag, size = 0x4, offset = 0, fixed_abs, tag = 'sflag constant byte address 0x0 - dummy sync flag']
  %s0 = inlined_call_operand.vmem [shape: f32[2,16,128], index: 0, kind: input, shape index: {}, may-alias: {0,1}]
  %s1 = inlined_call_operand.vmem [shape: f32[2,16,128], index: 1, kind: input, shape index: {}, may-alias: {0,1}]
  %s2 = inlined_call_operand.vmem [shape: f32[1,128], index: 2, kind: input, shape index: {}]
  %s3 = inlined_call_operand.vmem [shape: f32[1,128], index: 3, kind: input, shape index: {}]
  %s4 = inlined_call_operand.vmem [shape: f32[3,128,128], index: 4, kind: input, shape index: {}]
  %s5 = inlined_call_operand.vmem [shape: f32[1,128], index: 5, kind: input, shape index: {}]
  %s6 = inlined_call_operand.vmem [shape: f32[2,16,128], index: 6, kind: output, shape index: {0}]
  %s7 = inlined_call_operand.vmem [shape: f32[2,2,128], index: 7, kind: output, shape index: {1}]
  %8 = xla_tuple %s6, %s7
  %s9 = sld [smem:[#allocation0]]
  $region149: #{resblock_forward.4} parent=0
    _
  %s11 = ssub.s32 1, %s9
  %s12 = scalar_select 0, %s11, %s9
  loop: start=0, step=1, limit=6
  $region2: #{resblock_forward.4} parent=0 // loop_pre_header
    _
  $region3: #{resblock_forward.4} parent=0 // loop_header
    %s14 = sphi 0, %s18
    %p15 = scmp.ge.s32.totalorder %s14, 6
    %s21 = sphi 0, %s33
    %s22 = sphi 0, %s29
    %s23 = sphi 0, %s21
    %s24 = sphi 0, %s22
    %s25 = sphi 0, %s23
    %s26 = sphi 0, %s24
    %s38 = sphi 0, %s40
    %s41 = sphi 0, %s38
    %s42 = sphi 0, %s41
    %s58 = sphi 0, %s42
    %s62 = sphi 0, %s62
    %s64 = sphi 0, %s62
    %s65 = sphi 0, %s64
    %s79 = sphi 0, %s65
    %s83 = sphi 0, %s83
    %s85 = sphi 0, %s83
    %s86 = sphi 0, %s85
    %s100 = sphi 0, %s86
    %s104 = sphi 0, %s104
    %s106 = sphi 0, %s104
    %s107 = sphi 0, %s106
    %s121 = sphi 0, %s107
    %s125 = sphi 0, %s125
    %s127 = sphi 0, %s125
    %s128 = sphi 0, %s127
    %s142 = sphi 0, %s128
    %s150 = sphi 0, %s152
    %s153 = sphi 0, %s150
    %s154 = sphi 0, %s153
    %s170 = sphi 0, %s154
    %s176 = sphi 0, %s178
    %s179 = sphi 0, %s176
    %s180 = sphi 0, %s179
    %s196 = sphi 0, %s180
  $region4: #{resblock_forward.4} parent=0 // loop_header_branch
    %17 = sbr.rel (%p15) target = $region8
  $region5: #{resblock_forward.4} parent=0 // loop_body
    %s19 = ssub.s32 %s14, 1
    %s20 = ssub.s32 %s14, 2
    %s27 = sadd.s32 1, %s22
    %p28 = scmp.ge.s32.totalorder %s27, 2
    %s29 = scalar_select %p28, 0, %s27
    %s30 = sadd.s32 1, %s21
    %s31 = scalar_select %p28, %s30, %s21
    %p32 = scmp.ge.s32.totalorder %s31, 2
    %s33 = scalar_select %p32, 0, %s31
    %s34 = ssub.s32 %s21, %s33
    %s35 = ssub.s32 %s22, %s29
    %s36 = sor.u32 %s34, %s35
    %p37 = scmp.eq.s32.totalorder %s36, 0
    %s39 = sadd.s32 %s38, 1
    %s40 = scalar_select %p37, %s38, %s39
    %p43 = pneg %p37
    %p44 = scmp.eq.s32.totalorder %s14, 3
    %p45 = por %p43, %p44
    %p46 = scmp.ne.s32.totalorder %s38, %s41
    %p47 = scmp.eq.s32.totalorder %s14, 0
    %p48 = por %p46, %p47
    %p49 = scmp.ne.s32.totalorder %s38, %s41
    %p50 = scmp.eq.s32.totalorder %s19, 3
    %p51 = por %p49, %p50
    %p52 = scmp.ne.s32.totalorder %s41, %s42
    %p53 = scmp.eq.s32.totalorder %s19, 0
    %p54 = por %p52, %p53
    %p55 = scmp.ne.s32.totalorder %s41, %s42
    %p56 = scmp.eq.s32.totalorder %s20, 3
    %p57 = por %p55, %p56
    %p59 = scmp.ne.s32.totalorder %s42, %s58
    %p60 = scmp.eq.s32.totalorder %s20, 0
    %p61 = por %p59, %p60
    %s63 = sadd.s32 %s62, 1
    %p66 = scmp.eq.s32.totalorder %s14, 3
    %p67 = scmp.ne.s32.totalorder %s62, %s64
    %p68 = scmp.eq.s32.totalorder %s14, 0
    %p69 = por %p67, %p68
    %p70 = scmp.ne.s32.totalorder %s62, %s64
    %p71 = scmp.eq.s32.totalorder %s19, 3
    %p72 = por %p70, %p71
    %p73 = scmp.ne.s32.totalorder %s64, %s65
    %p74 = scmp.eq.s32.totalorder %s19, 0
    %p75 = por %p73, %p74
    %p76 = scmp.ne.s32.totalorder %s64, %s65
    %p77 = scmp.eq.s32.totalorder %s20, 3
    %p78 = por %p76, %p77
    %p80 = scmp.ne.s32.totalorder %s65, %s79
    %p81 = scmp.eq.s32.totalorder %s20, 0
    %p82 = por %p80, %p81
    %s84 = sadd.s32 %s83, 1
    %p87 = scmp.eq.s32.totalorder %s14, 3
    %p88 = scmp.ne.s32.totalorder %s83, %s85
    %p89 = scmp.eq.s32.totalorder %s14, 0
    %p90 = por %p88, %p89
    %p91 = scmp.ne.s32.totalorder %s83, %s85
    %p92 = scmp.eq.s32.totalorder %s19, 3
    %p93 = por %p91, %p92
    %p94 = scmp.ne.s32.totalorder %s85, %s86
    %p95 = scmp.eq.s32.totalorder %s19, 0
    %p96 = por %p94, %p95
    %p97 = scmp.ne.s32.totalorder %s85, %s86
    %p98 = scmp.eq.s32.totalorder %s20, 3
    %p99 = por %p97, %p98
    %p101 = scmp.ne.s32.totalorder %s86, %s100
    %p102 = scmp.eq.s32.totalorder %s20, 0
    %p103 = por %p101, %p102
    %s105 = sadd.s32 %s104, 1
    %p108 = scmp.eq.s32.totalorder %s14, 3
    %p109 = scmp.ne.s32.totalorder %s104, %s106
    %p110 = scmp.eq.s32.totalorder %s14, 0
    %p111 = por %p109, %p110
    %p112 = scmp.ne.s32.totalorder %s104, %s106
    %p113 = scmp.eq.s32.totalorder %s19, 3
    %p114 = por %p112, %p113
    %p115 = scmp.ne.s32.totalorder %s106, %s107
    %p116 = scmp.eq.s32.totalorder %s19, 0
    %p117 = por %p115, %p116
    %p118 = scmp.ne.s32.totalorder %s106, %s107
    %p119 = scmp.eq.s32.totalorder %s20, 3
    %p120 = por %p118, %p119
    %p122 = scmp.ne.s32.totalorder %s107, %s121
    %p123 = scmp.eq.s32.totalorder %s20, 0
    %p124 = por %p122, %p123
    %s126 = sadd.s32 %s125, 1
    %p129 = scmp.eq.s32.totalorder %s14, 3
    %p130 = scmp.ne.s32.totalorder %s125, %s127
    %p131 = scmp.eq.s32.totalorder %s14, 0
    %p132 = por %p130, %p131
    %p133 = scmp.ne.s32.totalorder %s125, %s127
    %p134 = scmp.eq.s32.totalorder %s19, 3
    %p135 = por %p133, %p134
    %p136 = scmp.ne.s32.totalorder %s127, %s128
    %p137 = scmp.eq.s32.totalorder %s19, 0
    %p138 = por %p136, %p137
    %p139 = scmp.ne.s32.totalorder %s127, %s128
    %p140 = scmp.eq.s32.totalorder %s20, 3
    %p141 = por %p139, %p140
    %p143 = scmp.ne.s32.totalorder %s128, %s142
    %p144 = scmp.eq.s32.totalorder %s20, 0
    %p145 = por %p143, %p144
    %s146 = ssub.s32 %s21, %s33
    %s147 = ssub.s32 %s22, %s29
    %s148 = sor.u32 %s146, %s147
    %p149 = scmp.eq.s32.totalorder %s148, 0
    %s151 = sadd.s32 %s150, 1
    %s152 = scalar_select %p149, %s150, %s151
    %p155 = pneg %p149
    %p156 = scmp.eq.s32.totalorder %s14, 3
    %p157 = por %p155, %p156
    %p158 = scmp.ne.s32.totalorder %s150, %s153
    %p159 = scmp.eq.s32.totalorder %s14, 0
    %p160 = por %p158, %p159
    %p161 = scmp.ne.s32.totalorder %s150, %s153
    %p162 = scmp.eq.s32.totalorder %s19, 3
    %p163 = por %p161, %p162
    %p164 = scmp.ne.s32.totalorder %s153, %s154
    %p165 = scmp.eq.s32.totalorder %s19, 0
    %p166 = por %p164, %p165
    %p167 = scmp.ne.s32.totalorder %s153, %s154
    %p168 = scmp.eq.s32.totalorder %s20, 3
    %p169 = por %p167, %p168
    %p171 = scmp.ne.s32.totalorder %s154, %s170
    %p172 = scmp.eq.s32.totalorder %s20, 0
    %p173 = por %p171, %p172
    %s174 = ssub.s32 %s21, %s33
    %p175 = scmp.eq.s32.totalorder %s174, 0
    %s177 = sadd.s32 %s176, 1
    %s178 = scalar_select %p175, %s176, %s177
    %p181 = pneg %p175
    %p182 = scmp.eq.s32.totalorder %s14, 3
    %p183 = por %p181, %p182
    %p184 = scmp.ne.s32.totalorder %s176, %s179
    %p185 = scmp.eq.s32.totalorder %s14, 0
    %p186 = por %p184, %p185
    %p187 = scmp.ne.s32.totalorder %s176, %s179
    %p188 = scmp.eq.s32.totalorder %s19, 3
    %p189 = por %p187, %p188
    %p190 = scmp.ne.s32.totalorder %s179, %s180
    %p191 = scmp.eq.s32.totalorder %s19, 0
    %p192 = por %p190, %p191
    %p193 = scmp.ne.s32.totalorder %s179, %s180
    %p194 = scmp.eq.s32.totalorder %s20, 3
    %p195 = por %p193, %p194
    %p197 = scmp.ne.s32.totalorder %s180, %s196
    %p198 = scmp.eq.s32.totalorder %s20, 0
    %p199 = por %p197, %p198
    %p200 = scmp.le.s32.totalorder 1, %s14
    %p201 = scmp.lt.s32.totalorder %s14, 5
    %p202 = pnand %p200, %p201
    %p203 = pneg %p202
    // Predicated region
    $region9: #{resblock_forward.4} parent=5 // pred_check
      _
    $region10: #{resblock_forward.4} parent=5 // pred_check_branch
      %205 = sbr.rel (%p202) target = $region12
    $region11: #{resblock_forward.4} parent=5 // pred_region
      %s206 = ssub.s32 %s14, 1
      // Predicated region
      $region13: #{resblock_forward.4} parent=11 // pred_check
        %p207 = pneg %p75
      $region14: #{resblock_forward.4} parent=11 // pred_check_branch
        %209 = sbr.rel (%p207) target = $region16
      $region15: #{resblock_forward.4} parent=11 // pred_region
        _
      $region16: #{resblock_forward.4} parent=11 // pred_fallthru
        _
      // Predicated region
      $region17: #{resblock_forward.4} parent=11 // pred_check
        %p210 = pneg %p96
      $region18: #{resblock_forward.4} parent=11 // pred_check_branch
        %212 = sbr.rel (%p210) target = $region20
      $region19: #{resblock_forward.4} parent=11 // pred_region
        _
      $region20: #{resblock_forward.4} parent=11 // pred_fallthru
        _
      // Predicated region
      $region21: #{resblock_forward.4} parent=11 // pred_check
        %p213 = pneg %p117
      $region22: #{resblock_forward.4} parent=11 // pred_check_branch
        %215 = sbr.rel (%p213) target = $region24
      $region23: #{resblock_forward.4} parent=11 // pred_region
        _
      $region24: #{resblock_forward.4} parent=11 // pred_fallthru
        _
      // Predicated region
      $region25: #{resblock_forward.4} parent=11 // pred_check
        %p216 = pneg %p138
      $region26: #{resblock_forward.4} parent=11 // pred_check_branch
        %218 = sbr.rel (%p216) target = $region28
      $region27: #{resblock_forward.4} parent=11 // pred_region
        _
      $region28: #{resblock_forward.4} parent=11 // pred_fallthru
        _
    $region12: #{resblock_forward.4} parent=5 // pred_fallthru
      _
    %p219 = scmp.lt.s32.totalorder %s14, 4
    // Predicated region
    $region29: #{resblock_forward.4} parent=5 // pred_check
      %p220 = pneg %p219
    $region30: #{resblock_forward.4} parent=5 // pred_check_branch
      %222 = sbr.rel (%p220) target = $region32
    $region31: #{resblock_forward.4} parent=5 // pred_region
      // Predicated region
      $region33: #{resblock_forward.4} parent=31 // pred_check
        %p223 = pneg %p48
      $region34: #{resblock_forward.4} parent=31 // pred_check_branch
        %225 = sbr.rel (%p223) target = $region36
      $region35: #{resblock_forward.4} parent=31 // pred_region
        %p226 = scmp.lt.s32.totalorder %s21, 1
        %s227 = scalar_select %p226, %s21, 1
        %p228 = scmp.lt.s32.totalorder %s22, 1
        %s229 = scalar_select %p228, %s22, 1
        %s230 = smul.addr %s227, 2
        %s231 = sadd.s32 %s229, %s230
        %s232 = smul.addr %s231, 8
        %s233 = scalar_lea.vmem %s0, %s232
      $region36: #{resblock_forward.4} parent=31 // pred_fallthru
        _
    $region32: #{resblock_forward.4} parent=5 // pred_fallthru
      _
    %p234 = scmp.le.s32.totalorder 1, %s14
    %p235 = scmp.lt.s32.totalorder %s14, 5
    %p236 = pnand %p234, %p235
    %p237 = pneg %p236
    // Predicated region
    $region37: #{resblock_forward.4} parent=5 // pred_check
      _
    $region38: #{resblock_forward.4} parent=5 // pred_check_branch
      %239 = sbr.rel (%p236) target = $region40
    $region39: #{resblock_forward.4} parent=5 // pred_region
      %s240 = ssub.s32 %s14, 1
      %p241 = scmp.lt.s32.totalorder %s23, 1
      %s242 = scalar_select %p241, %s23, 1
      %p243 = scmp.lt.s32.totalorder %s24, 1
      %s244 = scalar_select %p243, %s24, 1
      %s245 = smul.addr %s242, 2
      %s246 = sadd.s32 %s244, %s245
      %s247 = smul.addr %s246, 8
      %s248 = scalar_lea.vmem %s0, %s247
      %p249 = pneg %p54
      %p250 = pneg %p51
      %p251 = pneg %p75
      %p252 = pneg %p72
      %p253 = pneg %p96
      %p254 = pneg %p93
      %p255 = pneg %p117
      %p256 = pneg %p114
      %p257 = pneg %p138
      %p258 = pneg %p135
      %p259 = pneg %p166
      %p260 = pneg %p163
      %p261 = scmp.lt.s32.totalorder %s23, 1
      %s262 = scalar_select %p261, %s23, 1
      %p263 = scmp.lt.s32.totalorder %s24, 1
      %s264 = scalar_select %p263, %s24, 1
      %s265 = smul.addr %s262, 2
      %s266 = sadd.s32 %s264, %s265
      %s267 = smul.addr %s266, 8
      %s268 = scalar_lea.vmem %s6, %s267
      %p269 = pneg %p192
      %p270 = pneg %p189
      %p271 = scmp.lt.s32.totalorder %s23, 1
      %s272 = scalar_select %p271, %s23, 1
      %s273 = smul.addr %s272, 2
      %s274 = scalar_lea.vmem %s7, %s273
      %p275 = scmp.lt.s32.totalorder %s23, 1
      %s276 = scalar_select %p275, %s23, 1
      %p277 = scmp.lt.s32.totalorder %s24, 1
      %s278 = scalar_select %p277, %s24, 1
      %s279 = smul.addr %s276, 2
      %s280 = sadd.s32 %s278, %s279
      %s281 = smul.addr %s280, 8
      %s282 = scalar_lea.vmem %s0, %s281
      %p283 = scmp.lt.s32.totalorder %s23, 1
      %s284 = scalar_select %p283, %s23, 1
      %p285 = scmp.lt.s32.totalorder %s24, 1
      %s286 = scalar_select %p285, %s24, 1
      %s287 = smul.addr %s284, 2
      %s288 = sadd.s32 %s286, %s287
      %s289 = smul.addr %s288, 8
      %s290 = scalar_lea.vmem %s6, %s289
      %p291 = scmp.lt.s32.totalorder %s23, 1
      %s292 = scalar_select %p291, %s23, 1
      %s293 = smul.addr %s292, 2
      %s294 = scalar_lea.vmem %s7, %s293
      %v295 = vld [vmem:[%s2] sm:$0x1]
      %v296 = vld [vmem:[%s3] sm:$0x1]
      %p297 = scmp.gt.s32.totalorder %s24, 0
      // Predicated region
      $region41: #{resblock_forward.4} parent=39 // pred_check
        %p298 = pneg %p297
      $region42: #{resblock_forward.4} parent=39 // pred_check_branch
        %300 = sbr.rel (%p298) target = $region44
      $region43: #{resblock_forward.4} parent=39 // pred_region
        %s301 = smul.u32 %s24, 8
        %s302 = ssub.s32 %s301, 1
        %s303 = smul.u32 %s23, 16
        %s304 = sadd.s32 %s302, %s303
        %s305 = scalar_lea.vmem %s1, %s304
        %p307 = scmp.lt.u32.totalorder 1, 8
        %p308 = pneg %p307
        // Predicated region
        $region45: #{resblock_forward.4} parent=43 // pred_check
          _
        $region46: #{resblock_forward.4} parent=43 // pred_check_branch
          %310 = sbr.rel (%p307) target = $region48
        $region47: #{resblock_forward.4} parent=43 // pred_region
          %s325 = sand.u32 1, 7
          %p326 = scmp.eq.s32.totalorder %s325, 0
          %p327 = pneg %p326
          // Predicated region
          $region60: #{resblock_forward.4} parent=47 // pred_check
            _
          $region61: #{resblock_forward.4} parent=47 // pred_check_branch
            %329 = sbr.rel (%p326) target = $region63
          $region62: #{resblock_forward.4} parent=47 // pred_region
            %s330 = sand.u32 1, 7
            %s331 = ssub.s32 1, %s330
            %s332 = scalar_lea.vmem %s305, %s331
            %s333 = ssub.s32 1, %s330
            %s334 = scalar_lea.vmem [#allocation3], %s333
            %s335 = sshllo.u32 0, %s330
            loop: start=0, step=1, limit=1
            $region64: #{resblock_forward.4} parent=62 // loop_pre_header
              _
            $region65: #{resblock_forward.4} parent=62 // loop_header
              %s337 = sphi 0, %s341
              %p338 = scmp.ge.s32.totalorder %s337, 1
              %s342 = sphi %s332, %s332
              %s343 = sphi %s334, %s334
            $region66: #{resblock_forward.4} parent=62 // loop_header_branch
              %340 = sbr.rel (%p338) target = $region70
            $region67: #{resblock_forward.4} parent=62 // loop_body
              %v344 = vld [vmem:[%s342] sm:%s335]
              %345 = vst [vmem:[%s343] sm:%s335] %v344
            $region68: #{resblock_forward.4} parent=62 // loop_footer
              %s341 = sadd.s32 1, %s337
            $region69: #{resblock_forward.4} parent=62 // loop_footer_branch
              %336 = sbr.rel target = $region65
            $region70: #{resblock_forward.4} parent=62 // loop_exit
              _
          $region63: #{resblock_forward.4} parent=47 // pred_fallthru
            _
        $region48: #{resblock_forward.4} parent=43 // pred_fallthru
          _
        // Predicated region
        $region49: #{resblock_forward.4} parent=43 // pred_check
          %p311 = pneg %p307
        $region50: #{resblock_forward.4} parent=43 // pred_check_branch
          %313 = sbr.rel (%p311) target = $region52
        $region51: #{resblock_forward.4} parent=43 // pred_region
          %s314 = sshllo.u32 0, 1
          loop: start=0, step=1, limit=1
          $region53: #{resblock_forward.4} parent=51 // loop_pre_header
            _
          $region54: #{resblock_forward.4} parent=51 // loop_header
            %s316 = sphi 0, %s320
            %p317 = scmp.ge.s32.totalorder %s316, 1
            %s321 = sphi %s305, %s305
            %s322 = sphi [#allocation3], [#allocation3]
          $region55: #{resblock_forward.4} parent=51 // loop_header_branch
            %319 = sbr.rel (%p317) target = $region59
          $region56: #{resblock_forward.4} parent=51 // loop_body
            %v323 = vld [vmem:[%s321] sm:%s314]
            %324 = vst [vmem:[%s322] sm:%s314] %v323
          $region57: #{resblock_forward.4} parent=51 // loop_footer
            %s320 = sadd.s32 1, %s316
          $region58: #{resblock_forward.4} parent=51 // loop_footer_branch
            %315 = sbr.rel target = $region54
          $region59: #{resblock_forward.4} parent=51 // loop_exit
            _
        $region52: #{resblock_forward.4} parent=43 // pred_fallthru
          _
        // Predicated region
        $region71: #{resblock_forward.4} parent=43 // pred_check
          _
        $region72: #{resblock_forward.4} parent=43 // pred_check_branch
          %348 = sbr.rel (0) target = $region74
        $region73: #{resblock_forward.4} parent=43 // pred_region
          %349 = vsyncadd [#allocation4], 16
        $region74: #{resblock_forward.4} parent=43 // pred_fallthru
          _
      $region44: #{resblock_forward.4} parent=39 // pred_fallthru
        _
      %p350 = scmp.lt.s32.totalorder %s24, 1
      // Predicated region
      $region75: #{resblock_forward.4} parent=39 // pred_check
        %p351 = pneg %p350
      $region76: #{resblock_forward.4} parent=39 // pred_check_branch
        %353 = sbr.rel (%p351) target = $region78
      $region77: #{resblock_forward.4} parent=39 // pred_region
        %s354 = sadd.s32 %s24, 1
        %s355 = smul.u32 %s354, 8
        %s356 = smul.u32 %s23, 16
        %s357 = sadd.s32 %s355, %s356
        %s358 = scalar_lea.vmem %s1, %s357
        %s359 = scalar_lea.vmem [#allocation3], 1
        %s360 = scalar_lea.sflag [#allocation4], 1
        %p362 = scmp.lt.u32.totalorder 1, 8
        %p363 = pneg %p362
        // Predicated region
        $region79: #{resblock_forward.4} parent=77 // pred_check
          _
        $region80: #{resblock_forward.4} parent=77 // pred_check_branch
          %365 = sbr.rel (%p362) target = $region82
        $region81: #{resblock_forward.4} parent=77 // pred_region
          %s380 = sand.u32 1, 7
          %p381 = scmp.eq.s32.totalorder %s380, 0
          %p382 = pneg %p381
          // Predicated region
          $region94: #{resblock_forward.4} parent=81 // pred_check
            _
          $region95: #{resblock_forward.4} parent=81 // pred_check_branch
            %384 = sbr.rel (%p381) target = $region97
          $region96: #{resblock_forward.4} parent=81 // pred_region
            %s385 = sand.u32 1, 7
            %s386 = ssub.s32 1, %s385
            %s387 = scalar_lea.vmem %s358, %s386
            %s388 = ssub.s32 1, %s385
            %s389 = scalar_lea.vmem %s359, %s388 [#allocation3]
            %s390 = sshllo.u32 0, %s385
            loop: start=0, step=1, limit=1
            $region98: #{resblock_forward.4} parent=96 // loop_pre_header
              _
            $region99: #{resblock_forward.4} parent=96 // loop_header
              %s392 = sphi 0, %s396
              %p393 = scmp.ge.s32.totalorder %s392, 1
              %s397 = sphi %s387, %s387
              %s398 = sphi %s389, %s389
            $region100: #{resblock_forward.4} parent=96 // loop_header_branch
              %395 = sbr.rel (%p393) target = $region104
            $region101: #{resblock_forward.4} parent=96 // loop_body
              %v399 = vld [vmem:[%s397] sm:%s390]
              %400 = vst [vmem:[%s398] sm:%s390] %v399
            $region102: #{resblock_forward.4} parent=96 // loop_footer
              %s396 = sadd.s32 1, %s392
            $region103: #{resblock_forward.4} parent=96 // loop_footer_branch
              %391 = sbr.rel target = $region99
            $region104: #{resblock_forward.4} parent=96 // loop_exit
              _
          $region97: #{resblock_forward.4} parent=81 // pred_fallthru
            _
        $region82: #{resblock_forward.4} parent=77 // pred_fallthru
          _
        // Predicated region
        $region83: #{resblock_forward.4} parent=77 // pred_check
          %p366 = pneg %p362
        $region84: #{resblock_forward.4} parent=77 // pred_check_branch
          %368 = sbr.rel (%p366) target = $region86
        $region85: #{resblock_forward.4} parent=77 // pred_region
          %s369 = sshllo.u32 0, 1
          loop: start=0, step=1, limit=1
          $region87: #{resblock_forward.4} parent=85 // loop_pre_header
            _
          $region88: #{resblock_forward.4} parent=85 // loop_header
            %s371 = sphi 0, %s375
            %p372 = scmp.ge.s32.totalorder %s371, 1
            %s376 = sphi %s358, %s358
            %s377 = sphi %s359, %s359
          $region89: #{resblock_forward.4} parent=85 // loop_header_branch
            %374 = sbr.rel (%p372) target = $region93
          $region90: #{resblock_forward.4} parent=85 // loop_body
            %v378 = vld [vmem:[%s376] sm:%s369]
            %379 = vst [vmem:[%s377] sm:%s369] %v378
          $region91: #{resblock_forward.4} parent=85 // loop_footer
            %s375 = sadd.s32 1, %s371
          $region92: #{resblock_forward.4} parent=85 // loop_footer_branch
            %370 = sbr.rel target = $region88
          $region93: #{resblock_forward.4} parent=85 // loop_exit
            _
        $region86: #{resblock_forward.4} parent=77 // pred_fallthru
          _
        // Predicated region
        $region105: #{resblock_forward.4} parent=77 // pred_check
          _
        $region106: #{resblock_forward.4} parent=77 // pred_check_branch
          %403 = sbr.rel (0) target = $region108
        $region107: #{resblock_forward.4} parent=77 // pred_region
          %404 = vsyncadd %s360, 16
        $region108: #{resblock_forward.4} parent=77 // pred_fallthru
          _
      $region78: #{resblock_forward.4} parent=39 // pred_fallthru
        _
      %v405 = vld [vmem:[%s282] sm:$0xff]
      %v407 = vlaneseq
      %v408 = vshrl.u32 %v407, 7
      %v409 = vsub.s32 0, %v408
      %v410 = vrot.slane %v295, %v409
      %v412 = vmul.f32 %v405, %v410
      %v414 = vlaneseq
      %v415 = vshrl.u32 %v414, 7
      %v416 = vsub.s32 0, %v415
      %v417 = vrot.slane %v296, %v416
      %v419 = vadd.f32 %v412, %v417
      %v420 = vmax.f32 %v419, 0.0
      %421 = vst [vmem:[#allocation2 + $0x8] sm:$0xff] %v420
      %p422 = scmp.eq.s32.totalorder %s24, 0
      // Predicated region
      $region109: #{resblock_forward.4} parent=39 // pred_check
        %p423 = pneg %p422
      $region110: #{resblock_forward.4} parent=39 // pred_check_branch
        %425 = sbr.rel (%p423) target = $region112
      $region111: #{resblock_forward.4} parent=39 // pred_region
        %426 = vst [vmem:[#allocation2 + $0x7] sm:$0x1] 0.0
      $region112: #{resblock_forward.4} parent=39 // pred_fallthru
        _
      // Predicated region
      $region113: #{resblock_forward.4} parent=39 // pred_check
        %p427 = pneg %p297
      $region114: #{resblock_forward.4} parent=39 // pred_check_branch
        %429 = sbr.rel (%p427) target = $region116
      $region115: #{resblock_forward.4} parent=39 // pred_region
        %s430 = smul.u32 1, 1
        %s431 = sshll.u32 %s430, 4
        %432 = dma.done [#allocation4], %s431
        %v433 = vld [vmem:[#allocation3] sm:$0x1]
        %v434 = vmul.f32 %v433, %v295
        %v435 = vadd.f32 %v434, %v296
        %v436 = vmax.f32 %v435, 0.0
        %437 = vst [vmem:[#allocation2 + $0x7] sm:$0x1] %v436
      $region116: #{resblock_forward.4} parent=39 // pred_fallthru
        _
      %p438 = scmp.eq.s32.totalorder %s24, 1
      // Predicated region
      $region117: #{resblock_forward.4} parent=39 // pred_check
        %p439 = pneg %p438
      $region118: #{resblock_forward.4} parent=39 // pred_check_branch
        %441 = sbr.rel (%p439) target = $region120
      $region119: #{resblock_forward.4} parent=39 // pred_region
        %442 = vst [vmem:[#allocation2 + $0x10] sm:$0x1] 0.0
      $region120: #{resblock_forward.4} parent=39 // pred_fallthru
        _
      // Predicated region
      $region121: #{resblock_forward.4} parent=39 // pred_check
        %p443 = pneg %p350
      $region122: #{resblock_forward.4} parent=39 // pred_check_branch
        %445 = sbr.rel (%p443) target = $region124
      $region123: #{resblock_forward.4} parent=39 // pred_region
        %s446 = scalar_lea.sflag [#allocation4], 1
        %s447 = smul.u32 1, 1
        %s448 = sshll.u32 %s447, 4
        %449 = dma.done %s446, %s448
        %v450 = vld [vmem:[#allocation3 + $0x1] sm:$0x1]
        %v451 = vmul.f32 %v450, %v295
        %v452 = vadd.f32 %v451, %v296
        %v453 = vmax.f32 %v452, 0.0
        %454 = vst [vmem:[#allocation2 + $0x10] sm:$0x1] %v453
      $region124: #{resblock_forward.4} parent=39 // pred_fallthru
        _
      %v455 = vld [vmem:[#allocation2 + $0x7] sm:$0xff]
      %v456 = vld [vmem:[%s4] sm:$0xff]
      %v457 = vld [vmem:[%s4 + $0x8] sm:$0xff]
      %v458 = vld [vmem:[%s4 + $0x10] sm:$0xff]
      %v459 = vld [vmem:[%s4 + $0x18] sm:$0xff]
      %v460 = vld [vmem:[%s4 + $0x20] sm:$0xff]
      %v461 = vld [vmem:[%s4 + $0x28] sm:$0xff]
      %v462 = vld [vmem:[%s4 + $0x30] sm:$0xff]
      %v463 = vld [vmem:[%s4 + $0x38] sm:$0xff]
      %v464 = vld [vmem:[%s4 + $0x40] sm:$0xff]
      %v465 = vld [vmem:[%s4 + $0x48] sm:$0xff]
      %v466 = vld [vmem:[%s4 + $0x50] sm:$0xff]
      %v467 = vld [vmem:[%s4 + $0x58] sm:$0xff]
      %v468 = vld [vmem:[%s4 + $0x60] sm:$0xff]
      %v469 = vld [vmem:[%s4 + $0x68] sm:$0xff]
      %v470 = vld [vmem:[%s4 + $0x70] sm:$0xff]
      %v471 = vld [vmem:[%s4 + $0x78] sm:$0xff]
      %v472 = vld [vmem:[#allocation2 + $0x8] sm:$0xff]
      %s473 = scalar_lea.vmem %s4, 128
      %v474 = vld [vmem:[%s473] sm:$0xff]
      %v475 = vld [vmem:[%s473 + $0x8] sm:$0xff]
      %v476 = vld [vmem:[%s473 + $0x10] sm:$0xff]
      %v477 = vld [vmem:[%s473 + $0x18] sm:$0xff]
      %v478 = vld [vmem:[%s473 + $0x20] sm:$0xff]
      %v479 = vld [vmem:[%s473 + $0x28] sm:$0xff]
      %v480 = vld [vmem:[%s473 + $0x30] sm:$0xff]
      %v481 = vld [vmem:[%s473 + $0x38] sm:$0xff]
      %v482 = vld [vmem:[%s473 + $0x40] sm:$0xff]
      %v483 = vld [vmem:[%s473 + $0x48] sm:$0xff]
      %v484 = vld [vmem:[%s473 + $0x50] sm:$0xff]
      %v485 = vld [vmem:[%s473 + $0x58] sm:$0xff]
      %v486 = vld [vmem:[%s473 + $0x60] sm:$0xff]
      %v487 = vld [vmem:[%s473 + $0x68] sm:$0xff]
      %v488 = vld [vmem:[%s473 + $0x70] sm:$0xff]
      %v489 = vld [vmem:[%s473 + $0x78] sm:$0xff]
      %490 = vmatprep.subr.mxu0 0.0
      %491 = vmatpush1.msra.mxu0 %v474
      %492 = vmatprep.subr.mxu0 0.0
      %493 = vmatpush1.msra.mxu0 %v475
      %494 = vmatprep.subr.mxu0 0.0
      %495 = vmatpush1.msra.mxu0 %v476
      %496 = vmatprep.subr.mxu0 0.0
      %497 = vmatpush1.msra.mxu0 %v477
      %498 = vmatprep.subr.mxu0 0.0
      %499 = vmatpush1.msra.mxu0 %v478
      %500 = vmatprep.subr.mxu0 0.0
      %501 = vmatpush1.msra.mxu0 %v479
      %502 = vmatprep.subr.mxu0 0.0
      %503 = vmatpush1.msra.mxu0 %v480
      %504 = vmatprep.subr.mxu0 0.0
      %505 = vmatpush1.msra.mxu0 %v481
      %506 = vmatprep.subr.mxu0 0.0
      %507 = vmatpush1.msra.mxu0 %v482
      %508 = vmatprep.subr.mxu0 0.0
      %509 = vmatpush1.msra.mxu0 %v483
      %510 = vmatprep.subr.mxu0 0.0
      %511 = vmatpush1.msra.mxu0 %v484
      %512 = vmatprep.subr.mxu0 0.0
      %513 = vmatpush1.msra.mxu0 %v485
      %514 = vmatprep.subr.mxu0 0.0
      %515 = vmatpush1.msra.mxu0 %v486
      %516 = vmatprep.subr.mxu0 0.0
      %517 = vmatpush1.msra.mxu0 %v487
      %518 = vmatprep.subr.mxu0 0.0
      %519 = vmatpush1.msra.mxu0 %v488
      %520 = vmatprep.subr.mxu0 0.0
      %521 = vmatpush1.msra.mxu0 %v489
      %522 = vmatprep.subr.mxu0 0.0
      %523 = vmatpush1.msra.mxu0 0.0
      %524 = vmatprep.subr.mxu0 0.0
      %525 = vmatpush1.msra.mxu0 0.0
      %526 = vmatprep.subr.mxu0 0.0
      %527 = vmatpush1.msra.mxu0 0.0
      %528 = vmatprep.subr.mxu0 0.0
      %529 = vmatpush1.msra.mxu0 0.0
      %530 = vmatprep.subr.mxu0 0.0
      %531 = vmatpush1.msra.mxu0 0.0
      %532 = vmatprep.subr.mxu0 0.0
      %533 = vmatpush1.msra.mxu0 0.0
      %534 = vmatprep.subr.mxu0 0.0
      %535 = vmatpush1.msra.mxu0 0.0
      %536 = vmatprep.subr.mxu0 0.0
      %537 = vmatpush1.msra.mxu0 0.0
      %538 = vmatprep.subr.mxu0 0.0
      %539 = vmatpush1.msra.mxu0 0.0
      %540 = vmatprep.subr.mxu0 0.0
      %541 = vmatpush1.msra.mxu0 0.0
      %542 = vmatprep.subr.mxu0 0.0
      %543 = vmatpush1.msra.mxu0 0.0
      %544 = vmatprep.subr.mxu0 0.0
      %545 = vmatpush1.msra.mxu0 0.0
      %546 = vmatprep.subr.mxu0 0.0
      %547 = vmatpush1.msra.mxu0 0.0
      %548 = vmatprep.subr.mxu0 0.0
      %549 = vmatpush1.msra.mxu0 0.0
      %550 = vmatprep.subr.mxu0 0.0
      %551 = vmatpush1.msra.mxu0 0.0
      %552 = vmatprep.subr.mxu0 0.0
      %553 = vmatpush1.msra.mxu0 0.0
      %554 = vmatprep.mubr.f32.mxu0 0.0
      %555 = vmatmul.mubr.f32.gmra.mrb[0].mxu0 %v472
      %v556 = vpop.f32.mrb[0].mxu0
      %v557 = vadd.f32 0.0, %v556
      %v558 = vpop.f32.mrb[0].mxu0
      %559 = vdwg.mxu0
      %560 = vmatprep.subr.mxu0 0.0
      %561 = vmatpush1.msra.mxu0 %v456
      %562 = vmatprep.subr.mxu0 0.0
      %563 = vmatpush1.msra.mxu0 %v457
      %564 = vmatprep.subr.mxu0 0.0
      %565 = vmatpush1.msra.mxu0 %v458
      %566 = vmatprep.subr.mxu0 0.0
      %567 = vmatpush1.msra.mxu0 %v459
      %568 = vmatprep.subr.mxu0 0.0
      %569 = vmatpush1.msra.mxu0 %v460
      %570 = vmatprep.subr.mxu0 0.0
      %571 = vmatpush1.msra.mxu0 %v461
      %572 = vmatprep.subr.mxu0 0.0
      %573 = vmatpush1.msra.mxu0 %v462
      %574 = vmatprep.subr.mxu0 0.0
      %575 = vmatpush1.msra.mxu0 %v463
      %576 = vmatprep.subr.mxu0 0.0
      %577 = vmatpush1.msra.mxu0 %v464
      %578 = vmatprep.subr.mxu0 0.0
      %579 = vmatpush1.msra.mxu0 %v465
      %580 = vmatprep.subr.mxu0 0.0
      %581 = vmatpush1.msra.mxu0 %v466
      %582 = vmatprep.subr.mxu0 0.0
      %583 = vmatpush1.msra.mxu0 %v467
      %584 = vmatprep.subr.mxu0 0.0
      %585 = vmatpush1.msra.mxu0 %v468
      %586 = vmatprep.subr.mxu0 0.0
      %587 = vmatpush1.msra.mxu0 %v469
      %588 = vmatprep.subr.mxu0 0.0
      %589 = vmatpush1.msra.mxu0 %v470
      %590 = vmatprep.subr.mxu0 0.0
      %591 = vmatpush1.msra.mxu0 %v471
      %592 = vmatprep.subr.mxu0 0.0
      %593 = vmatpush1.msra.mxu0 0.0
      %594 = vmatprep.subr.mxu0 0.0
      %595 = vmatpush1.msra.mxu0 0.0
      %596 = vmatprep.subr.mxu0 0.0
      %597 = vmatpush1.msra.mxu0 0.0
      %598 = vmatprep.subr.mxu0 0.0
      %599 = vmatpush1.msra.mxu0 0.0
      %600 = vmatprep.subr.mxu0 0.0
      %601 = vmatpush1.msra.mxu0 0.0
      %602 = vmatprep.subr.mxu0 0.0
      %603 = vmatpush1.msra.mxu0 0.0
      %604 = vmatprep.subr.mxu0 0.0
      %605 = vmatpush1.msra.mxu0 0.0
      %606 = vmatprep.subr.mxu0 0.0
      %607 = vmatpush1.msra.mxu0 0.0
      %608 = vmatprep.subr.mxu0 0.0
      %609 = vmatpush1.msra.mxu0 0.0
      %610 = vmatprep.subr.mxu0 0.0
      %611 = vmatpush1.msra.mxu0 0.0
      %612 = vmatprep.subr.mxu0 0.0
      %613 = vmatpush1.msra.mxu0 0.0
      %614 = vmatprep.subr.mxu0 0.0
      %615 = vmatpush1.msra.mxu0 0.0
      %616 = vmatprep.subr.mxu0 0.0
      %617 = vmatpush1.msra.mxu0 0.0
      %618 = vmatprep.subr.mxu0 0.0
      %619 = vmatpush1.msra.mxu0 0.0
      %620 = vmatprep.subr.mxu0 0.0
      %621 = vmatpush1.msra.mxu0 0.0
      %622 = vmatprep.subr.mxu0 0.0
      %623 = vmatpush1.msra.mxu0 0.0
      %624 = vmatprep.mubr.f32.mxu0 0.0
      %625 = vmatmul.mubr.f32.gmra.mrb[0].mxu0 %v455
      %v626 = vpop.f32.mrb[0].mxu0
      %v627 = vadd.f32 %v557, %v626
      %v628 = vpop.f32.mrb[0].mxu0
      %629 = vdwg.mxu0
      %v630 = vld [vmem:[#allocation2 + $0x9] sm:$0xff]
      %s631 = scalar_lea.vmem %s4, 256
      %v632 = vld [vmem:[%s631] sm:$0xff]
      %v633 = vld [vmem:[%s631 + $0x8] sm:$0xff]
      %v634 = vld [vmem:[%s631 + $0x10] sm:$0xff]
      %v635 = vld [vmem:[%s631 + $0x18] sm:$0xff]
      %v636 = vld [vmem:[%s631 + $0x20] sm:$0xff]
      %v637 = vld [vmem:[%s631 + $0x28] sm:$0xff]
      %v638 = vld [vmem:[%s631 + $0x30] sm:$0xff]
      %v639 = vld [vmem:[%s631 + $0x38] sm:$0xff]
      %v640 = vld [vmem:[%s631 + $0x40] sm:$0xff]
      %v641 = vld [vmem:[%s631 + $0x48] sm:$0xff]
      %v642 = vld [vmem:[%s631 + $0x50] sm:$0xff]
      %v643 = vld [vmem:[%s631 + $0x58] sm:$0xff]
      %v644 = vld [vmem:[%s631 + $0x60] sm:$0xff]
      %v645 = vld [vmem:[%s631 + $0x68] sm:$0xff]
      %v646 = vld [vmem:[%s631 + $0x70] sm:$0xff]
      %v647 = vld [vmem:[%s631 + $0x78] sm:$0xff]
      %648 = vmatprep.subr.mxu0 0.0
      %649 = vmatpush1.msra.mxu0 %v632
      %650 = vmatprep.subr.mxu0 0.0
      %651 = vmatpush1.msra.mxu0 %v633
      %652 = vmatprep.subr.mxu0 0.0
      %653 = vmatpush1.msra.mxu0 %v634
      %654 = vmatprep.subr.mxu0 0.0
      %655 = vmatpush1.msra.mxu0 %v635
      %656 = vmatprep.subr.mxu0 0.0
      %657 = vmatpush1.msra.mxu0 %v636
      %658 = vmatprep.subr.mxu0 0.0
      %659 = vmatpush1.msra.mxu0 %v637
      %660 = vmatprep.subr.mxu0 0.0
      %661 = vmatpush1.msra.mxu0 %v638
      %662 = vmatprep.subr.mxu0 0.0
      %663 = vmatpush1.msra.mxu0 %v639
      %664 = vmatprep.subr.mxu0 0.0
      %665 = vmatpush1.msra.mxu0 %v640
      %666 = vmatprep.subr.mxu0 0.0
      %667 = vmatpush1.msra.mxu0 %v641
      %668 = vmatprep.subr.mxu0 0.0
      %669 = vmatpush1.msra.mxu0 %v642
      %670 = vmatprep.subr.mxu0 0.0
      %671 = vmatpush1.msra.mxu0 %v643
      %672 = vmatprep.subr.mxu0 0.0
      %673 = vmatpush1.msra.mxu0 %v644
      %674 = vmatprep.subr.mxu0 0.0
      %675 = vmatpush1.msra.mxu0 %v645
      %676 = vmatprep.subr.mxu0 0.0
      %677 = vmatpush1.msra.mxu0 %v646
      %678 = vmatprep.subr.mxu0 0.0
      %679 = vmatpush1.msra.mxu0 %v647
      %680 = vmatprep.subr.mxu0 0.0
      %681 = vmatpush1.msra.mxu0 0.0
      %682 = vmatprep.subr.mxu0 0.0
      %683 = vmatpush1.msra.mxu0 0.0
      %684 = vmatprep.subr.mxu0 0.0
      %685 = vmatpush1.msra.mxu0 0.0
      %686 = vmatprep.subr.mxu0 0.0
      %687 = vmatpush1.msra.mxu0 0.0
      %688 = vmatprep.subr.mxu0 0.0
      %689 = vmatpush1.msra.mxu0 0.0
      %690 = vmatprep.subr.mxu0 0.0
      %691 = vmatpush1.msra.mxu0 0.0
      %692 = vmatprep.subr.mxu0 0.0
      %693 = vmatpush1.msra.mxu0 0.0
      %694 = vmatprep.subr.mxu0 0.0
      %695 = vmatpush1.msra.mxu0 0.0
      %696 = vmatprep.subr.mxu0 0.0
      %697 = vmatpush1.msra.mxu0 0.0
      %698 = vmatprep.subr.mxu0 0.0
      %699 = vmatpush1.msra.mxu0 0.0
      %700 = vmatprep.subr.mxu0 0.0
      %701 = vmatpush1.msra.mxu0 0.0
      %702 = vmatprep.subr.mxu0 0.0
      %703 = vmatpush1.msra.mxu0 0.0
      %704 = vmatprep.subr.mxu0 0.0
      %705 = vmatpush1.msra.mxu0 0.0
      %706 = vmatprep.subr.mxu0 0.0
      %707 = vmatpush1.msra.mxu0 0.0
      %708 = vmatprep.subr.mxu0 0.0
      %709 = vmatpush1.msra.mxu0 0.0
      %710 = vmatprep.subr.mxu0 0.0
      %711 = vmatpush1.msra.mxu0 0.0
      %712 = vmatprep.mubr.f32.mxu0 0.0
      %713 = vmatmul.mubr.f32.gmra.mrb[0].mxu0 %v630
      %v714 = vpop.f32.mrb[0].mxu0
      %v715 = vadd.f32 0.0, %v714
      %v716 = vpop.f32.mrb[0].mxu0
      %717 = vdwg.mxu0
      %v718 = vadd.f32 %v627, %v715
      %v719 = vld [vmem:[%s5] sm:$0x1]
      %v721 = vlaneseq
      %v722 = vshrl.u32 %v721, 7
      %v723 = vsub.s32 0, %v722
      %v724 = vrot.slane %v719, %v723
      %v726 = vadd.f32 %v718, %v724
      %727 = vst [vmem:[%s290] sm:$0xff] %v726
      // Predicated region
      $region125: #{resblock_forward.4} parent=39 // pred_check
        %p728 = pneg %p422
      $region126: #{resblock_forward.4} parent=39 // pred_check_branch
        %730 = sbr.rel (%p728) target = $region128
      $region127: #{resblock_forward.4} parent=39 // pred_region
        %731 = vst [vmem:[%s294] sm:$0x3] 0.0
      $region128: #{resblock_forward.4} parent=39 // pred_fallthru
        _
      %v732 = vld [vmem:[%s294] sm:$0x1]
      %v733 = vrot.slane %v726, 4
      %v734 = vadd.f32 %v726, %v733
      %v735 = vrot.slane %v734, 2
      %v736 = vadd.f32 %v734, %v735
      %v737 = vrot.slane %v736, 1
      %v738 = vadd.f32 %v736, %v737
      %v739 = vadd.f32 %v732, %v738
      %740 = vst [vmem:[%s294] sm:$0x1] %v739
      %v741 = vld [vmem:[%s294 + $0x1] sm:$0x1]
      %v742 = vmul.f32 %v726, %v726
      %v743 = vrot.slane %v742, 4
      %v744 = vadd.f32 %v742, %v743
      %v745 = vrot.slane %v744, 2
      %v746 = vadd.f32 %v744, %v745
      %v747 = vrot.slane %v746, 1
      %v748 = vadd.f32 %v746, %v747
      %v749 = vadd.f32 %v741, %v748
      %750 = vst [vmem:[%s294 + $0x1] sm:$0x1] %v749
      %p751 = scmp.lt.s32.totalorder %s23, 1
      %s752 = scalar_select %p751, %s23, 1
      %p753 = scmp.lt.s32.totalorder %s24, 1
      %s754 = scalar_select %p753, %s24, 1
      %s755 = smul.addr %s752, 2
      %s756 = sadd.s32 %s754, %s755
      %s757 = smul.addr %s756, 8
      %s758 = scalar_lea.vmem %s6, %s757
      %p759 = scmp.lt.s32.totalorder %s23, 1
      %s760 = scalar_select %p759, %s23, 1
      %s761 = smul.addr %s760, 2
      %s762 = scalar_lea.vmem %s7, %s761
      // Predicated region
      $region129: #{resblock_forward.4} parent=39 // pred_check
        %p763 = pneg %p163
      $region130: #{resblock_forward.4} parent=39 // pred_check_branch
        %765 = sbr.rel (%p763) target = $region132
      $region131: #{resblock_forward.4} parent=39 // pred_region
        _
      $region132: #{resblock_forward.4} parent=39 // pred_fallthru
        _
      // Predicated region
      $region133: #{resblock_forward.4} parent=39 // pred_check
        %p766 = pneg %p189
      $region134: #{resblock_forward.4} parent=39 // pred_check_branch
        %768 = sbr.rel (%p766) target = $region136
      $region135: #{resblock_forward.4} parent=39 // pred_region
        _
      $region136: #{resblock_forward.4} parent=39 // pred_fallthru
        _
    $region40: #{resblock_forward.4} parent=5 // pred_fallthru
      _
    %p769 = scmp.le.s32.totalorder 2, %s14
    // Predicated region
    $region137: #{resblock_forward.4} parent=5 // pred_check
      %p770 = pneg %p769
    $region138: #{resblock_forward.4} parent=5 // pred_check_branch
      %772 = sbr.rel (%p770) target = $region140
    $region139: #{resblock_forward.4} parent=5 // pred_region
      %s773 = ssub.s32 %s14, 2
      // Predicated region
      $region141: #{resblock_forward.4} parent=139 // pred_check
        %p774 = pneg %p169
      $region142: #{resblock_forward.4} parent=139 // pred_check_branch
        %776 = sbr.rel (%p774) target = $region144
      $region143: #{resblock_forward.4} parent=139 // pred_region
        %p777 = scmp.lt.s32.totalorder %s25, 1
        %s778 = scalar_select %p777, %s25, 1
        %p779 = scmp.lt.s32.totalorder %s26, 1
        %s780 = scalar_select %p779, %s26, 1
        %s781 = smul.addr %s778, 2
        %s782 = sadd.s32 %s780, %s781
        %s783 = smul.addr %s782, 8
        %s784 = scalar_lea.vmem %s6, %s783
      $region144: #{resblock_forward.4} parent=139 // pred_fallthru
        _
      // Predicated region
      $region145: #{resblock_forward.4} parent=139 // pred_check
        %p785 = pneg %p195
      $region146: #{resblock_forward.4} parent=139 // pred_check_branch
        %787 = sbr.rel (%p785) target = $region148
      $region147: #{resblock_forward.4} parent=139 // pred_region
        %p788 = scmp.lt.s32.totalorder %s25, 1
        %s789 = scalar_select %p788, %s25, 1
        %s790 = smul.addr %s789, 2
        %s791 = scalar_lea.vmem %s7, %s790
      $region148: #{resblock_forward.4} parent=139 // pred_fallthru
        _
    $region140: #{resblock_forward.4} parent=5 // pred_fallthru
      _
  $region6: #{resblock_forward.4} parent=0 // loop_footer
    %s18 = sadd.s32 1, %s14
  $region7: #{resblock_forward.4} parent=0 // loop_footer_branch
    %13 = sbr.rel target = $region3
  $region8: #{resblock_forward.4} parent=0 // loop_exit
    _
  %792 = vsyncmov [#allocation4]
  %s793 = vpop.sfrf %792
  %p794 = scmp.eq.s32.totalorder %s793, 0
  %p795 = pneg %p794
  %797 = shalt.err (%p795)
  %s798 = scalar_lea.sflag [#allocation4], 1
  %799 = vsyncmov %s798
  %s800 = vpop.sfrf %799
  %p801 = scmp.eq.s32.totalorder %s800, 0
  %p802 = pneg %p801
  %804 = shalt.err (%p802)

// kernel: resblock_forward.5
$region0: #{resblock_forward.5}
  #allocation0 [shape = 'u32[]', space=smem, size = 0x4, offset = 0x4, fixed_abs, tag = 'smem constant byte address 0x4 - core index']
  #allocation1 [shape = 'u32[144,128]{1,0:T(1,128)}', space=vmem, size = 0x12000, scoped, tag = 'internal scratch']
  #allocation2 [shape = 'f32[24,128]{1,0:T(8,128)}', space=vmem, size = 0x3000, scoped, tag = 'scratch operand']
  #allocation3 [shape = 'f32[2,128]{1,0:T(2,128)}', space=vmem, size = 0x400, scoped, tag = 'scratch operand']
  #allocation4 [shape = 's32[2]{0}', space=sflag, size = 0x8, scoped, tag = 'scratch operand']
  #allocation5 [shape = 's32[]', space=sflag, size = 0x4, offset = 0, fixed_abs, tag = 'sflag constant byte address 0x0 - dummy sync flag']
  #allocation6 [shape = 's32[]', space=sflag, size = 0x4, offset = 0, fixed_abs, tag = 'sflag constant byte address 0x0 - dummy sync flag']
  %s0 = inlined_call_operand.vmem [shape: f32[2,16,128], index: 0, kind: input, shape index: {}, may-alias: {0,1}]
  %s1 = inlined_call_operand.vmem [shape: f32[2,16,128], index: 1, kind: input, shape index: {}, may-alias: {0,1}]
  %s2 = inlined_call_operand.vmem [shape: f32[1,128], index: 2, kind: input, shape index: {}]
  %s3 = inlined_call_operand.vmem [shape: f32[1,128], index: 3, kind: input, shape index: {}]
  %s4 = inlined_call_operand.vmem [shape: f32[3,128,128], index: 4, kind: input, shape index: {}]
  %s5 = inlined_call_operand.vmem [shape: f32[1,128], index: 5, kind: input, shape index: {}]
  %s6 = inlined_call_operand.vmem [shape: f32[2,16,128], index: 6, kind: input, shape index: {}]
  %s7 = inlined_call_operand.vmem [shape: f32[2,16,128], index: 7, kind: output, shape index: {}]
  %s8 = sld [smem:[#allocation0]]
  $region141: #{resblock_forward.5} parent=0
    _
  %s10 = ssub.s32 1, %s8
  %s11 = scalar_select 0, %s10, %s8
  loop: start=0, step=1, limit=6
  $region2: #{resblock_forward.5} parent=0 // loop_pre_header
    _
  $region3: #{resblock_forward.5} parent=0 // loop_header
    %s13 = sphi 0, %s17
    %p14 = scmp.ge.s32.totalorder %s13, 6
    %s20 = sphi 0, %s32
    %s21 = sphi 0, %s28
    %s22 = sphi 0, %s20
    %s23 = sphi 0, %s21
    %s24 = sphi 0, %s22
    %s25 = sphi 0, %s23
    %s37 = sphi 0, %s39
    %s40 = sphi 0, %s37
    %s41 = sphi 0, %s40
    %s57 = sphi 0, %s41
    %s61 = sphi 0, %s61
    %s63 = sphi 0, %s61
    %s64 = sphi 0, %s63
    %s78 = sphi 0, %s64
    %s82 = sphi 0, %s82
    %s84 = sphi 0, %s82
    %s85 = sphi 0, %s84
    %s99 = sphi 0, %s85
    %s103 = sphi 0, %s103
    %s105 = sphi 0, %s103
    %s106 = sphi 0, %s105
    %s120 = sphi 0, %s106
    %s124 = sphi 0, %s124
    %s126 = sphi 0, %s124
    %s127 = sphi 0, %s126
    %s141 = sphi 0, %s127
    %s149 = sphi 0, %s151
    %s152 = sphi 0, %s149
    %s153 = sphi 0, %s152
    %s169 = sphi 0, %s153
    %s177 = sphi 0, %s179
    %s180 = sphi 0, %s177
    %s181 = sphi 0, %s180
    %s197 = sphi 0, %s181
  $region4: #{resblock_forward.5} parent=0 // loop_header_branch
    %16 = sbr.rel (%p14) target = $region8
  $region5: #{resblock_forward.5} parent=0 // loop_body
    %s18 = ssub.s32 %s13, 1
    %s19 = ssub.s32 %s13, 2
    %s26 = sadd.s32 1, %s21
    %p27 = scmp.ge.s32.totalorder %s26, 2
    %s28 = scalar_select %p27, 0, %s26
    %s29 = sadd.s32 1, %s20
    %s30 = scalar_select %p27, %s29, %s20
    %p31 = scmp.ge.s32.totalorder %s30, 2
    %s32 = scalar_select %p31, 0, %s30
    %s33 = ssub.s32 %s20, %s32
    %s34 = ssub.s32 %s21, %s28
    %s35 = sor.u32 %s33, %s34
    %p36 = scmp.eq.s32.totalorder %s35, 0
    %s38 = sadd.s32 %s37, 1
    %s39 = scalar_select %p36, %s37, %s38
    %p42 = pneg %p36
    %p43 = scmp.eq.s32.totalorder %s13, 3
    %p44 = por %p42, %p43
    %p45 = scmp.ne.s32.totalorder %s37, %s40
    %p46 = scmp.eq.s32.totalorder %s13, 0
    %p47 = por %p45, %p46
    %p48 = scmp.ne.s32.totalorder %s37, %s40
    %p49 = scmp.eq.s32.totalorder %s18, 3
    %p50 = por %p48, %p49
    %p51 = scmp.ne.s32.totalorder %s40, %s41
    %p52 = scmp.eq.s32.totalorder %s18, 0
    %p53 = por %p51, %p52
    %p54 = scmp.ne.s32.totalorder %s40, %s41
    %p55 = scmp.eq.s32.totalorder %s19, 3
    %p56 = por %p54, %p55
    %p58 = scmp.ne.s32.totalorder %s41, %s57
    %p59 = scmp.eq.s32.totalorder %s19, 0
    %p60 = por %p58, %p59
    %s62 = sadd.s32 %s61, 1
    %p65 = scmp.eq.s32.totalorder %s13, 3
    %p66 = scmp.ne.s32.totalorder %s61, %s63
    %p67 = scmp.eq.s32.totalorder %s13, 0
    %p68 = por %p66, %p67
    %p69 = scmp.ne.s32.totalorder %s61, %s63
    %p70 = scmp.eq.s32.totalorder %s18, 3
    %p71 = por %p69, %p70
    %p72 = scmp.ne.s32.totalorder %s63, %s64
    %p73 = scmp.eq.s32.totalorder %s18, 0
    %p74 = por %p72, %p73
    %p75 = scmp.ne.s32.totalorder %s63, %s64
    %p76 = scmp.eq.s32.totalorder %s19, 3
    %p77 = por %p75, %p76
    %p79 = scmp.ne.s32.totalorder %s64, %s78
    %p80 = scmp.eq.s32.totalorder %s19, 0
    %p81 = por %p79, %p80
    %s83 = sadd.s32 %s82, 1
    %p86 = scmp.eq.s32.totalorder %s13, 3
    %p87 = scmp.ne.s32.totalorder %s82, %s84
    %p88 = scmp.eq.s32.totalorder %s13, 0
    %p89 = por %p87, %p88
    %p90 = scmp.ne.s32.totalorder %s82, %s84
    %p91 = scmp.eq.s32.totalorder %s18, 3
    %p92 = por %p90, %p91
    %p93 = scmp.ne.s32.totalorder %s84, %s85
    %p94 = scmp.eq.s32.totalorder %s18, 0
    %p95 = por %p93, %p94
    %p96 = scmp.ne.s32.totalorder %s84, %s85
    %p97 = scmp.eq.s32.totalorder %s19, 3
    %p98 = por %p96, %p97
    %p100 = scmp.ne.s32.totalorder %s85, %s99
    %p101 = scmp.eq.s32.totalorder %s19, 0
    %p102 = por %p100, %p101
    %s104 = sadd.s32 %s103, 1
    %p107 = scmp.eq.s32.totalorder %s13, 3
    %p108 = scmp.ne.s32.totalorder %s103, %s105
    %p109 = scmp.eq.s32.totalorder %s13, 0
    %p110 = por %p108, %p109
    %p111 = scmp.ne.s32.totalorder %s103, %s105
    %p112 = scmp.eq.s32.totalorder %s18, 3
    %p113 = por %p111, %p112
    %p114 = scmp.ne.s32.totalorder %s105, %s106
    %p115 = scmp.eq.s32.totalorder %s18, 0
    %p116 = por %p114, %p115
    %p117 = scmp.ne.s32.totalorder %s105, %s106
    %p118 = scmp.eq.s32.totalorder %s19, 3
    %p119 = por %p117, %p118
    %p121 = scmp.ne.s32.totalorder %s106, %s120
    %p122 = scmp.eq.s32.totalorder %s19, 0
    %p123 = por %p121, %p122
    %s125 = sadd.s32 %s124, 1
    %p128 = scmp.eq.s32.totalorder %s13, 3
    %p129 = scmp.ne.s32.totalorder %s124, %s126
    %p130 = scmp.eq.s32.totalorder %s13, 0
    %p131 = por %p129, %p130
    %p132 = scmp.ne.s32.totalorder %s124, %s126
    %p133 = scmp.eq.s32.totalorder %s18, 3
    %p134 = por %p132, %p133
    %p135 = scmp.ne.s32.totalorder %s126, %s127
    %p136 = scmp.eq.s32.totalorder %s18, 0
    %p137 = por %p135, %p136
    %p138 = scmp.ne.s32.totalorder %s126, %s127
    %p139 = scmp.eq.s32.totalorder %s19, 3
    %p140 = por %p138, %p139
    %p142 = scmp.ne.s32.totalorder %s127, %s141
    %p143 = scmp.eq.s32.totalorder %s19, 0
    %p144 = por %p142, %p143
    %s145 = ssub.s32 %s20, %s32
    %s146 = ssub.s32 %s21, %s28
    %s147 = sor.u32 %s145, %s146
    %p148 = scmp.eq.s32.totalorder %s147, 0
    %s150 = sadd.s32 %s149, 1
    %s151 = scalar_select %p148, %s149, %s150
    %p154 = pneg %p148
    %p155 = scmp.eq.s32.totalorder %s13, 3
    %p156 = por %p154, %p155
    %p157 = scmp.ne.s32.totalorder %s149, %s152
    %p158 = scmp.eq.s32.totalorder %s13, 0
    %p159 = por %p157, %p158
    %p160 = scmp.ne.s32.totalorder %s149, %s152
    %p161 = scmp.eq.s32.totalorder %s18, 3
    %p162 = por %p160, %p161
    %p163 = scmp.ne.s32.totalorder %s152, %s153
    %p164 = scmp.eq.s32.totalorder %s18, 0
    %p165 = por %p163, %p164
    %p166 = scmp.ne.s32.totalorder %s152, %s153
    %p167 = scmp.eq.s32.totalorder %s19, 3
    %p168 = por %p166, %p167
    %p170 = scmp.ne.s32.totalorder %s153, %s169
    %p171 = scmp.eq.s32.totalorder %s19, 0
    %p172 = por %p170, %p171
    %s173 = ssub.s32 %s20, %s32
    %s174 = ssub.s32 %s21, %s28
    %s175 = sor.u32 %s173, %s174
    %p176 = scmp.eq.s32.totalorder %s175, 0
    %s178 = sadd.s32 %s177, 1
    %s179 = scalar_select %p176, %s177, %s178
    %p182 = pneg %p176
    %p183 = scmp.eq.s32.totalorder %s13, 3
    %p184 = por %p182, %p183
    %p185 = scmp.ne.s32.totalorder %s177, %s180
    %p186 = scmp.eq.s32.totalorder %s13, 0
    %p187 = por %p185, %p186
    %p188 = scmp.ne.s32.totalorder %s177, %s180
    %p189 = scmp.eq.s32.totalorder %s18, 3
    %p190 = por %p188, %p189
    %p191 = scmp.ne.s32.totalorder %s180, %s181
    %p192 = scmp.eq.s32.totalorder %s18, 0
    %p193 = por %p191, %p192
    %p194 = scmp.ne.s32.totalorder %s180, %s181
    %p195 = scmp.eq.s32.totalorder %s19, 3
    %p196 = por %p194, %p195
    %p198 = scmp.ne.s32.totalorder %s181, %s197
    %p199 = scmp.eq.s32.totalorder %s19, 0
    %p200 = por %p198, %p199
    %p201 = scmp.le.s32.totalorder 1, %s13
    %p202 = scmp.lt.s32.totalorder %s13, 5
    %p203 = pnand %p201, %p202
    %p204 = pneg %p203
    // Predicated region
    $region9: #{resblock_forward.5} parent=5 // pred_check
      _
    $region10: #{resblock_forward.5} parent=5 // pred_check_branch
      %206 = sbr.rel (%p203) target = $region12
    $region11: #{resblock_forward.5} parent=5 // pred_region
      %s207 = ssub.s32 %s13, 1
      // Predicated region
      $region13: #{resblock_forward.5} parent=11 // pred_check
        %p208 = pneg %p74
      $region14: #{resblock_forward.5} parent=11 // pred_check_branch
        %210 = sbr.rel (%p208) target = $region16
      $region15: #{resblock_forward.5} parent=11 // pred_region
        _
      $region16: #{resblock_forward.5} parent=11 // pred_fallthru
        _
      // Predicated region
      $region17: #{resblock_forward.5} parent=11 // pred_check
        %p211 = pneg %p95
      $region18: #{resblock_forward.5} parent=11 // pred_check_branch
        %213 = sbr.rel (%p211) target = $region20
      $region19: #{resblock_forward.5} parent=11 // pred_region
        _
      $region20: #{resblock_forward.5} parent=11 // pred_fallthru
        _
      // Predicated region
      $region21: #{resblock_forward.5} parent=11 // pred_check
        %p214 = pneg %p116
      $region22: #{resblock_forward.5} parent=11 // pred_check_branch
        %216 = sbr.rel (%p214) target = $region24
      $region23: #{resblock_forward.5} parent=11 // pred_region
        _
      $region24: #{resblock_forward.5} parent=11 // pred_fallthru
        _
      // Predicated region
      $region25: #{resblock_forward.5} parent=11 // pred_check
        %p217 = pneg %p137
      $region26: #{resblock_forward.5} parent=11 // pred_check_branch
        %219 = sbr.rel (%p217) target = $region28
      $region27: #{resblock_forward.5} parent=11 // pred_region
        _
      $region28: #{resblock_forward.5} parent=11 // pred_fallthru
        _
    $region12: #{resblock_forward.5} parent=5 // pred_fallthru
      _
    %p220 = scmp.lt.s32.totalorder %s13, 4
    // Predicated region
    $region29: #{resblock_forward.5} parent=5 // pred_check
      %p221 = pneg %p220
    $region30: #{resblock_forward.5} parent=5 // pred_check_branch
      %223 = sbr.rel (%p221) target = $region32
    $region31: #{resblock_forward.5} parent=5 // pred_region
      // Predicated region
      $region33: #{resblock_forward.5} parent=31 // pred_check
        %p224 = pneg %p47
      $region34: #{resblock_forward.5} parent=31 // pred_check_branch
        %226 = sbr.rel (%p224) target = $region36
      $region35: #{resblock_forward.5} parent=31 // pred_region
        %p227 = scmp.lt.s32.totalorder %s20, 1
        %s228 = scalar_select %p227, %s20, 1
        %p229 = scmp.lt.s32.totalorder %s21, 1
        %s230 = scalar_select %p229, %s21, 1
        %s231 = smul.addr %s228, 2
        %s232 = sadd.s32 %s230, %s231
        %s233 = smul.addr %s232, 8
        %s234 = scalar_lea.vmem %s0, %s233
      $region36: #{resblock_forward.5} parent=31 // pred_fallthru
        _
      // Predicated region
      $region37: #{resblock_forward.5} parent=31 // pred_check
        %p235 = pneg %p159
      $region38: #{resblock_forward.5} parent=31 // pred_check_branch
        %237 = sbr.rel (%p235) target = $region40
      $region39: #{resblock_forward.5} parent=31 // pred_region
        %p238 = scmp.lt.s32.totalorder %s20, 1
        %s239 = scalar_select %p238, %s20, 1
        %p240 = scmp.lt.s32.totalorder %s21, 1
        %s241 = scalar_select %p240, %s21, 1
        %s242 = smul.addr %s239, 2
        %s243 = sadd.s32 %s241, %s242
        %s244 = smul.addr %s243, 8
        %s245 = scalar_lea.vmem %s6, %s244
      $region40: #{resblock_forward.5} parent=31 // pred_fallthru
        _
    $region32: #{resblock_forward.5} parent=5 // pred_fallthru
      _
    %p246 = scmp.le.s32.totalorder 1, %s13
    %p247 = scmp.lt.s32.totalorder %s13, 5
    %p248 = pnand %p246, %p247
    %p249 = pneg %p248
    // Predicated region
    $region41: #{resblock_forward.5} parent=5 // pred_check
      _
    $region42: #{resblock_forward.5} parent=5 // pred_check_branch
      %251 = sbr.rel (%p248) target = $region44
    $region43: #{resblock_forward.5} parent=5 // pred_region
      %s252 = ssub.s32 %s13, 1
      %p253 = scmp.lt.s32.totalorder %s22, 1
      %s254 = scalar_select %p253, %s22, 1
      %p255 = scmp.lt.s32.totalorder %s23, 1
      %s256 = scalar_select %p255, %s23, 1
      %s257 = smul.addr %s254, 2
      %s258 = sadd.s32 %s256, %s257
      %s259 = smul.addr %s258, 8
      %s260 = scalar_lea.vmem %s0, %s259
      %p261 = pneg %p53
      %p262 = pneg %p50
      %p263 = pneg %p74
      %p264 = pneg %p71
      %p265 = pneg %p95
      %p266 = pneg %p92
      %p267 = pneg %p116
      %p268 = pneg %p113
      %p269 = pneg %p137
      %p270 = pneg %p134
      %p271 = scmp.lt.s32.totalorder %s22, 1
      %s272 = scalar_select %p271, %s22, 1
      %p273 = scmp.lt.s32.totalorder %s23, 1
      %s274 = scalar_select %p273, %s23, 1
      %s275 = smul.addr %s272, 2
      %s276 = sadd.s32 %s274, %s275
      %s277 = smul.addr %s276, 8
      %s278 = scalar_lea.vmem %s6, %s277
      %p279 = pneg %p165
      %p280 = pneg %p162
      %p281 = pneg %p193
      %p282 = pneg %p190
      %p283 = scmp.lt.s32.totalorder %s22, 1
      %s284 = scalar_select %p283, %s22, 1
      %p285 = scmp.lt.s32.totalorder %s23, 1
      %s286 = scalar_select %p285, %s23, 1
      %s287 = smul.addr %s284, 2
      %s288 = sadd.s32 %s286, %s287
      %s289 = smul.addr %s288, 8
      %s290 = scalar_lea.vmem %s7, %s289
      %p291 = scmp.lt.s32.totalorder %s22, 1
      %s292 = scalar_select %p291, %s22, 1
      %p293 = scmp.lt.s32.totalorder %s23, 1
      %s294 = scalar_select %p293, %s23, 1
      %s295 = smul.addr %s292, 2
      %s296 = sadd.s32 %s294, %s295
      %s297 = smul.addr %s296, 8
      %s298 = scalar_lea.vmem %s0, %s297
      %p299 = scmp.lt.s32.totalorder %s22, 1
      %s300 = scalar_select %p299, %s22, 1
      %p301 = scmp.lt.s32.totalorder %s23, 1
      %s302 = scalar_select %p301, %s23, 1
      %s303 = smul.addr %s300, 2
      %s304 = sadd.s32 %s302, %s303
      %s305 = smul.addr %s304, 8
      %s306 = scalar_lea.vmem %s6, %s305
      %p307 = scmp.lt.s32.totalorder %s22, 1
      %s308 = scalar_select %p307, %s22, 1
      %p309 = scmp.lt.s32.totalorder %s23, 1
      %s310 = scalar_select %p309, %s23, 1
      %s311 = smul.addr %s308, 2
      %s312 = sadd.s32 %s310, %s311
      %s313 = smul.addr %s312, 8
      %s314 = scalar_lea.vmem %s7, %s313
      %v315 = vld [vmem:[%s2] sm:$0x1]
      %v316 = vld [vmem:[%s3] sm:$0x1]
      %p317 = scmp.gt.s32.totalorder %s23, 0
      // Predicated region
      $region45: #{resblock_forward.5} parent=43 // pred_check
        %p318 = pneg %p317
      $region46: #{resblock_forward.5} parent=43 // pred_check_branch
        %320 = sbr.rel (%p318) target = $region48
      $region47: #{resblock_forward.5} parent=43 // pred_region
        %s321 = smul.u32 %s23, 8
        %s322 = ssub.s32 %s321, 1
        %s323 = smul.u32 %s22, 16
        %s324 = sadd.s32 %s322, %s323
        %s325 = scalar_lea.vmem %s1, %s324
        %p327 = scmp.lt.u32.totalorder 1, 8
        %p328 = pneg %p327
        // Predicated region
        $region49: #{resblock_forward.5} parent=47 // pred_check
          _
        $region50: #{resblock_forward.5} parent=47 // pred_check_branch
          %330 = sbr.rel (%p327) target = $region52
        $region51: #{resblock_forward.5} parent=47 // pred_region
          %s345 = sand.u32 1, 7
          %p346 = scmp.eq.s32.totalorder %s345, 0
          %p347 = pneg %p346
          // Predicated region
          $region64: #{resblock_forward.5} parent=51 // pred_check
            _
          $region65: #{resblock_forward.5} parent=51 // pred_check_branch
            %349 = sbr.rel (%p346) target = $region67
          $region66: #{resblock_forward.5} parent=51 // pred_region
            %s350 = sand.u32 1, 7
            %s351 = ssub.s32 1, %s350
            %s352 = scalar_lea.vmem %s325, %s351
            %s353 = ssub.s32 1, %s350
            %s354 = scalar_lea.vmem [#allocation3], %s353
            %s355 = sshllo.u32 0, %s350
            loop: start=0, step=1, limit=1
            $region68: #{resblock_forward.5} parent=66 // loop_pre_header
              _
            $region69: #{resblock_forward.5} parent=66 // loop_header
              %s357 = sphi 0, %s361
              %p358 = scmp.ge.s32.totalorder %s357, 1
              %s362 = sphi %s352, %s352
              %s363 = sphi %s354, %s354
            $region70: #{resblock_forward.5} parent=66 // loop_header_branch
              %360 = sbr.rel (%p358) target = $region74
            $region71: #{resblock_forward.5} parent=66 // loop_body
              %v364 = vld [vmem:[%s362] sm:%s355]
              %365 = vst [vmem:[%s363] sm:%s355] %v364
            $region72: #{resblock_forward.5} parent=66 // loop_footer
              %s361 = sadd.s32 1, %s357
            $region73: #{resblock_forward.5} parent=66 // loop_footer_branch
              %356 = sbr.rel target = $region69
            $region74: #{resblock_forward.5} parent=66 // loop_exit
              _
          $region67: #{resblock_forward.5} parent=51 // pred_fallthru
            _
        $region52: #{resblock_forward.5} parent=47 // pred_fallthru
          _
        // Predicated region
        $region53: #{resblock_forward.5} parent=47 // pred_check
          %p331 = pneg %p327
        $region54: #{resblock_forward.5} parent=47 // pred_check_branch
          %333 = sbr.rel (%p331) target = $region56
        $region55: #{resblock_forward.5} parent=47 // pred_region
          %s334 = sshllo.u32 0, 1
          loop: start=0, step=1, limit=1
          $region57: #{resblock_forward.5} parent=55 // loop_pre_header
            _
          $region58: #{resblock_forward.5} parent=55 // loop_header
            %s336 = sphi 0, %s340
            %p337 = scmp.ge.s32.totalorder %s336, 1
            %s341 = sphi %s325, %s325
            %s342 = sphi [#allocation3], [#allocation3]
          $region59: #{resblock_forward.5} parent=55 // loop_header_branch
            %339 = sbr.rel (%p337) target = $region63
          $region60: #{resblock_forward.5} parent=55 // loop_body
            %v343 = vld [vmem:[%s341] sm:%s334]
            %344 = vst [vmem:[%s342] sm:%s334] %v343
          $region61: #{resblock_forward.5} parent=55 // loop_footer
            %s340 = sadd.s32 1, %s336
          $region62: #{resblock_forward.5} parent=55 // loop_footer_branch
            %335 = sbr.rel target = $region58
          $region63: #{resblock_forward.5} parent=55 // loop_exit
            _
        $region56: #{resblock_forward.5} parent=47 // pred_fallthru
          _
        // Predicated region
        $region75: #{resblock_forward.5} parent=47 // pred_check
          _
        $region76: #{resblock_forward.5} parent=47 // pred_check_branch
          %368 = sbr.rel (0) target = $region78
        $region77: #{resblock_forward.5} parent=47 // pred_region
          %369 = vsyncadd [#allocation4], 16
        $region78: #{resblock_forward.5} parent=47 // pred_fallthru
          _
      $region48: #{resblock_forward.5} parent=43 // pred_fallthru
        _
      %p370 = scmp.lt.s32.totalorder %s23, 1
      // Predicated region
      $region79: #{resblock_forward.5} parent=43 // pred_check
        %p371 = pneg %p370
      $region80: #{resblock_forward.5} parent=43 // pred_check_branch
        %373 = sbr.rel (%p371) target = $region82
      $region81: #{resblock_forward.5} parent=43 // pred_region
        %s374 = sadd.s32 %s23, 1
        %s375 = smul.u32 %s374, 8
        %s376 = smul.u32 %s22, 16
        %s377 = sadd.s32 %s375, %s376
        %s378 = scalar_lea.vmem %s1, %s377
        %s379 = scalar_lea.vmem [#allocation3], 1
        %s380 = scalar_lea.sflag [#allocation4], 1
        %p382 = scmp.lt.u32.totalorder 1, 8
        %p383 = pneg %p382
        // Predicated region
        $region83: #{resblock_forward.5} parent=81 // pred_check
          _
        $region84: #{resblock_forward.5} parent=81 // pred_check_branch
          %385 = sbr.rel (%p382) target = $region86
        $region85: #{resblock_forward.5} parent=81 // pred_region
          %s400 = sand.u32 1, 7
          %p401 = scmp.eq.s32.totalorder %s400, 0
          %p402 = pneg %p401
          // Predicated region
          $region98: #{resblock_forward.5} parent=85 // pred_check
            _
          $region99: #{resblock_forward.5} parent=85 // pred_check_branch
            %404 = sbr.rel (%p401) target = $region101
          $region100: #{resblock_forward.5} parent=85 // pred_region
            %s405 = sand.u32 1, 7
            %s406 = ssub.s32 1, %s405
            %s407 = scalar_lea.vmem %s378, %s406
            %s408 = ssub.s32 1, %s405
            %s409 = scalar_lea.vmem %s379, %s408 [#allocation3]
            %s410 = sshllo.u32 0, %s405
            loop: start=0, step=1, limit=1
            $region102: #{resblock_forward.5} parent=100 // loop_pre_header
              _
            $region103: #{resblock_forward.5} parent=100 // loop_header
              %s412 = sphi 0, %s416
              %p413 = scmp.ge.s32.totalorder %s412, 1
              %s417 = sphi %s407, %s407
              %s418 = sphi %s409, %s409
            $region104: #{resblock_forward.5} parent=100 // loop_header_branch
              %415 = sbr.rel (%p413) target = $region108
            $region105: #{resblock_forward.5} parent=100 // loop_body
              %v419 = vld [vmem:[%s417] sm:%s410]
              %420 = vst [vmem:[%s418] sm:%s410] %v419
            $region106: #{resblock_forward.5} parent=100 // loop_footer
              %s416 = sadd.s32 1, %s412
            $region107: #{resblock_forward.5} parent=100 // loop_footer_branch
              %411 = sbr.rel target = $region103
            $region108: #{resblock_forward.5} parent=100 // loop_exit
              _
          $region101: #{resblock_forward.5} parent=85 // pred_fallthru
            _
        $region86: #{resblock_forward.5} parent=81 // pred_fallthru
          _
        // Predicated region
        $region87: #{resblock_forward.5} parent=81 // pred_check
          %p386 = pneg %p382
        $region88: #{resblock_forward.5} parent=81 // pred_check_branch
          %388 = sbr.rel (%p386) target = $region90
        $region89: #{resblock_forward.5} parent=81 // pred_region
          %s389 = sshllo.u32 0, 1
          loop: start=0, step=1, limit=1
          $region91: #{resblock_forward.5} parent=89 // loop_pre_header
            _
          $region92: #{resblock_forward.5} parent=89 // loop_header
            %s391 = sphi 0, %s395
            %p392 = scmp.ge.s32.totalorder %s391, 1
            %s396 = sphi %s378, %s378
            %s397 = sphi %s379, %s379
          $region93: #{resblock_forward.5} parent=89 // loop_header_branch
            %394 = sbr.rel (%p392) target = $region97
          $region94: #{resblock_forward.5} parent=89 // loop_body
            %v398 = vld [vmem:[%s396] sm:%s389]
            %399 = vst [vmem:[%s397] sm:%s389] %v398
          $region95: #{resblock_forward.5} parent=89 // loop_footer
            %s395 = sadd.s32 1, %s391
          $region96: #{resblock_forward.5} parent=89 // loop_footer_branch
            %390 = sbr.rel target = $region92
          $region97: #{resblock_forward.5} parent=89 // loop_exit
            _
        $region90: #{resblock_forward.5} parent=81 // pred_fallthru
          _
        // Predicated region
        $region109: #{resblock_forward.5} parent=81 // pred_check
          _
        $region110: #{resblock_forward.5} parent=81 // pred_check_branch
          %423 = sbr.rel (0) target = $region112
        $region111: #{resblock_forward.5} parent=81 // pred_region
          %424 = vsyncadd %s380, 16
        $region112: #{resblock_forward.5} parent=81 // pred_fallthru
          _
      $region82: #{resblock_forward.5} parent=43 // pred_fallthru
        _
      %v425 = vld [vmem:[%s298] sm:$0xff]
      %v427 = vlaneseq
      %v428 = vshrl.u32 %v427, 7
      %v429 = vsub.s32 0, %v428
      %v430 = vrot.slane %v315, %v429
      %v432 = vmul.f32 %v425, %v430
      %v434 = vlaneseq
      %v435 = vshrl.u32 %v434, 7
      %v436 = vsub.s32 0, %v435
      %v437 = vrot.slane %v316, %v436
      %v439 = vadd.f32 %v432, %v437
      %v440 = vmax.f32 %v439, 0.0
      %441 = vst [vmem:[#allocation2 + $0x8] sm:$0xff] %v440
      %p442 = scmp.eq.s32.totalorder %s23, 0
      // Predicated region
      $region113: #{resblock_forward.5} parent=43 // pred_check
        %p443 = pneg %p442
      $region114: #{resblock_forward.5} parent=43 // pred_check_branch
        %445 = sbr.rel (%p443) target = $region116
      $region115: #{resblock_forward.5} parent=43 // pred_region
        %446 = vst [vmem:[#allocation2 + $0x7] sm:$0x1] 0.0
      $region116: #{resblock_forward.5} parent=43 // pred_fallthru
        _
      // Predicated region
      $region117: #{resblock_forward.5} parent=43 // pred_check
        %p447 = pneg %p317
      $region118: #{resblock_forward.5} parent=43 // pred_check_branch
        %449 = sbr.rel (%p447) target = $region120
      $region119: #{resblock_forward.5} parent=43 // pred_region
        %s450 = smul.u32 1, 1
        %s451 = sshll.u32 %s450, 4
        %452 = dma.done [#allocation4], %s451
        %v453 = vld [vmem:[#allocation3] sm:$0x1]
        %v454 = vmul.f32 %v453, %v315
        %v455 = vadd.f32 %v454, %v316
        %v456 = vmax.f32 %v455, 0.0
        %457 = vst [vmem:[#allocation2 + $0x7] sm:$0x1] %v456
      $region120: #{resblock_forward.5} parent=43 // pred_fallthru
        _
      %p458 = scmp.eq.s32.totalorder %s23, 1
      // Predicated region
      $region121: #{resblock_forward.5} parent=43 // pred_check
        %p459 = pneg %p458
      $region122: #{resblock_forward.5} parent=43 // pred_check_branch
        %461 = sbr.rel (%p459) target = $region124
      $region123: #{resblock_forward.5} parent=43 // pred_region
        %462 = vst [vmem:[#allocation2 + $0x10] sm:$0x1] 0.0
      $region124: #{resblock_forward.5} parent=43 // pred_fallthru
        _
      // Predicated region
      $region125: #{resblock_forward.5} parent=43 // pred_check
        %p463 = pneg %p370
      $region126: #{resblock_forward.5} parent=43 // pred_check_branch
        %465 = sbr.rel (%p463) target = $region128
      $region127: #{resblock_forward.5} parent=43 // pred_region
        %s466 = scalar_lea.sflag [#allocation4], 1
        %s467 = smul.u32 1, 1
        %s468 = sshll.u32 %s467, 4
        %469 = dma.done %s466, %s468
        %v470 = vld [vmem:[#allocation3 + $0x1] sm:$0x1]
        %v471 = vmul.f32 %v470, %v315
        %v472 = vadd.f32 %v471, %v316
        %v473 = vmax.f32 %v472, 0.0
        %474 = vst [vmem:[#allocation2 + $0x10] sm:$0x1] %v473
      $region128: #{resblock_forward.5} parent=43 // pred_fallthru
        _
      %v475 = vld [vmem:[#allocation2 + $0x7] sm:$0xff]
      %v476 = vld [vmem:[%s4] sm:$0xff]
      %v477 = vld [vmem:[%s4 + $0x8] sm:$0xff]
      %v478 = vld [vmem:[%s4 + $0x10] sm:$0xff]
      %v479 = vld [vmem:[%s4 + $0x18] sm:$0xff]
      %v480 = vld [vmem:[%s4 + $0x20] sm:$0xff]
      %v481 = vld [vmem:[%s4 + $0x28] sm:$0xff]
      %v482 = vld [vmem:[%s4 + $0x30] sm:$0xff]
      %v483 = vld [vmem:[%s4 + $0x38] sm:$0xff]
      %v484 = vld [vmem:[%s4 + $0x40] sm:$0xff]
      %v485 = vld [vmem:[%s4 + $0x48] sm:$0xff]
      %v486 = vld [vmem:[%s4 + $0x50] sm:$0xff]
      %v487 = vld [vmem:[%s4 + $0x58] sm:$0xff]
      %v488 = vld [vmem:[%s4 + $0x60] sm:$0xff]
      %v489 = vld [vmem:[%s4 + $0x68] sm:$0xff]
      %v490 = vld [vmem:[%s4 + $0x70] sm:$0xff]
      %v491 = vld [vmem:[%s4 + $0x78] sm:$0xff]
      %v492 = vld [vmem:[#allocation2 + $0x8] sm:$0xff]
      %s493 = scalar_lea.vmem %s4, 128
      %v494 = vld [vmem:[%s493] sm:$0xff]
      %v495 = vld [vmem:[%s493 + $0x8] sm:$0xff]
      %v496 = vld [vmem:[%s493 + $0x10] sm:$0xff]
      %v497 = vld [vmem:[%s493 + $0x18] sm:$0xff]
      %v498 = vld [vmem:[%s493 + $0x20] sm:$0xff]
      %v499 = vld [vmem:[%s493 + $0x28] sm:$0xff]
      %v500 = vld [vmem:[%s493 + $0x30] sm:$0xff]
      %v501 = vld [vmem:[%s493 + $0x38] sm:$0xff]
      %v502 = vld [vmem:[%s493 + $0x40] sm:$0xff]
      %v503 = vld [vmem:[%s493 + $0x48] sm:$0xff]
      %v504 = vld [vmem:[%s493 + $0x50] sm:$0xff]
      %v505 = vld [vmem:[%s493 + $0x58] sm:$0xff]
      %v506 = vld [vmem:[%s493 + $0x60] sm:$0xff]
      %v507 = vld [vmem:[%s493 + $0x68] sm:$0xff]
      %v508 = vld [vmem:[%s493 + $0x70] sm:$0xff]
      %v509 = vld [vmem:[%s493 + $0x78] sm:$0xff]
      %510 = vmatprep.subr.mxu0 0.0
      %511 = vmatpush1.msra.mxu0 %v494
      %512 = vmatprep.subr.mxu0 0.0
      %513 = vmatpush1.msra.mxu0 %v495
      %514 = vmatprep.subr.mxu0 0.0
      %515 = vmatpush1.msra.mxu0 %v496
      %516 = vmatprep.subr.mxu0 0.0
      %517 = vmatpush1.msra.mxu0 %v497
      %518 = vmatprep.subr.mxu0 0.0
      %519 = vmatpush1.msra.mxu0 %v498
      %520 = vmatprep.subr.mxu0 0.0
      %521 = vmatpush1.msra.mxu0 %v499
      %522 = vmatprep.subr.mxu0 0.0
      %523 = vmatpush1.msra.mxu0 %v500
      %524 = vmatprep.subr.mxu0 0.0
      %525 = vmatpush1.msra.mxu0 %v501
      %526 = vmatprep.subr.mxu0 0.0
      %527 = vmatpush1.msra.mxu0 %v502
      %528 = vmatprep.subr.mxu0 0.0
      %529 = vmatpush1.msra.mxu0 %v503
      %530 = vmatprep.subr.mxu0 0.0
      %531 = vmatpush1.msra.mxu0 %v504
      %532 = vmatprep.subr.mxu0 0.0
      %533 = vmatpush1.msra.mxu0 %v505
      %534 = vmatprep.subr.mxu0 0.0
      %535 = vmatpush1.msra.mxu0 %v506
      %536 = vmatprep.subr.mxu0 0.0
      %537 = vmatpush1.msra.mxu0 %v507
      %538 = vmatprep.subr.mxu0 0.0
      %539 = vmatpush1.msra.mxu0 %v508
      %540 = vmatprep.subr.mxu0 0.0
      %541 = vmatpush1.msra.mxu0 %v509
      %542 = vmatprep.subr.mxu0 0.0
      %543 = vmatpush1.msra.mxu0 0.0
      %544 = vmatprep.subr.mxu0 0.0
      %545 = vmatpush1.msra.mxu0 0.0
      %546 = vmatprep.subr.mxu0 0.0
      %547 = vmatpush1.msra.mxu0 0.0
      %548 = vmatprep.subr.mxu0 0.0
      %549 = vmatpush1.msra.mxu0 0.0
      %550 = vmatprep.subr.mxu0 0.0
      %551 = vmatpush1.msra.mxu0 0.0
      %552 = vmatprep.subr.mxu0 0.0
      %553 = vmatpush1.msra.mxu0 0.0
      %554 = vmatprep.subr.mxu0 0.0
      %555 = vmatpush1.msra.mxu0 0.0
      %556 = vmatprep.subr.mxu0 0.0
      %557 = vmatpush1.msra.mxu0 0.0
      %558 = vmatprep.subr.mxu0 0.0
      %559 = vmatpush1.msra.mxu0 0.0
      %560 = vmatprep.subr.mxu0 0.0
      %561 = vmatpush1.msra.mxu0 0.0
      %562 = vmatprep.subr.mxu0 0.0
      %563 = vmatpush1.msra.mxu0 0.0
      %564 = vmatprep.subr.mxu0 0.0
      %565 = vmatpush1.msra.mxu0 0.0
      %566 = vmatprep.subr.mxu0 0.0
      %567 = vmatpush1.msra.mxu0 0.0
      %568 = vmatprep.subr.mxu0 0.0
      %569 = vmatpush1.msra.mxu0 0.0
      %570 = vmatprep.subr.mxu0 0.0
      %571 = vmatpush1.msra.mxu0 0.0
      %572 = vmatprep.subr.mxu0 0.0
      %573 = vmatpush1.msra.mxu0 0.0
      %574 = vmatprep.mubr.f32.mxu0 0.0
      %575 = vmatmul.mubr.f32.gmra.mrb[0].mxu0 %v492
      %v576 = vpop.f32.mrb[0].mxu0
      %v577 = vadd.f32 0.0, %v576
      %v578 = vpop.f32.mrb[0].mxu0
      %579 = vdwg.mxu0
      %580 = vmatprep.subr.mxu0 0.0
      %581 = vmatpush1.msra.mxu0 %v476
      %582 = vmatprep.subr.mxu0 0.0
      %583 = vmatpush1.msra.mxu0 %v477
      %584 = vmatprep.subr.mxu0 0.0
      %585 = vmatpush1.msra.mxu0 %v478
      %586 = vmatprep.subr.mxu0 0.0
      %587 = vmatpush1.msra.mxu0 %v479
      %588 = vmatprep.subr.mxu0 0.0
      %589 = vmatpush1.msra.mxu0 %v480
      %590 = vmatprep.subr.mxu0 0.0
      %591 = vmatpush1.msra.mxu0 %v481
      %592 = vmatprep.subr.mxu0 0.0
      %593 = vmatpush1.msra.mxu0 %v482
      %594 = vmatprep.subr.mxu0 0.0
      %595 = vmatpush1.msra.mxu0 %v483
      %596 = vmatprep.subr.mxu0 0.0
      %597 = vmatpush1.msra.mxu0 %v484
      %598 = vmatprep.subr.mxu0 0.0
      %599 = vmatpush1.msra.mxu0 %v485
      %600 = vmatprep.subr.mxu0 0.0
      %601 = vmatpush1.msra.mxu0 %v486
      %602 = vmatprep.subr.mxu0 0.0
      %603 = vmatpush1.msra.mxu0 %v487
      %604 = vmatprep.subr.mxu0 0.0
      %605 = vmatpush1.msra.mxu0 %v488
      %606 = vmatprep.subr.mxu0 0.0
      %607 = vmatpush1.msra.mxu0 %v489
      %608 = vmatprep.subr.mxu0 0.0
      %609 = vmatpush1.msra.mxu0 %v490
      %610 = vmatprep.subr.mxu0 0.0
      %611 = vmatpush1.msra.mxu0 %v491
      %612 = vmatprep.subr.mxu0 0.0
      %613 = vmatpush1.msra.mxu0 0.0
      %614 = vmatprep.subr.mxu0 0.0
      %615 = vmatpush1.msra.mxu0 0.0
      %616 = vmatprep.subr.mxu0 0.0
      %617 = vmatpush1.msra.mxu0 0.0
      %618 = vmatprep.subr.mxu0 0.0
      %619 = vmatpush1.msra.mxu0 0.0
      %620 = vmatprep.subr.mxu0 0.0
      %621 = vmatpush1.msra.mxu0 0.0
      %622 = vmatprep.subr.mxu0 0.0
      %623 = vmatpush1.msra.mxu0 0.0
      %624 = vmatprep.subr.mxu0 0.0
      %625 = vmatpush1.msra.mxu0 0.0
      %626 = vmatprep.subr.mxu0 0.0
      %627 = vmatpush1.msra.mxu0 0.0
      %628 = vmatprep.subr.mxu0 0.0
      %629 = vmatpush1.msra.mxu0 0.0
      %630 = vmatprep.subr.mxu0 0.0
      %631 = vmatpush1.msra.mxu0 0.0
      %632 = vmatprep.subr.mxu0 0.0
      %633 = vmatpush1.msra.mxu0 0.0
      %634 = vmatprep.subr.mxu0 0.0
      %635 = vmatpush1.msra.mxu0 0.0
      %636 = vmatprep.subr.mxu0 0.0
      %637 = vmatpush1.msra.mxu0 0.0
      %638 = vmatprep.subr.mxu0 0.0
      %639 = vmatpush1.msra.mxu0 0.0
      %640 = vmatprep.subr.mxu0 0.0
      %641 = vmatpush1.msra.mxu0 0.0
      %642 = vmatprep.subr.mxu0 0.0
      %643 = vmatpush1.msra.mxu0 0.0
      %644 = vmatprep.mubr.f32.mxu0 0.0
      %645 = vmatmul.mubr.f32.gmra.mrb[0].mxu0 %v475
      %v646 = vpop.f32.mrb[0].mxu0
      %v647 = vadd.f32 %v577, %v646
      %v648 = vpop.f32.mrb[0].mxu0
      %649 = vdwg.mxu0
      %v650 = vld [vmem:[#allocation2 + $0x9] sm:$0xff]
      %s651 = scalar_lea.vmem %s4, 256
      %v652 = vld [vmem:[%s651] sm:$0xff]
      %v653 = vld [vmem:[%s651 + $0x8] sm:$0xff]
      %v654 = vld [vmem:[%s651 + $0x10] sm:$0xff]
      %v655 = vld [vmem:[%s651 + $0x18] sm:$0xff]
      %v656 = vld [vmem:[%s651 + $0x20] sm:$0xff]
      %v657 = vld [vmem:[%s651 + $0x28] sm:$0xff]
      %v658 = vld [vmem:[%s651 + $0x30] sm:$0xff]
      %v659 = vld [vmem:[%s651 + $0x38] sm:$0xff]
      %v660 = vld [vmem:[%s651 + $0x40] sm:$0xff]
      %v661 = vld [vmem:[%s651 + $0x48] sm:$0xff]
      %v662 = vld [vmem:[%s651 + $0x50] sm:$0xff]
      %v663 = vld [vmem:[%s651 + $0x58] sm:$0xff]
      %v664 = vld [vmem:[%s651 + $0x60] sm:$0xff]
      %v665 = vld [vmem:[%s651 + $0x68] sm:$0xff]
      %v666 = vld [vmem:[%s651 + $0x70] sm:$0xff]
      %v667 = vld [vmem:[%s651 + $0x78] sm:$0xff]
      %668 = vmatprep.subr.mxu0 0.0
      %669 = vmatpush1.msra.mxu0 %v652
      %670 = vmatprep.subr.mxu0 0.0
      %671 = vmatpush1.msra.mxu0 %v653
      %672 = vmatprep.subr.mxu0 0.0
      %673 = vmatpush1.msra.mxu0 %v654
      %674 = vmatprep.subr.mxu0 0.0
      %675 = vmatpush1.msra.mxu0 %v655
      %676 = vmatprep.subr.mxu0 0.0
      %677 = vmatpush1.msra.mxu0 %v656
      %678 = vmatprep.subr.mxu0 0.0
      %679 = vmatpush1.msra.mxu0 %v657
      %680 = vmatprep.subr.mxu0 0.0
      %681 = vmatpush1.msra.mxu0 %v658
      %682 = vmatprep.subr.mxu0 0.0
      %683 = vmatpush1.msra.mxu0 %v659
      %684 = vmatprep.subr.mxu0 0.0
      %685 = vmatpush1.msra.mxu0 %v660
      %686 = vmatprep.subr.mxu0 0.0
      %687 = vmatpush1.msra.mxu0 %v661
      %688 = vmatprep.subr.mxu0 0.0
      %689 = vmatpush1.msra.mxu0 %v662
      %690 = vmatprep.subr.mxu0 0.0
      %691 = vmatpush1.msra.mxu0 %v663
      %692 = vmatprep.subr.mxu0 0.0
      %693 = vmatpush1.msra.mxu0 %v664
      %694 = vmatprep.subr.mxu0 0.0
      %695 = vmatpush1.msra.mxu0 %v665
      %696 = vmatprep.subr.mxu0 0.0
      %697 = vmatpush1.msra.mxu0 %v666
      %698 = vmatprep.subr.mxu0 0.0
      %699 = vmatpush1.msra.mxu0 %v667
      %700 = vmatprep.subr.mxu0 0.0
      %701 = vmatpush1.msra.mxu0 0.0
      %702 = vmatprep.subr.mxu0 0.0
      %703 = vmatpush1.msra.mxu0 0.0
      %704 = vmatprep.subr.mxu0 0.0
      %705 = vmatpush1.msra.mxu0 0.0
      %706 = vmatprep.subr.mxu0 0.0
      %707 = vmatpush1.msra.mxu0 0.0
      %708 = vmatprep.subr.mxu0 0.0
      %709 = vmatpush1.msra.mxu0 0.0
      %710 = vmatprep.subr.mxu0 0.0
      %711 = vmatpush1.msra.mxu0 0.0
      %712 = vmatprep.subr.mxu0 0.0
      %713 = vmatpush1.msra.mxu0 0.0
      %714 = vmatprep.subr.mxu0 0.0
      %715 = vmatpush1.msra.mxu0 0.0
      %716 = vmatprep.subr.mxu0 0.0
      %717 = vmatpush1.msra.mxu0 0.0
      %718 = vmatprep.subr.mxu0 0.0
      %719 = vmatpush1.msra.mxu0 0.0
      %720 = vmatprep.subr.mxu0 0.0
      %721 = vmatpush1.msra.mxu0 0.0
      %722 = vmatprep.subr.mxu0 0.0
      %723 = vmatpush1.msra.mxu0 0.0
      %724 = vmatprep.subr.mxu0 0.0
      %725 = vmatpush1.msra.mxu0 0.0
      %726 = vmatprep.subr.mxu0 0.0
      %727 = vmatpush1.msra.mxu0 0.0
      %728 = vmatprep.subr.mxu0 0.0
      %729 = vmatpush1.msra.mxu0 0.0
      %730 = vmatprep.subr.mxu0 0.0
      %731 = vmatpush1.msra.mxu0 0.0
      %732 = vmatprep.mubr.f32.mxu0 0.0
      %733 = vmatmul.mubr.f32.gmra.mrb[0].mxu0 %v650
      %v734 = vpop.f32.mrb[0].mxu0
      %v735 = vadd.f32 0.0, %v734
      %v736 = vpop.f32.mrb[0].mxu0
      %737 = vdwg.mxu0
      %v738 = vadd.f32 %v647, %v735
      %v739 = vld [vmem:[%s5] sm:$0x1]
      %v741 = vlaneseq
      %v742 = vshrl.u32 %v741, 7
      %v743 = vsub.s32 0, %v742
      %v744 = vrot.slane %v739, %v743
      %v746 = vadd.f32 %v738, %v744
      %v747 = vld [vmem:[%s306] sm:$0xff]
      %v748 = vadd.f32 %v746, %v747
      %749 = vst [vmem:[%s314] sm:$0xff] %v748
      %p750 = scmp.lt.s32.totalorder %s22, 1
      %s751 = scalar_select %p750, %s22, 1
      %p752 = scmp.lt.s32.totalorder %s23, 1
      %s753 = scalar_select %p752, %s23, 1
      %s754 = smul.addr %s751, 2
      %s755 = sadd.s32 %s753, %s754
      %s756 = smul.addr %s755, 8
      %s757 = scalar_lea.vmem %s7, %s756
      // Predicated region
      $region129: #{resblock_forward.5} parent=43 // pred_check
        %p758 = pneg %p190
      $region130: #{resblock_forward.5} parent=43 // pred_check_branch
        %760 = sbr.rel (%p758) target = $region132
      $region131: #{resblock_forward.5} parent=43 // pred_region
        _
      $region132: #{resblock_forward.5} parent=43 // pred_fallthru
        _
    $region44: #{resblock_forward.5} parent=5 // pred_fallthru
      _
    %p761 = scmp.le.s32.totalorder 2, %s13
    // Predicated region
    $region133: #{resblock_forward.5} parent=5 // pred_check
      %p762 = pneg %p761
    $region134: #{resblock_forward.5} parent=5 // pred_check_branch
      %764 = sbr.rel (%p762) target = $region136
    $region135: #{resblock_forward.5} parent=5 // pred_region
      %s765 = ssub.s32 %s13, 2
      // Predicated region
      $region137: #{resblock_forward.5} parent=135 // pred_check
        %p766 = pneg %p196
      $region138: #{resblock_forward.5} parent=135 // pred_check_branch
        %768 = sbr.rel (%p766) target = $region140
      $region139: #{resblock_forward.5} parent=135 // pred_region
        %p769 = scmp.lt.s32.totalorder %s24, 1
        %s770 = scalar_select %p769, %s24, 1
        %p771 = scmp.lt.s32.totalorder %s25, 1
        %s772 = scalar_select %p771, %s25, 1
        %s773 = smul.addr %s770, 2
        %s774 = sadd.s32 %s772, %s773
        %s775 = smul.addr %s774, 8
        %s776 = scalar_lea.vmem %s7, %s775
      $region140: #{resblock_forward.5} parent=135 // pred_fallthru
        _
    $region136: #{resblock_forward.5} parent=5 // pred_fallthru
      _
  $region6: #{resblock_forward.5} parent=0 // loop_footer
    %s17 = sadd.s32 1, %s13
  $region7: #{resblock_forward.5} parent=0 // loop_footer_branch
    %12 = sbr.rel target = $region3
  $region8: #{resblock_forward.5} parent=0 // loop_exit
    _
  %777 = vsyncmov [#allocation4]
  %s778 = vpop.sfrf %777
  %p779 = scmp.eq.s32.totalorder %s778, 0
  %p780 = pneg %p779
  %782 = shalt.err (%p780)
  %s783 = scalar_lea.sflag [#allocation4], 1
  %784 = vsyncmov %s783
  %s785 = vpop.sfrf %784
  %p786 = scmp.eq.s32.totalorder %s785, 0
  %p787 = pneg %p786
  %789 = shalt.err (%p787)

</llo_original>
